<compile_context>
chip_gen: v7x
topology: tpu7x:2x2x1
jax: 0.10.0
libtpu: 0.0.40
codegen_flags: <defaults>
</compile_context>

<pallas_src>
import math

import jax
import jax.numpy as jnp
from jax.experimental import pallas as pl
from jax.experimental.pallas import tpu as pltpu

# ---- small roberta-like config ----
VOCAB = 64
MAX_POS = 16
HIDDEN = 32
N_HEADS = 4
HEAD_DIM = HIDDEN // N_HEADS
INTERMEDIATE = 64
N_LAYERS = 2
N_META = 3          # metadata_features dim (matches `hidden_size + 3` head)
LN_EPS = 1e-5
VEC_W = max(3 * HIDDEN, INTERMEDIATE)   # width of the packed per-layer vector slab

VMEM = pl.BlockSpec(memory_space=pltpu.MemorySpace.VMEM)


# --------------------------- kernel helpers ---------------------------------
def _layernorm(x, g, b):
    mean = jnp.mean(x, axis=-1, keepdims=True)
    var = jnp.mean((x - mean) ** 2, axis=-1, keepdims=True)
    return (x - mean) * jax.lax.rsqrt(var + LN_EPS) * g + b


# ------------------------------ fused kernel ---------------------------------
def fused_forward_kernel(ids_ref, mask_ref, meta_ref, pos_ref,
                         wemb_ref, wqkv_ref, wo_ref, wi_ref, wf_ref,
                         lvec_ref, wp_ref, misc_ref, o_ref):
    BS = ids_ref.shape[0]                       # B * S
    B, S = mask_ref.shape
    f32 = jnp.float32

    misc = misc_ref[...]                        # (6, H) packed misc params

    # --- embeddings: one-hot @ table (single MXU push, no gather) ---
    ids = ids_ref[...]                                              # (BS, 1) int32
    onehot = (ids == jax.lax.broadcasted_iota(jnp.int32, (BS, VOCAB), 1)
              ).astype(f32)                                         # (BS, VOCAB)
    tok = jnp.dot(onehot, wemb_ref[...], preferred_element_type=f32)  # (BS, H)
    # TODO(synk): RoBERTa offsets position ids by padding_idx+1 and skips pads;
    # with random weights we just use positions 0..S-1 (pre-tiled slab).
    x = _layernorm(tok + pos_ref[...], misc[0:1, :], misc[1:2, :])  # (BS, H)

    # additive attention-mask bias: 0 where attended, -1e9 where masked,
    # broadcast once to the (B*N_HEADS, 1, S) head-batched layout.
    mask_bias = (1.0 - mask_ref[...].astype(f32)) * -1e9            # (B, S)
    mask_bias_bh = jnp.broadcast_to(
        mask_bias[:, None, :], (B, N_HEADS, S)).reshape(B * N_HEADS, 1, S)

    def to_heads(t):            # (BS, H) -> (B*N_HEADS, S, HEAD_DIM)
        return t.reshape(B, S, N_HEADS, HEAD_DIM).transpose(0, 2, 1, 3) \
                .reshape(B * N_HEADS, S, HEAD_DIM)

    for l in range(N_LAYERS):                   # static unroll over layers
        lvec = lvec_ref[l]                      # (8, VEC_W) packed per-layer vecs
        b_qkv = lvec[0:1, :3 * HIDDEN]
        b_o, ln1g, ln1b = lvec[1:2, :HIDDEN], lvec[2:3, :HIDDEN], lvec[3:4, :HIDDEN]
        b_i, b_f = lvec[4:5, :INTERMEDIATE], lvec[5:6, :HIDDEN]
        ln2g, ln2b = lvec[6:7, :HIDDEN], lvec[7:8, :HIDDEN]

        # fused QKV: one (BS,H)@(H,3H) push; 1/sqrt(HEAD_DIM) folded into wq
        qkv = jnp.dot(x, wqkv_ref[l], preferred_element_type=f32) + b_qkv
        q = to_heads(qkv[:, :HIDDEN])
        k = to_heads(qkv[:, HIDDEN:2 * HIDDEN])
        v = to_heads(qkv[:, 2 * HIDDEN:])

        # heads batched: (B*NH, S, HD) x (B*NH, S, HD) -> (B*NH, S, S)
        s = jnp.einsum("bqd,bkd->bqk", q, k, preferred_element_type=f32)
        s = s + mask_bias_bh
        s = s - jnp.max(s, axis=-1, keepdims=True)
        p = jnp.exp(s)
        p = p * pl.reciprocal(jnp.sum(p, axis=-1, keepdims=True), approx=True)
        ctx = jnp.einsum("bqk,bkd->bqd", p, v, preferred_element_type=f32)
        ctx = ctx.reshape(B, N_HEADS, S, HEAD_DIM).transpose(0, 2, 1, 3) \
                 .reshape(BS, HIDDEN)

        # single full-width output projection
        attn = jnp.dot(ctx, wo_ref[l], preferred_element_type=f32) + b_o

        h1 = _layernorm(x + attn, ln1g, ln1b)
        # TODO(synk): tanh-approx GELU; HF RoBERTa uses the exact erf form.
        ff = jax.nn.gelu(
            jnp.dot(h1, wi_ref[l], preferred_element_type=f32) + b_i,
            approximate=True)
        ffo = jnp.dot(ff, wf_ref[l], preferred_element_type=f32) + b_f
        x = _layernorm(h1 + ffo, ln2g, ln2b)

    # pooler on [CLS] token + classifier on concat(pooled, metadata)
    cls_tok = x.reshape(B, S, HIDDEN)[:, 0, :]                      # (B, H)
    pooled = jnp.tanh(
        jnp.dot(cls_tok, wp_ref[...], preferred_element_type=f32) + misc[2:3, :])
    # cat(pooled, meta) @ Wc == pooled . wc_h + meta . wc_m  (lane reduces, XLU)
    wc_h = misc[3:4, :]                                             # (1, H)
    wc_m = misc[4:5, :N_META]                                       # (1, 3)
    bc = misc[5:6, 0:1]                                             # (1, 1)
    logit = (jnp.sum(pooled * wc_h, axis=-1, keepdims=True)
             + jnp.sum(meta_ref[...] * wc_m, axis=-1, keepdims=True)
             + bc)
    o_ref[...] = logit


# ------------------------------ parameters ------------------------------------
def init_params(key):
    keys = iter(jax.random.split(key, 128))

    def normal(shape, std=0.02):
        return (std * jax.random.normal(next(keys), shape)).astype(jnp.float32)

    def pad_row(v):
        return jnp.pad(v, (0, VEC_W - v.shape[0]))

    scale = 1.0 / math.sqrt(HEAD_DIM)

    wqkv_l, wo_l, wi_l, wf_l, lvec_l = [], [], [], [], []
    for _ in range(N_LAYERS):
        wq = normal((HIDDEN, HIDDEN)) * scale   # fold 1/sqrt(HEAD_DIM) into wq
        wk = normal((HIDDEN, HIDDEN))
        wv = normal((HIDDEN, HIDDEN))
        wqkv_l.append(jnp.concatenate([wq, wk, wv], axis=1))   # (H, 3H)
        wo_l.append(normal((HIDDEN, HIDDEN)))
        wi_l.append(normal((HIDDEN, INTERMEDIATE)))
        wf_l.append(normal((INTERMEDIATE, HIDDEN)))
        lvec_l.append(jnp.stack([
            pad_row(jnp.zeros((3 * HIDDEN,), jnp.float32)),    # 0: b_qkv
            pad_row(jnp.zeros((HIDDEN,), jnp.float32)),        # 1: b_o
            pad_row(jnp.ones((HIDDEN,), jnp.float32)),         # 2: ln1 gamma
            pad_row(jnp.zeros((HIDDEN,), jnp.float32)),        # 3: ln1 beta
            pad_row(jnp.zeros((INTERMEDIATE,), jnp.float32)),  # 4: b_i
            pad_row(jnp.zeros((HIDDEN,), jnp.float32)),        # 5: b_f
            pad_row(jnp.ones((HIDDEN,), jnp.float32)),         # 6: ln2 gamma
            pad_row(jnp.zeros((HIDDEN,), jnp.float32)),        # 7: ln2 beta
        ], axis=0))                                            # (8, VEC_W)

    cls_w = normal((HIDDEN + N_META, 1))        # nn.Linear(hidden_size + 3, 1)
    misc = jnp.stack([
        jnp.ones((HIDDEN,), jnp.float32),                      # 0: emb LN gamma
        jnp.zeros((HIDDEN,), jnp.float32),                     # 1: emb LN beta
        jnp.zeros((HIDDEN,), jnp.float32),                     # 2: pooler bias
        cls_w[:HIDDEN, 0],                                     # 3: classifier w (hidden)
        jnp.pad(cls_w[HIDDEN:, 0], (0, HIDDEN - N_META)),      # 4: classifier w (meta)
        jnp.zeros((HIDDEN,), jnp.float32),                     # 5: classifier bias @ [0]
    ], axis=0)                                                 # (6, H)

    return {
        "word_emb": normal((VOCAB, HIDDEN)),
        "pos_emb": normal((MAX_POS, HIDDEN)),
        "pooler_w": normal((HIDDEN, HIDDEN)),
        "w_qkv": jnp.stack(wqkv_l),             # (L, H, 3H)
        "w_o": jnp.stack(wo_l),                 # (L, H, H)
        "w_i": jnp.stack(wi_l),                 # (L, H, I)
        "w_f": jnp.stack(wf_l),                 # (L, I, H)
        "layer_vecs": jnp.stack(lvec_l),        # (L, 8, VEC_W)
        "misc": misc,                           # (6, H)
    }


# ------------------------------- forward --------------------------------------
@jax.jit
def comment_classifier_forward(params, input_ids, attention_mask, metadata_features):
    B, S = input_ids.shape
    # TODO(synk): nn.Dropout(0.3) treated as identity (eval-mode semantics);
    # pretrained roberta-base weights replaced by deterministic random init.
    pos_slab = jnp.tile(params["pos_emb"][:S, :], (B, 1))      # (B*S, H), B/S static
    args = (
        input_ids.reshape(B * S, 1).astype(jnp.int32),         # column layout for one-hot
        attention_mask.astype(jnp.int32),
        metadata_features.astype(jnp.float32),
        pos_slab,
        params["word_emb"],
        params["w_qkv"], params["w_o"], params["w_i"], params["w_f"],
        params["layer_vecs"],
        params["pooler_w"], params["misc"],
    )
    return pl.pallas_call(
        fused_forward_kernel,
        out_shape=jax.ShapeDtypeStruct((B, 1), jnp.float32),
        in_specs=[VMEM] * len(args),
        out_specs=VMEM,
    )(*args)


# -------------------------------- main -----------------------------------------
if __name__ == "__main__":
    key = jax.random.PRNGKey(0)
    pkey, ikey, metakey = jax.random.split(key, 3)
    params = init_params(pkey)

    B, S = 2, 8
    input_ids = jax.random.randint(ikey, (B, S), 0, VOCAB, dtype=jnp.int32)
    attention_mask = jnp.ones((B, S), dtype=jnp.int32).at[1, -1].set(0)
    metadata_features = jax.random.normal(metakey, (B, N_META), dtype=jnp.float32)

    out = comment_classifier_forward(params, input_ids, attention_mask, metadata_features)
    out = jax.block_until_ready(out)
    assert out.shape == (B, 1) and out.dtype == jnp.float32
    print("KERNEL_OK")
</pallas_src>

<mosaic_0001>
module attributes {stable_mosaic.version = 11 : i64} {
  func.func @fused_forward_kernel(%arg0: memref<16x1xi32, #tpu.memory_space<vmem>>, %arg1: memref<2x8xi32, #tpu.memory_space<vmem>>, %arg2: memref<2x3xf32, #tpu.memory_space<vmem>>, %arg3: memref<16x32xf32, #tpu.memory_space<vmem>>, %arg4: memref<64x32xf32, #tpu.memory_space<vmem>>, %arg5: memref<2x32x96xf32, #tpu.memory_space<vmem>>, %arg6: memref<2x32x32xf32, #tpu.memory_space<vmem>>, %arg7: memref<2x32x64xf32, #tpu.memory_space<vmem>>, %arg8: memref<2x64x32xf32, #tpu.memory_space<vmem>>, %arg9: memref<2x8x96xf32, #tpu.memory_space<vmem>>, %arg10: memref<32x32xf32, #tpu.memory_space<vmem>>, %arg11: memref<6x32xf32, #tpu.memory_space<vmem>>, %arg12: memref<2x1xf32, #tpu.memory_space<vmem>>) attributes {dimension_semantics = [], scalar_prefetch = 0 : i64, scratch_operands = 0 : i64, tpu.core_type = #tpu.core_type<tc>} {
    %c0 = arith.constant 0 : index
    %c0_0 = arith.constant 0 : index
    %0 = vector.load %arg11[%c0, %c0_0] : memref<6x32xf32, #tpu.memory_space<vmem>>, vector<6x32xf32>
    %c0_1 = arith.constant 0 : index
    %c0_2 = arith.constant 0 : index
    %1 = vector.load %arg0[%c0_1, %c0_2] : memref<16x1xi32, #tpu.memory_space<vmem>>, vector<16x1xi32>
    %2 = tpu.iota {dimensions = array<i32: 1>} : vector<16x64xi32>
    %3 = vector.broadcast %1 : vector<16x1xi32> to vector<16x64xi32>
    %4 = arith.cmpi eq, %3, %2 : vector<16x64xi32>
    %5 = arith.extui %4 : vector<16x64xi1> to vector<16x64xi32>
    %6 = arith.sitofp %5 : vector<16x64xi32> to vector<16x64xf32>
    %c0_3 = arith.constant 0 : index
    %c0_4 = arith.constant 0 : index
    %7 = vector.load %arg4[%c0_3, %c0_4] : memref<64x32xf32, #tpu.memory_space<vmem>>, vector<64x32xf32>
    %cst = arith.constant dense<0.000000e+00> : vector<16x32xf32>
    %8 = tpu.matmul %6, %7, %cst {dimension_numbers = #tpu.dot_dimension_numbers<[1], [0], [0], [1], [0, 0, 1, 1], [], []>} : vector<16x64xf32>, vector<64x32xf32>, vector<16x32xf32> -> vector<16x32xf32>
    %c0_5 = arith.constant 0 : index
    %c0_6 = arith.constant 0 : index
    %9 = vector.load %arg3[%c0_5, %c0_6] : memref<16x32xf32, #tpu.memory_space<vmem>>, vector<16x32xf32>
    %10 = arith.addf %8, %9 : vector<16x32xf32>
    %11 = vector.extract_strided_slice %0 {offsets = [0, 0], sizes = [1, 32], strides = [1, 1]} : vector<6x32xf32> to vector<1x32xf32>
    %12 = vector.extract_strided_slice %0 {offsets = [1, 0], sizes = [1, 32], strides = [1, 1]} : vector<6x32xf32> to vector<1x32xf32>
    %cst_7 = arith.constant dense<0.000000e+00> : vector<16xf32>
    %13 = vector.multi_reduction <add>, %10, %cst_7 [1] : vector<16x32xf32> to vector<16xf32>
    %14 = vector.shape_cast %13 : vector<16xf32> to vector<16x1xf32>
    %cst_8 = arith.constant 3.200000e+01 : f32
    %15 = vector.broadcast %cst_8 : f32 to vector<16x1xf32>
    %16 = arith.divf %14, %15 : vector<16x1xf32>
    %17 = vector.broadcast %16 : vector<16x1xf32> to vector<16x32xf32>
    %18 = arith.subf %10, %17 : vector<16x32xf32>
    %19 = arith.mulf %18, %18 : vector<16x32xf32>
    %cst_9 = arith.constant dense<0.000000e+00> : vector<16xf32>
    %20 = vector.multi_reduction <add>, %19, %cst_9 [1] : vector<16x32xf32> to vector<16xf32>
    %21 = vector.shape_cast %20 : vector<16xf32> to vector<16x1xf32>
    %cst_10 = arith.constant 3.200000e+01 : f32
    %22 = vector.broadcast %cst_10 : f32 to vector<16x1xf32>
    %23 = arith.divf %21, %22 : vector<16x1xf32>
    %24 = vector.broadcast %16 : vector<16x1xf32> to vector<16x32xf32>
    %25 = arith.subf %10, %24 : vector<16x32xf32>
    %cst_11 = arith.constant 9.99999974E-6 : f32
    %26 = vector.broadcast %cst_11 : f32 to vector<16x1xf32>
    %27 = arith.addf %23, %26 : vector<16x1xf32>
    %28 = math.rsqrt %27 : vector<16x1xf32>
    %29 = vector.broadcast %28 : vector<16x1xf32> to vector<16x32xf32>
    %30 = arith.mulf %25, %29 : vector<16x32xf32>
    %31 = vector.broadcast %11 : vector<1x32xf32> to vector<16x32xf32>
    %32 = arith.mulf %30, %31 : vector<16x32xf32>
    %33 = vector.broadcast %12 : vector<1x32xf32> to vector<16x32xf32>
    %34 = arith.addf %32, %33 : vector<16x32xf32>
    %c0_12 = arith.constant 0 : index
    %c0_13 = arith.constant 0 : index
    %35 = vector.load %arg1[%c0_12, %c0_13] : memref<2x8xi32, #tpu.memory_space<vmem>>, vector<2x8xi32>
    %36 = arith.sitofp %35 : vector<2x8xi32> to vector<2x8xf32>
    %cst_14 = arith.constant 1.000000e+00 : f32
    %37 = vector.broadcast %cst_14 : f32 to vector<2x8xf32>
    %38 = arith.subf %37, %36 : vector<2x8xf32>
    %cst_15 = arith.constant -1.000000e+09 : f32
    %39 = vector.broadcast %cst_15 : f32 to vector<2x8xf32>
    %40 = arith.mulf %38, %39 : vector<2x8xf32>
    %41 = vector.shape_cast %40 : vector<2x8xf32> to vector<2x1x8xf32>
    %42 = vector.shape_cast %41 : vector<2x1x8xf32> to vector<2x1x8xf32>
    %43 = vector.broadcast %42 : vector<2x1x8xf32> to vector<2x4x8xf32>
    %44 = vector.shape_cast %43 : vector<2x4x8xf32> to vector<8x1x8xf32>
    %c0_16 = arith.constant 0 : index
    %c0_17 = arith.constant 0 : index
    %c0_18 = arith.constant 0 : index
    %45 = vector.load %arg9[%c0_16, %c0_17, %c0_18] : memref<2x8x96xf32, #tpu.memory_space<vmem>>, vector<1x8x96xf32>
    %46 = vector.shape_cast %45 : vector<1x8x96xf32> to vector<8x96xf32>
    %47 = vector.extract_strided_slice %46 {offsets = [0, 0], sizes = [1, 96], strides = [1, 1]} : vector<8x96xf32> to vector<1x96xf32>
    %48 = vector.extract_strided_slice %46 {offsets = [1, 0], sizes = [1, 32], strides = [1, 1]} : vector<8x96xf32> to vector<1x32xf32>
    %49 = vector.extract_strided_slice %46 {offsets = [2, 0], sizes = [1, 32], strides = [1, 1]} : vector<8x96xf32> to vector<1x32xf32>
    %50 = vector.extract_strided_slice %46 {offsets = [3, 0], sizes = [1, 32], strides = [1, 1]} : vector<8x96xf32> to vector<1x32xf32>
    %51 = vector.extract_strided_slice %46 {offsets = [4, 0], sizes = [1, 64], strides = [1, 1]} : vector<8x96xf32> to vector<1x64xf32>
    %52 = vector.extract_strided_slice %46 {offsets = [5, 0], sizes = [1, 32], strides = [1, 1]} : vector<8x96xf32> to vector<1x32xf32>
    %53 = vector.extract_strided_slice %46 {offsets = [6, 0], sizes = [1, 32], strides = [1, 1]} : vector<8x96xf32> to vector<1x32xf32>
    %54 = vector.extract_strided_slice %46 {offsets = [7, 0], sizes = [1, 32], strides = [1, 1]} : vector<8x96xf32> to vector<1x32xf32>
    %c0_19 = arith.constant 0 : index
    %c0_20 = arith.constant 0 : index
    %c0_21 = arith.constant 0 : index
    %55 = vector.load %arg5[%c0_19, %c0_20, %c0_21] : memref<2x32x96xf32, #tpu.memory_space<vmem>>, vector<1x32x96xf32>
    %56 = vector.shape_cast %55 : vector<1x32x96xf32> to vector<32x96xf32>
    %cst_22 = arith.constant dense<0.000000e+00> : vector<16x96xf32>
    %57 = tpu.matmul %34, %56, %cst_22 {dimension_numbers = #tpu.dot_dimension_numbers<[1], [0], [0], [1], [0, 0, 1, 1], [], []>} : vector<16x32xf32>, vector<32x96xf32>, vector<16x96xf32> -> vector<16x96xf32>
    %58 = vector.broadcast %47 : vector<1x96xf32> to vector<16x96xf32>
    %59 = arith.addf %57, %58 : vector<16x96xf32>
    %60 = vector.extract_strided_slice %59 {offsets = [0, 0], sizes = [16, 32], strides = [1, 1]} : vector<16x96xf32> to vector<16x32xf32>
    %61 = vector.shape_cast %60 : vector<16x32xf32> to vector<2x8x4x8xf32>
    %62 = tpu.transpose %61, [0, 2, 1, 3] : vector<2x8x4x8xf32> -> vector<2x4x8x8xf32>
    %63 = vector.shape_cast %62 : vector<2x4x8x8xf32> to vector<8x8x8xf32>
    %64 = vector.extract_strided_slice %59 {offsets = [0, 32], sizes = [16, 32], strides = [1, 1]} : vector<16x96xf32> to vector<16x32xf32>
    %65 = vector.shape_cast %64 : vector<16x32xf32> to vector<2x8x4x8xf32>
    %66 = tpu.transpose %65, [0, 2, 1, 3] : vector<2x8x4x8xf32> -> vector<2x4x8x8xf32>
    %67 = vector.shape_cast %66 : vector<2x4x8x8xf32> to vector<8x8x8xf32>
    %68 = vector.extract_strided_slice %59 {offsets = [0, 64], sizes = [16, 32], strides = [1, 1]} : vector<16x96xf32> to vector<16x32xf32>
    %69 = vector.shape_cast %68 : vector<16x32xf32> to vector<2x8x4x8xf32>
    %70 = tpu.transpose %69, [0, 2, 1, 3] : vector<2x8x4x8xf32> -> vector<2x4x8x8xf32>
    %71 = vector.shape_cast %70 : vector<2x4x8x8xf32> to vector<8x8x8xf32>
    "tpu.trace_start"() <{level = 10 : i32, message = "bqd,bkd->bqk"}> : () -> ()
    %cst_23 = arith.constant dense<0.000000e+00> : vector<8x8x8xf32>
    %72 = tpu.matmul %63, %67, %cst_23 {dimension_numbers = #tpu.dot_dimension_numbers<[2], [2], [1], [1], [0, 0, 0, 1, 1, 1], [0], [0]>} : vector<8x8x8xf32>, vector<8x8x8xf32>, vector<8x8x8xf32> -> vector<8x8x8xf32>
    "tpu.trace_stop"() : () -> ()
    %73 = vector.broadcast %44 : vector<8x1x8xf32> to vector<8x8x8xf32>
    %74 = arith.addf %72, %73 : vector<8x8x8xf32>
    %cst_24 = arith.constant dense<0xFF800000> : vector<8x8xf32>
    %75 = vector.multi_reduction <maximumf>, %74, %cst_24 [2] : vector<8x8x8xf32> to vector<8x8xf32>
    %76 = vector.shape_cast %75 : vector<8x8xf32> to vector<8x8x1xf32>
    %77 = vector.broadcast %76 : vector<8x8x1xf32> to vector<8x8x8xf32>
    %78 = arith.subf %74, %77 : vector<8x8x8xf32>
    %79 = math.exp %78 : vector<8x8x8xf32>
    %cst_25 = arith.constant dense<0.000000e+00> : vector<8x8xf32>
    %80 = vector.multi_reduction <add>, %79, %cst_25 [2] : vector<8x8x8xf32> to vector<8x8xf32>
    %81 = vector.shape_cast %80 : vector<8x8xf32> to vector<8x8x1xf32>
    %82 = tpu.reciprocal %81 {approx = true} : vector<8x8x1xf32> -> vector<8x8x1xf32>
    %83 = vector.broadcast %82 : vector<8x8x1xf32> to vector<8x8x8xf32>
    %84 = arith.mulf %79, %83 : vector<8x8x8xf32>
    "tpu.trace_start"() <{level = 10 : i32, message = "bqk,bkd->bqd"}> : () -> ()
    %cst_26 = arith.constant dense<0.000000e+00> : vector<8x8x8xf32>
    %85 = tpu.matmul %84, %71, %cst_26 {dimension_numbers = #tpu.dot_dimension_numbers<[2], [1], [1], [2], [0, 0, 0, 1, 1, 2], [0], [0]>} : vector<8x8x8xf32>, vector<8x8x8xf32>, vector<8x8x8xf32> -> vector<8x8x8xf32>
    "tpu.trace_stop"() : () -> ()
    %86 = vector.shape_cast %85 : vector<8x8x8xf32> to vector<2x4x8x8xf32>
    %87 = tpu.transpose %86, [0, 2, 1, 3] : vector<2x4x8x8xf32> -> vector<2x8x4x8xf32>
    %88 = vector.shape_cast %87 : vector<2x8x4x8xf32> to vector<16x32xf32>
    %c0_27 = arith.constant 0 : index
    %c0_28 = arith.constant 0 : index
    %c0_29 = arith.constant 0 : index
    %89 = vector.load %arg6[%c0_27, %c0_28, %c0_29] : memref<2x32x32xf32, #tpu.memory_space<vmem>>, vector<1x32x32xf32>
    %90 = vector.shape_cast %89 : vector<1x32x32xf32> to vector<32x32xf32>
    %cst_30 = arith.constant dense<0.000000e+00> : vector<16x32xf32>
    %91 = tpu.matmul %88, %90, %cst_30 {dimension_numbers = #tpu.dot_dimension_numbers<[1], [0], [0], [1], [0, 0, 1, 1], [], []>} : vector<16x32xf32>, vector<32x32xf32>, vector<16x32xf32> -> vector<16x32xf32>
    %92 = vector.broadcast %48 : vector<1x32xf32> to vector<16x32xf32>
    %93 = arith.addf %91, %92 : vector<16x32xf32>
    %94 = arith.addf %34, %93 : vector<16x32xf32>
    %cst_31 = arith.constant dense<0.000000e+00> : vector<16xf32>
    %95 = vector.multi_reduction <add>, %94, %cst_31 [1] : vector<16x32xf32> to vector<16xf32>
    %96 = vector.shape_cast %95 : vector<16xf32> to vector<16x1xf32>
    %cst_32 = arith.constant 3.200000e+01 : f32
    %97 = vector.broadcast %cst_32 : f32 to vector<16x1xf32>
    %98 = arith.divf %96, %97 : vector<16x1xf32>
    %99 = vector.broadcast %98 : vector<16x1xf32> to vector<16x32xf32>
    %100 = arith.subf %94, %99 : vector<16x32xf32>
    %101 = arith.mulf %100, %100 : vector<16x32xf32>
    %cst_33 = arith.constant dense<0.000000e+00> : vector<16xf32>
    %102 = vector.multi_reduction <add>, %101, %cst_33 [1] : vector<16x32xf32> to vector<16xf32>
    %103 = vector.shape_cast %102 : vector<16xf32> to vector<16x1xf32>
    %cst_34 = arith.constant 3.200000e+01 : f32
    %104 = vector.broadcast %cst_34 : f32 to vector<16x1xf32>
    %105 = arith.divf %103, %104 : vector<16x1xf32>
    %106 = vector.broadcast %98 : vector<16x1xf32> to vector<16x32xf32>
    %107 = arith.subf %94, %106 : vector<16x32xf32>
    %cst_35 = arith.constant 9.99999974E-6 : f32
    %108 = vector.broadcast %cst_35 : f32 to vector<16x1xf32>
    %109 = arith.addf %105, %108 : vector<16x1xf32>
    %110 = math.rsqrt %109 : vector<16x1xf32>
    %111 = vector.broadcast %110 : vector<16x1xf32> to vector<16x32xf32>
    %112 = arith.mulf %107, %111 : vector<16x32xf32>
    %113 = vector.broadcast %49 : vector<1x32xf32> to vector<16x32xf32>
    %114 = arith.mulf %112, %113 : vector<16x32xf32>
    %115 = vector.broadcast %50 : vector<1x32xf32> to vector<16x32xf32>
    %116 = arith.addf %114, %115 : vector<16x32xf32>
    %c0_36 = arith.constant 0 : index
    %c0_37 = arith.constant 0 : index
    %c0_38 = arith.constant 0 : index
    %117 = vector.load %arg7[%c0_36, %c0_37, %c0_38] : memref<2x32x64xf32, #tpu.memory_space<vmem>>, vector<1x32x64xf32>
    %118 = vector.shape_cast %117 : vector<1x32x64xf32> to vector<32x64xf32>
    %cst_39 = arith.constant dense<0.000000e+00> : vector<16x64xf32>
    %119 = tpu.matmul %116, %118, %cst_39 {dimension_numbers = #tpu.dot_dimension_numbers<[1], [0], [0], [1], [0, 0, 1, 1], [], []>} : vector<16x32xf32>, vector<32x64xf32>, vector<16x64xf32> -> vector<16x64xf32>
    %120 = vector.broadcast %51 : vector<1x64xf32> to vector<16x64xf32>
    %121 = arith.addf %119, %120 : vector<16x64xf32>
    %122 = arith.mulf %121, %121 : vector<16x64xf32>
    %123 = arith.mulf %121, %122 : vector<16x64xf32>
    %cst_40 = arith.constant 4.471500e-02 : f32
    %124 = vector.broadcast %cst_40 : f32 to vector<16x64xf32>
    %125 = arith.mulf %124, %123 : vector<16x64xf32>
    %126 = arith.addf %121, %125 : vector<16x64xf32>
    %cst_41 = arith.constant 0.797884583 : f32
    %127 = vector.broadcast %cst_41 : f32 to vector<16x64xf32>
    %128 = arith.mulf %127, %126 : vector<16x64xf32>
    %129 = math.tanh %128 : vector<16x64xf32>
    %cst_42 = arith.constant 1.000000e+00 : f32
    %130 = vector.broadcast %cst_42 : f32 to vector<16x64xf32>
    %131 = arith.addf %130, %129 : vector<16x64xf32>
    %cst_43 = arith.constant 5.000000e-01 : f32
    %132 = vector.broadcast %cst_43 : f32 to vector<16x64xf32>
    %133 = arith.mulf %132, %131 : vector<16x64xf32>
    %134 = arith.mulf %121, %133 : vector<16x64xf32>
    %c0_44 = arith.constant 0 : index
    %c0_45 = arith.constant 0 : index
    %c0_46 = arith.constant 0 : index
    %135 = vector.load %arg8[%c0_44, %c0_45, %c0_46] : memref<2x64x32xf32, #tpu.memory_space<vmem>>, vector<1x64x32xf32>
    %136 = vector.shape_cast %135 : vector<1x64x32xf32> to vector<64x32xf32>
    %cst_47 = arith.constant dense<0.000000e+00> : vector<16x32xf32>
    %137 = tpu.matmul %134, %136, %cst_47 {dimension_numbers = #tpu.dot_dimension_numbers<[1], [0], [0], [1], [0, 0, 1, 1], [], []>} : vector<16x64xf32>, vector<64x32xf32>, vector<16x32xf32> -> vector<16x32xf32>
    %138 = vector.broadcast %52 : vector<1x32xf32> to vector<16x32xf32>
    %139 = arith.addf %137, %138 : vector<16x32xf32>
    %140 = arith.addf %116, %139 : vector<16x32xf32>
    %cst_48 = arith.constant dense<0.000000e+00> : vector<16xf32>
    %141 = vector.multi_reduction <add>, %140, %cst_48 [1] : vector<16x32xf32> to vector<16xf32>
    %142 = vector.shape_cast %141 : vector<16xf32> to vector<16x1xf32>
    %cst_49 = arith.constant 3.200000e+01 : f32
    %143 = vector.broadcast %cst_49 : f32 to vector<16x1xf32>
    %144 = arith.divf %142, %143 : vector<16x1xf32>
    %145 = vector.broadcast %144 : vector<16x1xf32> to vector<16x32xf32>
    %146 = arith.subf %140, %145 : vector<16x32xf32>
    %147 = arith.mulf %146, %146 : vector<16x32xf32>
    %cst_50 = arith.constant dense<0.000000e+00> : vector<16xf32>
    %148 = vector.multi_reduction <add>, %147, %cst_50 [1] : vector<16x32xf32> to vector<16xf32>
    %149 = vector.shape_cast %148 : vector<16xf32> to vector<16x1xf32>
    %cst_51 = arith.constant 3.200000e+01 : f32
    %150 = vector.broadcast %cst_51 : f32 to vector<16x1xf32>
    %151 = arith.divf %149, %150 : vector<16x1xf32>
    %152 = vector.broadcast %144 : vector<16x1xf32> to vector<16x32xf32>
    %153 = arith.subf %140, %152 : vector<16x32xf32>
    %cst_52 = arith.constant 9.99999974E-6 : f32
    %154 = vector.broadcast %cst_52 : f32 to vector<16x1xf32>
    %155 = arith.addf %151, %154 : vector<16x1xf32>
    %156 = math.rsqrt %155 : vector<16x1xf32>
    %157 = vector.broadcast %156 : vector<16x1xf32> to vector<16x32xf32>
    %158 = arith.mulf %153, %157 : vector<16x32xf32>
    %159 = vector.broadcast %53 : vector<1x32xf32> to vector<16x32xf32>
    %160 = arith.mulf %158, %159 : vector<16x32xf32>
    %161 = vector.broadcast %54 : vector<1x32xf32> to vector<16x32xf32>
    %162 = arith.addf %160, %161 : vector<16x32xf32>
    %c1 = arith.constant 1 : index
    %c0_53 = arith.constant 0 : index
    %c0_54 = arith.constant 0 : index
    %163 = vector.load %arg9[%c1, %c0_53, %c0_54] : memref<2x8x96xf32, #tpu.memory_space<vmem>>, vector<1x8x96xf32>
    %164 = vector.shape_cast %163 : vector<1x8x96xf32> to vector<8x96xf32>
    %165 = vector.extract_strided_slice %164 {offsets = [0, 0], sizes = [1, 96], strides = [1, 1]} : vector<8x96xf32> to vector<1x96xf32>
    %166 = vector.extract_strided_slice %164 {offsets = [1, 0], sizes = [1, 32], strides = [1, 1]} : vector<8x96xf32> to vector<1x32xf32>
    %167 = vector.extract_strided_slice %164 {offsets = [2, 0], sizes = [1, 32], strides = [1, 1]} : vector<8x96xf32> to vector<1x32xf32>
    %168 = vector.extract_strided_slice %164 {offsets = [3, 0], sizes = [1, 32], strides = [1, 1]} : vector<8x96xf32> to vector<1x32xf32>
    %169 = vector.extract_strided_slice %164 {offsets = [4, 0], sizes = [1, 64], strides = [1, 1]} : vector<8x96xf32> to vector<1x64xf32>
    %170 = vector.extract_strided_slice %164 {offsets = [5, 0], sizes = [1, 32], strides = [1, 1]} : vector<8x96xf32> to vector<1x32xf32>
    %171 = vector.extract_strided_slice %164 {offsets = [6, 0], sizes = [1, 32], strides = [1, 1]} : vector<8x96xf32> to vector<1x32xf32>
    %172 = vector.extract_strided_slice %164 {offsets = [7, 0], sizes = [1, 32], strides = [1, 1]} : vector<8x96xf32> to vector<1x32xf32>
    %c1_55 = arith.constant 1 : index
    %c0_56 = arith.constant 0 : index
    %c0_57 = arith.constant 0 : index
    %173 = vector.load %arg5[%c1_55, %c0_56, %c0_57] : memref<2x32x96xf32, #tpu.memory_space<vmem>>, vector<1x32x96xf32>
    %174 = vector.shape_cast %173 : vector<1x32x96xf32> to vector<32x96xf32>
    %cst_58 = arith.constant dense<0.000000e+00> : vector<16x96xf32>
    %175 = tpu.matmul %162, %174, %cst_58 {dimension_numbers = #tpu.dot_dimension_numbers<[1], [0], [0], [1], [0, 0, 1, 1], [], []>} : vector<16x32xf32>, vector<32x96xf32>, vector<16x96xf32> -> vector<16x96xf32>
    %176 = vector.broadcast %165 : vector<1x96xf32> to vector<16x96xf32>
    %177 = arith.addf %175, %176 : vector<16x96xf32>
    %178 = vector.extract_strided_slice %177 {offsets = [0, 0], sizes = [16, 32], strides = [1, 1]} : vector<16x96xf32> to vector<16x32xf32>
    %179 = vector.shape_cast %178 : vector<16x32xf32> to vector<2x8x4x8xf32>
    %180 = tpu.transpose %179, [0, 2, 1, 3] : vector<2x8x4x8xf32> -> vector<2x4x8x8xf32>
    %181 = vector.shape_cast %180 : vector<2x4x8x8xf32> to vector<8x8x8xf32>
    %182 = vector.extract_strided_slice %177 {offsets = [0, 32], sizes = [16, 32], strides = [1, 1]} : vector<16x96xf32> to vector<16x32xf32>
    %183 = vector.shape_cast %182 : vector<16x32xf32> to vector<2x8x4x8xf32>
    %184 = tpu.transpose %183, [0, 2, 1, 3] : vector<2x8x4x8xf32> -> vector<2x4x8x8xf32>
    %185 = vector.shape_cast %184 : vector<2x4x8x8xf32> to vector<8x8x8xf32>
    %186 = vector.extract_strided_slice %177 {offsets = [0, 64], sizes = [16, 32], strides = [1, 1]} : vector<16x96xf32> to vector<16x32xf32>
    %187 = vector.shape_cast %186 : vector<16x32xf32> to vector<2x8x4x8xf32>
    %188 = tpu.transpose %187, [0, 2, 1, 3] : vector<2x8x4x8xf32> -> vector<2x4x8x8xf32>
    %189 = vector.shape_cast %188 : vector<2x4x8x8xf32> to vector<8x8x8xf32>
    "tpu.trace_start"() <{level = 10 : i32, message = "bqd,bkd->bqk"}> : () -> ()
    %cst_59 = arith.constant dense<0.000000e+00> : vector<8x8x8xf32>
    %190 = tpu.matmul %181, %185, %cst_59 {dimension_numbers = #tpu.dot_dimension_numbers<[2], [2], [1], [1], [0, 0, 0, 1, 1, 1], [0], [0]>} : vector<8x8x8xf32>, vector<8x8x8xf32>, vector<8x8x8xf32> -> vector<8x8x8xf32>
    "tpu.trace_stop"() : () -> ()
    %191 = vector.broadcast %44 : vector<8x1x8xf32> to vector<8x8x8xf32>
    %192 = arith.addf %190, %191 : vector<8x8x8xf32>
    %cst_60 = arith.constant dense<0xFF800000> : vector<8x8xf32>
    %193 = vector.multi_reduction <maximumf>, %192, %cst_60 [2] : vector<8x8x8xf32> to vector<8x8xf32>
    %194 = vector.shape_cast %193 : vector<8x8xf32> to vector<8x8x1xf32>
    %195 = vector.broadcast %194 : vector<8x8x1xf32> to vector<8x8x8xf32>
    %196 = arith.subf %192, %195 : vector<8x8x8xf32>
    %197 = math.exp %196 : vector<8x8x8xf32>
    %cst_61 = arith.constant dense<0.000000e+00> : vector<8x8xf32>
    %198 = vector.multi_reduction <add>, %197, %cst_61 [2] : vector<8x8x8xf32> to vector<8x8xf32>
    %199 = vector.shape_cast %198 : vector<8x8xf32> to vector<8x8x1xf32>
    %200 = tpu.reciprocal %199 {approx = true} : vector<8x8x1xf32> -> vector<8x8x1xf32>
    %201 = vector.broadcast %200 : vector<8x8x1xf32> to vector<8x8x8xf32>
    %202 = arith.mulf %197, %201 : vector<8x8x8xf32>
    "tpu.trace_start"() <{level = 10 : i32, message = "bqk,bkd->bqd"}> : () -> ()
    %cst_62 = arith.constant dense<0.000000e+00> : vector<8x8x8xf32>
    %203 = tpu.matmul %202, %189, %cst_62 {dimension_numbers = #tpu.dot_dimension_numbers<[2], [1], [1], [2], [0, 0, 0, 1, 1, 2], [0], [0]>} : vector<8x8x8xf32>, vector<8x8x8xf32>, vector<8x8x8xf32> -> vector<8x8x8xf32>
    "tpu.trace_stop"() : () -> ()
    %204 = vector.shape_cast %203 : vector<8x8x8xf32> to vector<2x4x8x8xf32>
    %205 = tpu.transpose %204, [0, 2, 1, 3] : vector<2x4x8x8xf32> -> vector<2x8x4x8xf32>
    %206 = vector.shape_cast %205 : vector<2x8x4x8xf32> to vector<16x32xf32>
    %c1_63 = arith.constant 1 : index
    %c0_64 = arith.constant 0 : index
    %c0_65 = arith.constant 0 : index
    %207 = vector.load %arg6[%c1_63, %c0_64, %c0_65] : memref<2x32x32xf32, #tpu.memory_space<vmem>>, vector<1x32x32xf32>
    %208 = vector.shape_cast %207 : vector<1x32x32xf32> to vector<32x32xf32>
    %cst_66 = arith.constant dense<0.000000e+00> : vector<16x32xf32>
    %209 = tpu.matmul %206, %208, %cst_66 {dimension_numbers = #tpu.dot_dimension_numbers<[1], [0], [0], [1], [0, 0, 1, 1], [], []>} : vector<16x32xf32>, vector<32x32xf32>, vector<16x32xf32> -> vector<16x32xf32>
    %210 = vector.broadcast %166 : vector<1x32xf32> to vector<16x32xf32>
    %211 = arith.addf %209, %210 : vector<16x32xf32>
    %212 = arith.addf %162, %211 : vector<16x32xf32>
    %cst_67 = arith.constant dense<0.000000e+00> : vector<16xf32>
    %213 = vector.multi_reduction <add>, %212, %cst_67 [1] : vector<16x32xf32> to vector<16xf32>
    %214 = vector.shape_cast %213 : vector<16xf32> to vector<16x1xf32>
    %cst_68 = arith.constant 3.200000e+01 : f32
    %215 = vector.broadcast %cst_68 : f32 to vector<16x1xf32>
    %216 = arith.divf %214, %215 : vector<16x1xf32>
    %217 = vector.broadcast %216 : vector<16x1xf32> to vector<16x32xf32>
    %218 = arith.subf %212, %217 : vector<16x32xf32>
    %219 = arith.mulf %218, %218 : vector<16x32xf32>
    %cst_69 = arith.constant dense<0.000000e+00> : vector<16xf32>
    %220 = vector.multi_reduction <add>, %219, %cst_69 [1] : vector<16x32xf32> to vector<16xf32>
    %221 = vector.shape_cast %220 : vector<16xf32> to vector<16x1xf32>
    %cst_70 = arith.constant 3.200000e+01 : f32
    %222 = vector.broadcast %cst_70 : f32 to vector<16x1xf32>
    %223 = arith.divf %221, %222 : vector<16x1xf32>
    %224 = vector.broadcast %216 : vector<16x1xf32> to vector<16x32xf32>
    %225 = arith.subf %212, %224 : vector<16x32xf32>
    %cst_71 = arith.constant 9.99999974E-6 : f32
    %226 = vector.broadcast %cst_71 : f32 to vector<16x1xf32>
    %227 = arith.addf %223, %226 : vector<16x1xf32>
    %228 = math.rsqrt %227 : vector<16x1xf32>
    %229 = vector.broadcast %228 : vector<16x1xf32> to vector<16x32xf32>
    %230 = arith.mulf %225, %229 : vector<16x32xf32>
    %231 = vector.broadcast %167 : vector<1x32xf32> to vector<16x32xf32>
    %232 = arith.mulf %230, %231 : vector<16x32xf32>
    %233 = vector.broadcast %168 : vector<1x32xf32> to vector<16x32xf32>
    %234 = arith.addf %232, %233 : vector<16x32xf32>
    %c1_72 = arith.constant 1 : index
    %c0_73 = arith.constant 0 : index
    %c0_74 = arith.constant 0 : index
    %235 = vector.load %arg7[%c1_72, %c0_73, %c0_74] : memref<2x32x64xf32, #tpu.memory_space<vmem>>, vector<1x32x64xf32>
    %236 = vector.shape_cast %235 : vector<1x32x64xf32> to vector<32x64xf32>
    %cst_75 = arith.constant dense<0.000000e+00> : vector<16x64xf32>
    %237 = tpu.matmul %234, %236, %cst_75 {dimension_numbers = #tpu.dot_dimension_numbers<[1], [0], [0], [1], [0, 0, 1, 1], [], []>} : vector<16x32xf32>, vector<32x64xf32>, vector<16x64xf32> -> vector<16x64xf32>
    %238 = vector.broadcast %169 : vector<1x64xf32> to vector<16x64xf32>
    %239 = arith.addf %237, %238 : vector<16x64xf32>
    %240 = arith.mulf %239, %239 : vector<16x64xf32>
    %241 = arith.mulf %239, %240 : vector<16x64xf32>
    %cst_76 = arith.constant 4.471500e-02 : f32
    %242 = vector.broadcast %cst_76 : f32 to vector<16x64xf32>
    %243 = arith.mulf %242, %241 : vector<16x64xf32>
    %244 = arith.addf %239, %243 : vector<16x64xf32>
    %cst_77 = arith.constant 0.797884583 : f32
    %245 = vector.broadcast %cst_77 : f32 to vector<16x64xf32>
    %246 = arith.mulf %245, %244 : vector<16x64xf32>
    %247 = math.tanh %246 : vector<16x64xf32>
    %cst_78 = arith.constant 1.000000e+00 : f32
    %248 = vector.broadcast %cst_78 : f32 to vector<16x64xf32>
    %249 = arith.addf %248, %247 : vector<16x64xf32>
    %cst_79 = arith.constant 5.000000e-01 : f32
    %250 = vector.broadcast %cst_79 : f32 to vector<16x64xf32>
    %251 = arith.mulf %250, %249 : vector<16x64xf32>
    %252 = arith.mulf %239, %251 : vector<16x64xf32>
    %c1_80 = arith.constant 1 : index
    %c0_81 = arith.constant 0 : index
    %c0_82 = arith.constant 0 : index
    %253 = vector.load %arg8[%c1_80, %c0_81, %c0_82] : memref<2x64x32xf32, #tpu.memory_space<vmem>>, vector<1x64x32xf32>
    %254 = vector.shape_cast %253 : vector<1x64x32xf32> to vector<64x32xf32>
    %cst_83 = arith.constant dense<0.000000e+00> : vector<16x32xf32>
    %255 = tpu.matmul %252, %254, %cst_83 {dimension_numbers = #tpu.dot_dimension_numbers<[1], [0], [0], [1], [0, 0, 1, 1], [], []>} : vector<16x64xf32>, vector<64x32xf32>, vector<16x32xf32> -> vector<16x32xf32>
    %256 = vector.broadcast %170 : vector<1x32xf32> to vector<16x32xf32>
    %257 = arith.addf %255, %256 : vector<16x32xf32>
    %258 = arith.addf %234, %257 : vector<16x32xf32>
    %cst_84 = arith.constant dense<0.000000e+00> : vector<16xf32>
    %259 = vector.multi_reduction <add>, %258, %cst_84 [1] : vector<16x32xf32> to vector<16xf32>
    %260 = vector.shape_cast %259 : vector<16xf32> to vector<16x1xf32>
    %cst_85 = arith.constant 3.200000e+01 : f32
    %261 = vector.broadcast %cst_85 : f32 to vector<16x1xf32>
    %262 = arith.divf %260, %261 : vector<16x1xf32>
    %263 = vector.broadcast %262 : vector<16x1xf32> to vector<16x32xf32>
    %264 = arith.subf %258, %263 : vector<16x32xf32>
    %265 = arith.mulf %264, %264 : vector<16x32xf32>
    %cst_86 = arith.constant dense<0.000000e+00> : vector<16xf32>
    %266 = vector.multi_reduction <add>, %265, %cst_86 [1] : vector<16x32xf32> to vector<16xf32>
    %267 = vector.shape_cast %266 : vector<16xf32> to vector<16x1xf32>
    %cst_87 = arith.constant 3.200000e+01 : f32
    %268 = vector.broadcast %cst_87 : f32 to vector<16x1xf32>
    %269 = arith.divf %267, %268 : vector<16x1xf32>
    %270 = vector.broadcast %262 : vector<16x1xf32> to vector<16x32xf32>
    %271 = arith.subf %258, %270 : vector<16x32xf32>
    %cst_88 = arith.constant 9.99999974E-6 : f32
    %272 = vector.broadcast %cst_88 : f32 to vector<16x1xf32>
    %273 = arith.addf %269, %272 : vector<16x1xf32>
    %274 = math.rsqrt %273 : vector<16x1xf32>
    %275 = vector.broadcast %274 : vector<16x1xf32> to vector<16x32xf32>
    %276 = arith.mulf %271, %275 : vector<16x32xf32>
    %277 = vector.broadcast %171 : vector<1x32xf32> to vector<16x32xf32>
    %278 = arith.mulf %276, %277 : vector<16x32xf32>
    %279 = vector.broadcast %172 : vector<1x32xf32> to vector<16x32xf32>
    %280 = arith.addf %278, %279 : vector<16x32xf32>
    %281 = vector.shape_cast %280 : vector<16x32xf32> to vector<2x8x32xf32>
    %282 = vector.extract_strided_slice %281 {offsets = [0, 0, 0], sizes = [2, 1, 32], strides = [1, 1, 1]} : vector<2x8x32xf32> to vector<2x1x32xf32>
    %283 = vector.shape_cast %282 : vector<2x1x32xf32> to vector<2x32xf32>
    %c0_89 = arith.constant 0 : index
    %c0_90 = arith.constant 0 : index
    %284 = vector.load %arg10[%c0_89, %c0_90] : memref<32x32xf32, #tpu.memory_space<vmem>>, vector<32x32xf32>
    %cst_91 = arith.constant dense<0.000000e+00> : vector<2x32xf32>
    %285 = tpu.matmul %283, %284, %cst_91 {dimension_numbers = #tpu.dot_dimension_numbers<[1], [0], [0], [1], [0, 0, 1, 1], [], []>} : vector<2x32xf32>, vector<32x32xf32>, vector<2x32xf32> -> vector<2x32xf32>
    %286 = vector.extract_strided_slice %0 {offsets = [2, 0], sizes = [1, 32], strides = [1, 1]} : vector<6x32xf32> to vector<1x32xf32>
    %287 = vector.broadcast %286 : vector<1x32xf32> to vector<2x32xf32>
    %288 = arith.addf %285, %287 : vector<2x32xf32>
    %289 = math.tanh %288 : vector<2x32xf32>
    %290 = vector.extract_strided_slice %0 {offsets = [3, 0], sizes = [1, 32], strides = [1, 1]} : vector<6x32xf32> to vector<1x32xf32>
    %291 = vector.extract_strided_slice %0 {offsets = [4, 0], sizes = [1, 3], strides = [1, 1]} : vector<6x32xf32> to vector<1x3xf32>
    %292 = vector.extract_strided_slice %0 {offsets = [5, 0], sizes = [1, 1], strides = [1, 1]} : vector<6x32xf32> to vector<1x1xf32>
    %293 = vector.broadcast %290 : vector<1x32xf32> to vector<2x32xf32>
    %294 = arith.mulf %289, %293 : vector<2x32xf32>
    %cst_92 = arith.constant dense<0.000000e+00> : vector<2xf32>
    %295 = vector.multi_reduction <add>, %294, %cst_92 [1] : vector<2x32xf32> to vector<2xf32>
    %296 = vector.shape_cast %295 : vector<2xf32> to vector<2x1xf32>
    %c0_93 = arith.constant 0 : index
    %c0_94 = arith.constant 0 : index
    %297 = vector.load %arg2[%c0_93, %c0_94] : memref<2x3xf32, #tpu.memory_space<vmem>>, vector<2x3xf32>
    %298 = vector.broadcast %291 : vector<1x3xf32> to vector<2x3xf32>
    %299 = arith.mulf %297, %298 : vector<2x3xf32>
    %cst_95 = arith.constant dense<0.000000e+00> : vector<2xf32>
    %300 = vector.multi_reduction <add>, %299, %cst_95 [1] : vector<2x3xf32> to vector<2xf32>
    %301 = vector.shape_cast %300 : vector<2xf32> to vector<2x1xf32>
    %302 = arith.addf %296, %301 : vector<2x1xf32>
    %303 = vector.broadcast %292 : vector<1x1xf32> to vector<2x1xf32>
    %304 = arith.addf %302, %303 : vector<2x1xf32>
    %c0_96 = arith.constant 0 : index
    %c0_97 = arith.constant 0 : index
    %305 = vector.load %arg12[%c0_96, %c0_97] : memref<2x1xf32, #tpu.memory_space<vmem>>, vector<2x1xf32>
    tpu.vector_store %arg12[%c0_96, %c0_97], %304 {strides = array<i32>} : memref<2x1xf32, #tpu.memory_space<vmem>>, vector<2x1xf32>,
    return
  }
}

</mosaic_0001>

<llo_original>
// kernel: comment_classifier_forward.1
$region0: #{comment_classifier_forward.1}
  #allocation0 [shape = 'u32[]', space=smem, size = 0x4, offset = 0x4, fixed_abs, tag = 'smem constant byte address 0x4 - core index']
  #allocation1 [shape = 'u32[144,128]{1,0:T(1,128)}', space=vmem, size = 0x12000, scoped, tag = 'internal scratch']
  %s0 = inlined_call_operand.vmem [shape: s32[16,1], index: 0, kind: input, shape index: {}]
  %s1 = inlined_call_operand.vmem [shape: s32[2,8], index: 1, kind: input, shape index: {}]
  %s2 = inlined_call_operand.vmem [shape: f32[2,3], index: 2, kind: input, shape index: {}]
  %s3 = inlined_call_operand.vmem [shape: f32[16,32], index: 3, kind: input, shape index: {}]
  %s4 = inlined_call_operand.vmem [shape: f32[64,32], index: 4, kind: input, shape index: {}]
  %s5 = inlined_call_operand.vmem [shape: f32[2,32,96], index: 5, kind: input, shape index: {}]
  %s6 = inlined_call_operand.vmem [shape: f32[2,32,32], index: 6, kind: input, shape index: {}]
  %s7 = inlined_call_operand.vmem [shape: f32[2,32,64], index: 7, kind: input, shape index: {}]
  %s8 = inlined_call_operand.vmem [shape: f32[2,64,32], index: 8, kind: input, shape index: {}]
  %s9 = inlined_call_operand.vmem [shape: f32[2,8,96], index: 9, kind: input, shape index: {}]
  %s10 = inlined_call_operand.vmem [shape: f32[32,32], index: 10, kind: input, shape index: {}]
  %s11 = inlined_call_operand.vmem [shape: f32[6,32], index: 11, kind: input, shape index: {}]
  %s12 = inlined_call_operand.vmem [shape: f32[2,1], index: 12, kind: output, shape index: {}]
  %s13 = sld [smem:[#allocation0]]
  $region58: #{comment_classifier_forward.1} parent=0
    _
  %s15 = ssub.s32 1, %s13
  %s16 = scalar_select 0, %s15, %s13
  // Predicated region
  $region2: #{comment_classifier_forward.1} parent=0 // pred_check
    _
  $region3: #{comment_classifier_forward.1} parent=0 // pred_check_branch
    %18 = sbr.rel (0) target = $region5
  $region4: #{comment_classifier_forward.1} parent=0 // pred_region
    _
  $region5: #{comment_classifier_forward.1} parent=0 // pred_fallthru
    _
  // Predicated region
  $region6: #{comment_classifier_forward.1} parent=0 // pred_check
    _
  $region7: #{comment_classifier_forward.1} parent=0 // pred_check_branch
    %20 = sbr.rel (0) target = $region9
  $region8: #{comment_classifier_forward.1} parent=0 // pred_region
    _
  $region9: #{comment_classifier_forward.1} parent=0 // pred_fallthru
    _
  // Predicated region
  $region10: #{comment_classifier_forward.1} parent=0 // pred_check
    _
  $region11: #{comment_classifier_forward.1} parent=0 // pred_check_branch
    %22 = sbr.rel (0) target = $region13
  $region12: #{comment_classifier_forward.1} parent=0 // pred_region
    _
  $region13: #{comment_classifier_forward.1} parent=0 // pred_fallthru
    _
  // Predicated region
  $region14: #{comment_classifier_forward.1} parent=0 // pred_check
    _
  $region15: #{comment_classifier_forward.1} parent=0 // pred_check_branch
    %24 = sbr.rel (0) target = $region17
  $region16: #{comment_classifier_forward.1} parent=0 // pred_region
    _
  $region17: #{comment_classifier_forward.1} parent=0 // pred_fallthru
    _
  // Predicated region
  $region18: #{comment_classifier_forward.1} parent=0 // pred_check
    _
  $region19: #{comment_classifier_forward.1} parent=0 // pred_check_branch
    %26 = sbr.rel (0) target = $region21
  $region20: #{comment_classifier_forward.1} parent=0 // pred_region
    _
  $region21: #{comment_classifier_forward.1} parent=0 // pred_fallthru
    _
  // Predicated region
  $region22: #{comment_classifier_forward.1} parent=0 // pred_check
    _
  $region23: #{comment_classifier_forward.1} parent=0 // pred_check_branch
    %28 = sbr.rel (0) target = $region25
  $region24: #{comment_classifier_forward.1} parent=0 // pred_region
    _
  $region25: #{comment_classifier_forward.1} parent=0 // pred_fallthru
    _
  // Predicated region
  $region26: #{comment_classifier_forward.1} parent=0 // pred_check
    _
  $region27: #{comment_classifier_forward.1} parent=0 // pred_check_branch
    %30 = sbr.rel (0) target = $region29
  $region28: #{comment_classifier_forward.1} parent=0 // pred_region
    _
  $region29: #{comment_classifier_forward.1} parent=0 // pred_fallthru
    _
  // Predicated region
  $region30: #{comment_classifier_forward.1} parent=0 // pred_check
    _
  $region31: #{comment_classifier_forward.1} parent=0 // pred_check_branch
    %32 = sbr.rel (0) target = $region33
  $region32: #{comment_classifier_forward.1} parent=0 // pred_region
    _
  $region33: #{comment_classifier_forward.1} parent=0 // pred_fallthru
    _
  // Predicated region
  $region34: #{comment_classifier_forward.1} parent=0 // pred_check
    _
  $region35: #{comment_classifier_forward.1} parent=0 // pred_check_branch
    %34 = sbr.rel (0) target = $region37
  $region36: #{comment_classifier_forward.1} parent=0 // pred_region
    _
  $region37: #{comment_classifier_forward.1} parent=0 // pred_fallthru
    _
  // Predicated region
  $region38: #{comment_classifier_forward.1} parent=0 // pred_check
    _
  $region39: #{comment_classifier_forward.1} parent=0 // pred_check_branch
    %36 = sbr.rel (0) target = $region41
  $region40: #{comment_classifier_forward.1} parent=0 // pred_region
    _
  $region41: #{comment_classifier_forward.1} parent=0 // pred_fallthru
    _
  // Predicated region
  $region42: #{comment_classifier_forward.1} parent=0 // pred_check
    _
  $region43: #{comment_classifier_forward.1} parent=0 // pred_check_branch
    %38 = sbr.rel (0) target = $region45
  $region44: #{comment_classifier_forward.1} parent=0 // pred_region
    _
  $region45: #{comment_classifier_forward.1} parent=0 // pred_fallthru
    _
  // Predicated region
  $region46: #{comment_classifier_forward.1} parent=0 // pred_check
    _
  $region47: #{comment_classifier_forward.1} parent=0 // pred_check_branch
    %40 = sbr.rel (0) target = $region49
  $region48: #{comment_classifier_forward.1} parent=0 // pred_region
    _
  $region49: #{comment_classifier_forward.1} parent=0 // pred_fallthru
    _
  %v41 = vld [vmem:[%s11] sm:$0x3f]
  %v42 = vld [vmem:[%s0] sm:$0xff]
  %v43 = vld [vmem:[%s0 + $0x8] sm:$0xff]
  %v44 = vlaneseq
  %v45 = vand.u32 %v44, 127
  %46 = vset.pattern.permute.xlu0 0
  %47 = vperm.xlu0 %46, %v42
  %v48 = vpop.permute.xlu0 %47
  %49 = vset.pattern.permute.xlu0 0
  %50 = vperm.xlu0 %49, %v43
  %v51 = vpop.permute.xlu0 %50
  %vm52 = vcmp.eq.s32.totalorder %v48, %v45
  %vm53 = vcmp.eq.s32.totalorder %v51, %v45
  %v54 = vsel %vm52, 1, 0
  %v55 = vsel %vm53, 1, 0
  %v56 = vcvt.s32.f32 %v54
  %v57 = vcvt.s32.f32 %v55
  %v58 = vld [vmem:[%s4] sm:$0xff]
  %v59 = vld [vmem:[%s4 + $0x8] sm:$0xff]
  %v60 = vld [vmem:[%s4 + $0x10] sm:$0xff]
  %v61 = vld [vmem:[%s4 + $0x18] sm:$0xff]
  %v62 = vld [vmem:[%s4 + $0x20] sm:$0xff]
  %v63 = vld [vmem:[%s4 + $0x28] sm:$0xff]
  %v64 = vld [vmem:[%s4 + $0x30] sm:$0xff]
  %v65 = vld [vmem:[%s4 + $0x38] sm:$0xff]
  %v66 = vld [vmem:[%s3] sm:$0xff]
  %v67 = vld [vmem:[%s3 + $0x8] sm:$0xff]
  %vm68 = vcmask 523264
  %v70 = vsel %vm68, %v56, 0
  %v73 = vsel %vm68, %v57, 0
  %75 = vmatprep.subr.mxu0 0.0
  %76 = vmatpush1.msra.mxu0 %v58
  %77 = vmatprep.subr.mxu0 0.0
  %78 = vmatpush1.msra.mxu0 %v59
  %79 = vmatprep.subr.mxu0 0.0
  %80 = vmatpush1.msra.mxu0 %v60
  %81 = vmatprep.subr.mxu0 0.0
  %82 = vmatpush1.msra.mxu0 %v61
  %83 = vmatprep.subr.mxu0 0.0
  %84 = vmatpush1.msra.mxu0 %v62
  %85 = vmatprep.subr.mxu0 0.0
  %86 = vmatpush1.msra.mxu0 %v63
  %87 = vmatprep.subr.mxu0 0.0
  %88 = vmatpush1.msra.mxu0 %v64
  %89 = vmatprep.subr.mxu0 0.0
  %90 = vmatpush1.msra.mxu0 %v65
  %91 = vmatprep.subr.mxu0 0.0
  %92 = vmatpush1.msra.mxu0 0.0
  %93 = vmatprep.subr.mxu0 0.0
  %94 = vmatpush1.msra.mxu0 0.0
  %95 = vmatprep.subr.mxu0 0.0
  %96 = vmatpush1.msra.mxu0 0.0
  %97 = vmatprep.subr.mxu0 0.0
  %98 = vmatpush1.msra.mxu0 0.0
  %99 = vmatprep.subr.mxu0 0.0
  %100 = vmatpush1.msra.mxu0 0.0
  %101 = vmatprep.subr.mxu0 0.0
  %102 = vmatpush1.msra.mxu0 0.0
  %103 = vmatprep.subr.mxu0 0.0
  %104 = vmatpush1.msra.mxu0 0.0
  %105 = vmatprep.subr.mxu0 0.0
  %106 = vmatpush1.msra.mxu0 0.0
  %107 = vmatprep.subr.mxu0 0.0
  %108 = vmatpush1.msra.mxu0 0.0
  %109 = vmatprep.subr.mxu0 0.0
  %110 = vmatpush1.msra.mxu0 0.0
  %111 = vmatprep.subr.mxu0 0.0
  %112 = vmatpush1.msra.mxu0 0.0
  %113 = vmatprep.subr.mxu0 0.0
  %114 = vmatpush1.msra.mxu0 0.0
  %115 = vmatprep.subr.mxu0 0.0
  %116 = vmatpush1.msra.mxu0 0.0
  %117 = vmatprep.subr.mxu0 0.0
  %118 = vmatpush1.msra.mxu0 0.0
  %119 = vmatprep.subr.mxu0 0.0
  %120 = vmatpush1.msra.mxu0 0.0
  %121 = vmatprep.subr.mxu0 0.0
  %122 = vmatpush1.msra.mxu0 0.0
  %123 = vmatprep.subr.mxu0 0.0
  %124 = vmatpush1.msra.mxu0 0.0
  %125 = vmatprep.subr.mxu0 0.0
  %126 = vmatpush1.msra.mxu0 0.0
  %127 = vmatprep.subr.mxu0 0.0
  %128 = vmatpush1.msra.mxu0 0.0
  %129 = vmatprep.subr.mxu0 0.0
  %130 = vmatpush1.msra.mxu0 0.0
  %131 = vmatprep.subr.mxu0 0.0
  %132 = vmatpush1.msra.mxu0 0.0
  %133 = vmatprep.subr.mxu0 0.0
  %134 = vmatpush1.msra.mxu0 0.0
  %135 = vmatprep.subr.mxu0 0.0
  %136 = vmatpush1.msra.mxu0 0.0
  %137 = vmatprep.subr.mxu0 0.0
  %138 = vmatpush1.msra.mxu0 0.0
  %139 = vmatprep.mubr.f32.mxu0 0.0
  %140 = vmatmul.mubr.f32.gmra.mrb[0].mxu0 %v70
  %v141 = vpop.f32.mrb[0].mxu0
  %v142 = vadd.f32 %v66, %v141
  %v143 = vpop.f32.mrb[0].mxu0
  %144 = vmatprep.mubr.f32.mxu0 0.0
  %145 = vmatmul.mubr.f32.gmra.mrb[0].mxu0 %v73
  %v146 = vpop.f32.mrb[0].mxu0
  %v147 = vadd.f32 %v67, %v146
  %v148 = vpop.f32.mrb[0].mxu0
  %149 = vdwg.mxu0
  %vm150 = vcmask 261120
  %v151 = vsel %vm150, %v142, 0.0
  %152 = vadd.xlane.f32.xlu0 %v151
  %v153 = vpop.xlane.xlu0 %152
  %v154 = vsel %vm150, %v147, 0.0
  %155 = vadd.xlane.f32.xlu0 %v154
  %v156 = vpop.xlane.xlu0 %155
  %v157 = vrcp.pop 32.0
  %v158 = vmul.f32 %v153, %v157
  %v159 = vmul.f32 %v156, %v157
  %v160 = vsub.f32 %v142, %v158
  %v161 = vsub.f32 %v147, %v159
  %v162 = vmul.f32 %v160, %v160
  %v163 = vmul.f32 %v161, %v161
  %v164 = vsel %vm150, %v162, 0.0
  %165 = vadd.xlane.f32.xlu0 %v164
  %v166 = vpop.xlane.xlu0 %165
  %v167 = vsel %vm150, %v163, 0.0
  %168 = vadd.xlane.f32.xlu0 %v167
  %v169 = vpop.xlane.xlu0 %168
  %v170 = vmul.f32 %v166, %v157
  %v171 = vmul.f32 %v169, %v157
  %v172 = vadd.f32 %v170, 1e-05
  %v173 = vadd.f32 %v171, 1e-05
  %v174 = vrsqrt.pop %v172
  %v175 = vrsqrt.pop %v173
  %v176 = vmul.f32 %v160, %v174
  %v177 = vmul.f32 %v161, %v175
  %v178 = vlaneseq
  %v179 = vshrl.u32 %v178, 7
  %v180 = vsub.s32 0, %v179
  %v181 = vrot.slane %v41, %v180
  %v182 = vmul.f32 %v176, %v181
  %v183 = vmul.f32 %v177, %v181
  %v184 = vlaneseq
  %v185 = vshrl.u32 %v184, 7
  %v186 = vsub.s32 1, %v185
  %v187 = vrot.slane %v41, %v186
  %v188 = vadd.f32 %v182, %v187
  %v189 = vadd.f32 %v183, %v187
  %v190 = vld [vmem:[%s1] sm:$0x3]
  %v191 = vcvt.s32.f32 %v190
  %v192 = vsub.f32 1.0, %v191
  %v193 = vmul.f32 %v192, -1e+09
  %v196 = vunpack.c.l.s4 1966171168
  %v197 = vunpack.c.0.s8 %v196
  %v198 = vlaneseq
  %v199 = vshrl.u32 %v198, 7
  %v200 = vsub.s32 %v197, %v199
  %v201 = vrot.slane %v193, %v200
  %v202 = vcombine.high %v201, %v201
  %v204 = vunpack.c.l.s4 1966171168
  %v205 = vunpack.c.0.s8 %v204
  %v206 = vlaneseq
  %v207 = vshrl.u32 %v206, 7
  %v208 = vsub.s32 %v205, %v207
  %v209 = vrot.slane %v201, %v208
  %v211 = vunpack.c.l.s4 1966171168
  %v212 = vunpack.c.0.s8 %v211
  %v213 = vlaneseq
  %v214 = vshrl.u32 %v213, 7
  %v215 = vsub.s32 %v212, %v214
  %v216 = vrot.slane %v202, %v215
  %v217 = vlaneseq
  %v218 = vshrl.u32 %v217, 7
  %v219 = vsub.s32 0, %v218
  %v220 = vrot.slane %v209, %v219
  %v221 = vlaneseq
  %v222 = vshrl.u32 %v221, 7
  %v223 = vsub.s32 0, %v222
  %v224 = vrot.slane %v216, %v223
  %v226 = vunpack.c.l.s4 1966171168
  %v227 = vunpack.c.0.s8 %v226
  %v228 = vlaneseq
  %v229 = vshrl.u32 %v228, 7
  %v230 = vsub.s32 %v227, %v229
  %v231 = vrot.slane %v220, %v230
  %v232 = vcombine.high %v231, %v231
  %v234 = vunpack.c.l.s4 1966171168
  %v235 = vunpack.c.0.s8 %v234
  %v236 = vlaneseq
  %v237 = vshrl.u32 %v236, 7
  %v238 = vsub.s32 %v235, %v237
  %v239 = vrot.slane %v231, %v238
  %v241 = vunpack.c.l.s4 1966171168
  %v242 = vunpack.c.0.s8 %v241
  %v243 = vlaneseq
  %v244 = vshrl.u32 %v243, 7
  %v245 = vsub.s32 %v242, %v244
  %v246 = vrot.slane %v232, %v245
  %v247 = vcombine.high %v239, %v239
  %v248 = vcombine.high %v246, %v246
  %v250 = vunpack.c.l.s4 1966171168
  %v251 = vunpack.c.0.s8 %v250
  %v252 = vlaneseq
  %v253 = vshrl.u32 %v252, 7
  %v254 = vsub.s32 %v251, %v253
  %v255 = vrot.slane %v224, %v254
  %v256 = vcombine.high %v255, %v255
  %v258 = vunpack.c.l.s4 1966171168
  %v259 = vunpack.c.0.s8 %v258
  %v260 = vlaneseq
  %v261 = vshrl.u32 %v260, 7
  %v262 = vsub.s32 %v259, %v261
  %v263 = vrot.slane %v255, %v262
  %v265 = vunpack.c.l.s4 1966171168
  %v266 = vunpack.c.0.s8 %v265
  %v267 = vlaneseq
  %v268 = vshrl.u32 %v267, 7
  %v269 = vsub.s32 %v266, %v268
  %v270 = vrot.slane %v256, %v269
  %v271 = vcombine.high %v263, %v263
  %v272 = vcombine.high %v270, %v270
  %v273 = vld [vmem:[%s9] sm:$0xff]
  %v274 = vld [vmem:[%s5] sm:$0xff]
  %v275 = vld [vmem:[%s5 + $0x8] sm:$0xff]
  %v276 = vld [vmem:[%s5 + $0x10] sm:$0xff]
  %v277 = vld [vmem:[%s5 + $0x18] sm:$0xff]
  %v278 = vlaneseq
  %v279 = vshrl.u32 %v278, 7
  %v280 = vsub.s32 0, %v279
  %v281 = vrot.slane %v273, %v280
  %v283 = vsel %vm150, %v188, 0
  %v286 = vsel %vm150, %v189, 0
  %288 = vmatprep.subr.mxu0 0.0
  %289 = vmatpush1.msra.mxu0 %v274
  %290 = vmatprep.subr.mxu0 0.0
  %291 = vmatpush1.msra.mxu0 %v275
  %292 = vmatprep.subr.mxu0 0.0
  %293 = vmatpush1.msra.mxu0 %v276
  %294 = vmatprep.subr.mxu0 0.0
  %295 = vmatpush1.msra.mxu0 %v277
  %296 = vmatprep.subr.mxu0 0.0
  %297 = vmatpush1.msra.mxu0 0.0
  %298 = vmatprep.subr.mxu0 0.0
  %299 = vmatpush1.msra.mxu0 0.0
  %300 = vmatprep.subr.mxu0 0.0
  %301 = vmatpush1.msra.mxu0 0.0
  %302 = vmatprep.subr.mxu0 0.0
  %303 = vmatpush1.msra.mxu0 0.0
  %304 = vmatprep.subr.mxu0 0.0
  %305 = vmatpush1.msra.mxu0 0.0
  %306 = vmatprep.subr.mxu0 0.0
  %307 = vmatpush1.msra.mxu0 0.0
  %308 = vmatprep.subr.mxu0 0.0
  %309 = vmatpush1.msra.mxu0 0.0
  %310 = vmatprep.subr.mxu0 0.0
  %311 = vmatpush1.msra.mxu0 0.0
  %312 = vmatprep.subr.mxu0 0.0
  %313 = vmatpush1.msra.mxu0 0.0
  %314 = vmatprep.subr.mxu0 0.0
  %315 = vmatpush1.msra.mxu0 0.0
  %316 = vmatprep.subr.mxu0 0.0
  %317 = vmatpush1.msra.mxu0 0.0
  %318 = vmatprep.subr.mxu0 0.0
  %319 = vmatpush1.msra.mxu0 0.0
  %320 = vmatprep.subr.mxu0 0.0
  %321 = vmatpush1.msra.mxu0 0.0
  %322 = vmatprep.subr.mxu0 0.0
  %323 = vmatpush1.msra.mxu0 0.0
  %324 = vmatprep.subr.mxu0 0.0
  %325 = vmatpush1.msra.mxu0 0.0
  %326 = vmatprep.subr.mxu0 0.0
  %327 = vmatpush1.msra.mxu0 0.0
  %328 = vmatprep.subr.mxu0 0.0
  %329 = vmatpush1.msra.mxu0 0.0
  %330 = vmatprep.subr.mxu0 0.0
  %331 = vmatpush1.msra.mxu0 0.0
  %332 = vmatprep.subr.mxu0 0.0
  %333 = vmatpush1.msra.mxu0 0.0
  %334 = vmatprep.subr.mxu0 0.0
  %335 = vmatpush1.msra.mxu0 0.0
  %336 = vmatprep.subr.mxu0 0.0
  %337 = vmatpush1.msra.mxu0 0.0
  %338 = vmatprep.subr.mxu0 0.0
  %339 = vmatpush1.msra.mxu0 0.0
  %340 = vmatprep.subr.mxu0 0.0
  %341 = vmatpush1.msra.mxu0 0.0
  %342 = vmatprep.subr.mxu0 0.0
  %343 = vmatpush1.msra.mxu0 0.0
  %344 = vmatprep.subr.mxu0 0.0
  %345 = vmatpush1.msra.mxu0 0.0
  %346 = vmatprep.subr.mxu0 0.0
  %347 = vmatpush1.msra.mxu0 0.0
  %348 = vmatprep.subr.mxu0 0.0
  %349 = vmatpush1.msra.mxu0 0.0
  %350 = vmatprep.subr.mxu0 0.0
  %351 = vmatpush1.msra.mxu0 0.0
  %352 = vmatprep.mubr.f32.mxu0 0.0
  %353 = vmatmul.mubr.f32.gmra.mrb[0].mxu0 %v283
  %v354 = vpop.f32.mrb[0].mxu0
  %v355 = vadd.f32 %v281, %v354
  %v356 = vpop.f32.mrb[0].mxu0
  %357 = vmatprep.mubr.f32.mxu0 0.0
  %358 = vmatmul.mubr.f32.gmra.mrb[0].mxu0 %v286
  %v359 = vpop.f32.mrb[0].mxu0
  %v360 = vadd.f32 %v281, %v359
  %v361 = vpop.f32.mrb[0].mxu0
  %362 = vdwg.mxu0
  %365 = vrot.lane.b32.xlu0 %v355, 120
  %v366 = vpop.permute.xlu0 %365
  %367 = vrot.lane.b32.xlu0 %v360, 120
  %v368 = vpop.permute.xlu0 %367
  %371 = vrot.lane.b32.xlu0 %v355, 112
  %v372 = vpop.permute.xlu0 %371
  %373 = vrot.lane.b32.xlu0 %v360, 112
  %v374 = vpop.permute.xlu0 %373
  %377 = vrot.lane.b32.xlu0 %v355, 104
  %v378 = vpop.permute.xlu0 %377
  %379 = vrot.lane.b32.xlu0 %v360, 104
  %v380 = vpop.permute.xlu0 %379
  %v383 = vcombine.low %v355, %v372
  %v384 = vcombine.high %v355, %v372
  %v386 = vunpack.c.l.s4 1983009808
  %v387 = vunpack.c.0.s8 %v386
  %v388 = vlaneseq
  %v389 = vshrl.u32 %v388, 7
  %v390 = vsub.s32 %v387, %v389
  %v391 = vrot.slane %v383, %v390
  %v393 = vunpack.c.l.s4 1983009808
  %v394 = vunpack.c.0.s8 %v393
  %v395 = vlaneseq
  %v396 = vshrl.u32 %v395, 7
  %v397 = vsub.s32 %v394, %v396
  %v398 = vrot.slane %v384, %v397
  %v399 = vcombine.low %v366, %v378
  %v400 = vcombine.high %v366, %v378
  %v402 = vunpack.c.l.s4 1983009808
  %v403 = vunpack.c.0.s8 %v402
  %v404 = vlaneseq
  %v405 = vshrl.u32 %v404, 7
  %v406 = vsub.s32 %v403, %v405
  %v407 = vrot.slane %v399, %v406
  %v409 = vunpack.c.l.s4 1983009808
  %v410 = vunpack.c.0.s8 %v409
  %v411 = vlaneseq
  %v412 = vshrl.u32 %v411, 7
  %v413 = vsub.s32 %v410, %v412
  %v414 = vrot.slane %v400, %v413
  %v415 = vcombine.low %v391, %v407
  %v416 = vcombine.high %v391, %v407
  %v418 = vunpack.c.l.s4 1934713408
  %v419 = vunpack.c.0.s8 %v418
  %v420 = vlaneseq
  %v421 = vshrl.u32 %v420, 7
  %v422 = vsub.s32 %v419, %v421
  %v423 = vrot.slane %v415, %v422
  %v425 = vunpack.c.l.s4 1934713408
  %v426 = vunpack.c.0.s8 %v425
  %v427 = vlaneseq
  %v428 = vshrl.u32 %v427, 7
  %v429 = vsub.s32 %v426, %v428
  %v430 = vrot.slane %v416, %v429
  %v431 = vcombine.low %v398, %v414
  %v432 = vcombine.high %v398, %v414
  %v434 = vunpack.c.l.s4 1934713408
  %v435 = vunpack.c.0.s8 %v434
  %v436 = vlaneseq
  %v437 = vshrl.u32 %v436, 7
  %v438 = vsub.s32 %v435, %v437
  %v439 = vrot.slane %v431, %v438
  %v441 = vunpack.c.l.s4 1934713408
  %v442 = vunpack.c.0.s8 %v441
  %v443 = vlaneseq
  %v444 = vshrl.u32 %v443, 7
  %v445 = vsub.s32 %v442, %v444
  %v446 = vrot.slane %v432, %v445
  %v447 = vcombine.high %v423, 0.0
  %v448 = vcombine.high %v430, 0.0
  %v449 = vcombine.high %v439, 0.0
  %v450 = vcombine.high %v446, 0.0
  %v451 = vcombine.low %v360, %v374
  %v452 = vcombine.high %v360, %v374
  %v454 = vunpack.c.l.s4 1983009808
  %v455 = vunpack.c.0.s8 %v454
  %v456 = vlaneseq
  %v457 = vshrl.u32 %v456, 7
  %v458 = vsub.s32 %v455, %v457
  %v459 = vrot.slane %v451, %v458
  %v461 = vunpack.c.l.s4 1983009808
  %v462 = vunpack.c.0.s8 %v461
  %v463 = vlaneseq
  %v464 = vshrl.u32 %v463, 7
  %v465 = vsub.s32 %v462, %v464
  %v466 = vrot.slane %v452, %v465
  %v467 = vcombine.low %v368, %v380
  %v468 = vcombine.high %v368, %v380
  %v470 = vunpack.c.l.s4 1983009808
  %v471 = vunpack.c.0.s8 %v470
  %v472 = vlaneseq
  %v473 = vshrl.u32 %v472, 7
  %v474 = vsub.s32 %v471, %v473
  %v475 = vrot.slane %v467, %v474
  %v477 = vunpack.c.l.s4 1983009808
  %v478 = vunpack.c.0.s8 %v477
  %v479 = vlaneseq
  %v480 = vshrl.u32 %v479, 7
  %v481 = vsub.s32 %v478, %v480
  %v482 = vrot.slane %v468, %v481
  %v483 = vcombine.low %v459, %v475
  %v484 = vcombine.high %v459, %v475
  %v486 = vunpack.c.l.s4 1934713408
  %v487 = vunpack.c.0.s8 %v486
  %v488 = vlaneseq
  %v489 = vshrl.u32 %v488, 7
  %v490 = vsub.s32 %v487, %v489
  %v491 = vrot.slane %v483, %v490
  %v493 = vunpack.c.l.s4 1934713408
  %v494 = vunpack.c.0.s8 %v493
  %v495 = vlaneseq
  %v496 = vshrl.u32 %v495, 7
  %v497 = vsub.s32 %v494, %v496
  %v498 = vrot.slane %v484, %v497
  %v499 = vcombine.low %v466, %v482
  %v500 = vcombine.high %v466, %v482
  %v502 = vunpack.c.l.s4 1934713408
  %v503 = vunpack.c.0.s8 %v502
  %v504 = vlaneseq
  %v505 = vshrl.u32 %v504, 7
  %v506 = vsub.s32 %v503, %v505
  %v507 = vrot.slane %v499, %v506
  %v509 = vunpack.c.l.s4 1934713408
  %v510 = vunpack.c.0.s8 %v509
  %v511 = vlaneseq
  %v512 = vshrl.u32 %v511, 7
  %v513 = vsub.s32 %v510, %v512
  %v514 = vrot.slane %v500, %v513
  %v515 = vcombine.high %v491, 0.0
  %v516 = vcombine.high %v498, 0.0
  %v517 = vcombine.high %v507, 0.0
  %v518 = vcombine.high %v514, 0.0
  %v519 = vcombine.low %v423, %v430
  %v521 = vunpack.c.l.s4 1983009808
  %v522 = vunpack.c.0.s8 %v521
  %v523 = vlaneseq
  %v524 = vshrl.u32 %v523, 7
  %v525 = vsub.s32 %v522, %v524
  %v526 = vrot.slane %v519, %v525
  %v527 = vcombine.low %v447, %v448
  %v529 = vunpack.c.l.s4 1983009808
  %v530 = vunpack.c.0.s8 %v529
  %v531 = vlaneseq
  %v532 = vshrl.u32 %v531, 7
  %v533 = vsub.s32 %v530, %v532
  %v534 = vrot.slane %v527, %v533
  %v535 = vcombine.low %v439, %v446
  %v537 = vunpack.c.l.s4 1983009808
  %v538 = vunpack.c.0.s8 %v537
  %v539 = vlaneseq
  %v540 = vshrl.u32 %v539, 7
  %v541 = vsub.s32 %v538, %v540
  %v542 = vrot.slane %v535, %v541
  %v543 = vcombine.low %v449, %v450
  %v545 = vunpack.c.l.s4 1983009808
  %v546 = vunpack.c.0.s8 %v545
  %v547 = vlaneseq
  %v548 = vshrl.u32 %v547, 7
  %v549 = vsub.s32 %v546, %v548
  %v550 = vrot.slane %v543, %v549
  %v551 = vcombine.low %v526, %v534
  %v552 = vcombine.high %v526, %v534
  %v554 = vunpack.c.l.s4 1934713408
  %v555 = vunpack.c.0.s8 %v554
  %v556 = vlaneseq
  %v557 = vshrl.u32 %v556, 7
  %v558 = vsub.s32 %v555, %v557
  %v559 = vrot.slane %v551, %v558
  %v561 = vunpack.c.l.s4 1934713408
  %v562 = vunpack.c.0.s8 %v561
  %v563 = vlaneseq
  %v564 = vshrl.u32 %v563, 7
  %v565 = vsub.s32 %v562, %v564
  %v566 = vrot.slane %v552, %v565
  %v567 = vcombine.low %v542, %v550
  %v568 = vcombine.high %v542, %v550
  %v570 = vunpack.c.l.s4 1934713408
  %v571 = vunpack.c.0.s8 %v570
  %v572 = vlaneseq
  %v573 = vshrl.u32 %v572, 7
  %v574 = vsub.s32 %v571, %v573
  %v575 = vrot.slane %v567, %v574
  %v577 = vunpack.c.l.s4 1934713408
  %v578 = vunpack.c.0.s8 %v577
  %v579 = vlaneseq
  %v580 = vshrl.u32 %v579, 7
  %v581 = vsub.s32 %v578, %v580
  %v582 = vrot.slane %v568, %v581
  %v583 = vcombine.low %v559, %v575
  %v584 = vcombine.high %v559, %v575
  %v585 = vcombine.low %v566, %v582
  %v586 = vcombine.high %v566, %v582
  %v587 = vcombine.low %v491, %v498
  %v589 = vunpack.c.l.s4 1983009808
  %v590 = vunpack.c.0.s8 %v589
  %v591 = vlaneseq
  %v592 = vshrl.u32 %v591, 7
  %v593 = vsub.s32 %v590, %v592
  %v594 = vrot.slane %v587, %v593
  %v595 = vcombine.low %v515, %v516
  %v597 = vunpack.c.l.s4 1983009808
  %v598 = vunpack.c.0.s8 %v597
  %v599 = vlaneseq
  %v600 = vshrl.u32 %v599, 7
  %v601 = vsub.s32 %v598, %v600
  %v602 = vrot.slane %v595, %v601
  %v603 = vcombine.low %v507, %v514
  %v605 = vunpack.c.l.s4 1983009808
  %v606 = vunpack.c.0.s8 %v605
  %v607 = vlaneseq
  %v608 = vshrl.u32 %v607, 7
  %v609 = vsub.s32 %v606, %v608
  %v610 = vrot.slane %v603, %v609
  %v611 = vcombine.low %v517, %v518
  %v613 = vunpack.c.l.s4 1983009808
  %v614 = vunpack.c.0.s8 %v613
  %v615 = vlaneseq
  %v616 = vshrl.u32 %v615, 7
  %v617 = vsub.s32 %v614, %v616
  %v618 = vrot.slane %v611, %v617
  %v619 = vcombine.low %v594, %v602
  %v620 = vcombine.high %v594, %v602
  %v622 = vunpack.c.l.s4 1934713408
  %v623 = vunpack.c.0.s8 %v622
  %v624 = vlaneseq
  %v625 = vshrl.u32 %v624, 7
  %v626 = vsub.s32 %v623, %v625
  %v627 = vrot.slane %v619, %v626
  %v629 = vunpack.c.l.s4 1934713408
  %v630 = vunpack.c.0.s8 %v629
  %v631 = vlaneseq
  %v632 = vshrl.u32 %v631, 7
  %v633 = vsub.s32 %v630, %v632
  %v634 = vrot.slane %v620, %v633
  %v635 = vcombine.low %v610, %v618
  %v636 = vcombine.high %v610, %v618
  %v638 = vunpack.c.l.s4 1934713408
  %v639 = vunpack.c.0.s8 %v638
  %v640 = vlaneseq
  %v641 = vshrl.u32 %v640, 7
  %v642 = vsub.s32 %v639, %v641
  %v643 = vrot.slane %v635, %v642
  %v645 = vunpack.c.l.s4 1934713408
  %v646 = vunpack.c.0.s8 %v645
  %v647 = vlaneseq
  %v648 = vshrl.u32 %v647, 7
  %v649 = vsub.s32 %v646, %v648
  %v650 = vrot.slane %v636, %v649
  %v651 = vcombine.low %v627, %v643
  %v652 = vcombine.high %v627, %v643
  %v653 = vcombine.low %v634, %v650
  %v654 = vcombine.high %v634, %v650
  %655 = vrot.lane.b32.xlu0 %v355, 96
  %v656 = vpop.permute.xlu0 %655
  %657 = vrot.lane.b32.xlu0 %v360, 96
  %v658 = vpop.permute.xlu0 %657
  %659 = vrot.lane.b32.xlu0 %v366, 96
  %v660 = vpop.permute.xlu0 %659
  %661 = vrot.lane.b32.xlu0 %v368, 96
  %v662 = vpop.permute.xlu0 %661
  %663 = vrot.lane.b32.xlu0 %v372, 96
  %v664 = vpop.permute.xlu0 %663
  %665 = vrot.lane.b32.xlu0 %v374, 96
  %v666 = vpop.permute.xlu0 %665
  %667 = vrot.lane.b32.xlu0 %v378, 96
  %v668 = vpop.permute.xlu0 %667
  %669 = vrot.lane.b32.xlu0 %v380, 96
  %v670 = vpop.permute.xlu0 %669
  %v679 = vcombine.low %v656, %v664
  %v680 = vcombine.high %v656, %v664
  %v682 = vunpack.c.l.s4 1983009808
  %v683 = vunpack.c.0.s8 %v682
  %v684 = vlaneseq
  %v685 = vshrl.u32 %v684, 7
  %v686 = vsub.s32 %v683, %v685
  %v687 = vrot.slane %v679, %v686
  %v689 = vunpack.c.l.s4 1983009808
  %v690 = vunpack.c.0.s8 %v689
  %v691 = vlaneseq
  %v692 = vshrl.u32 %v691, 7
  %v693 = vsub.s32 %v690, %v692
  %v694 = vrot.slane %v680, %v693
  %v695 = vcombine.low %v660, %v668
  %v696 = vcombine.high %v660, %v668
  %v698 = vunpack.c.l.s4 1983009808
  %v699 = vunpack.c.0.s8 %v698
  %v700 = vlaneseq
  %v701 = vshrl.u32 %v700, 7
  %v702 = vsub.s32 %v699, %v701
  %v703 = vrot.slane %v695, %v702
  %v705 = vunpack.c.l.s4 1983009808
  %v706 = vunpack.c.0.s8 %v705
  %v707 = vlaneseq
  %v708 = vshrl.u32 %v707, 7
  %v709 = vsub.s32 %v706, %v708
  %v710 = vrot.slane %v696, %v709
  %v711 = vcombine.low %v687, %v703
  %v712 = vcombine.high %v687, %v703
  %v714 = vunpack.c.l.s4 1934713408
  %v715 = vunpack.c.0.s8 %v714
  %v716 = vlaneseq
  %v717 = vshrl.u32 %v716, 7
  %v718 = vsub.s32 %v715, %v717
  %v719 = vrot.slane %v711, %v718
  %v721 = vunpack.c.l.s4 1934713408
  %v722 = vunpack.c.0.s8 %v721
  %v723 = vlaneseq
  %v724 = vshrl.u32 %v723, 7
  %v725 = vsub.s32 %v722, %v724
  %v726 = vrot.slane %v712, %v725
  %v727 = vcombine.low %v694, %v710
  %v728 = vcombine.high %v694, %v710
  %v730 = vunpack.c.l.s4 1934713408
  %v731 = vunpack.c.0.s8 %v730
  %v732 = vlaneseq
  %v733 = vshrl.u32 %v732, 7
  %v734 = vsub.s32 %v731, %v733
  %v735 = vrot.slane %v727, %v734
  %v737 = vunpack.c.l.s4 1934713408
  %v738 = vunpack.c.0.s8 %v737
  %v739 = vlaneseq
  %v740 = vshrl.u32 %v739, 7
  %v741 = vsub.s32 %v738, %v740
  %v742 = vrot.slane %v728, %v741
  %v743 = vcombine.high %v719, 0.0
  %v744 = vcombine.high %v726, 0.0
  %v745 = vcombine.high %v735, 0.0
  %v746 = vcombine.high %v742, 0.0
  %v747 = vcombine.low %v658, %v666
  %v748 = vcombine.high %v658, %v666
  %v750 = vunpack.c.l.s4 1983009808
  %v751 = vunpack.c.0.s8 %v750
  %v752 = vlaneseq
  %v753 = vshrl.u32 %v752, 7
  %v754 = vsub.s32 %v751, %v753
  %v755 = vrot.slane %v747, %v754
  %v757 = vunpack.c.l.s4 1983009808
  %v758 = vunpack.c.0.s8 %v757
  %v759 = vlaneseq
  %v760 = vshrl.u32 %v759, 7
  %v761 = vsub.s32 %v758, %v760
  %v762 = vrot.slane %v748, %v761
  %v763 = vcombine.low %v662, %v670
  %v764 = vcombine.high %v662, %v670
  %v766 = vunpack.c.l.s4 1983009808
  %v767 = vunpack.c.0.s8 %v766
  %v768 = vlaneseq
  %v769 = vshrl.u32 %v768, 7
  %v770 = vsub.s32 %v767, %v769
  %v771 = vrot.slane %v763, %v770
  %v773 = vunpack.c.l.s4 1983009808
  %v774 = vunpack.c.0.s8 %v773
  %v775 = vlaneseq
  %v776 = vshrl.u32 %v775, 7
  %v777 = vsub.s32 %v774, %v776
  %v778 = vrot.slane %v764, %v777
  %v779 = vcombine.low %v755, %v771
  %v780 = vcombine.high %v755, %v771
  %v782 = vunpack.c.l.s4 1934713408
  %v783 = vunpack.c.0.s8 %v782
  %v784 = vlaneseq
  %v785 = vshrl.u32 %v784, 7
  %v786 = vsub.s32 %v783, %v785
  %v787 = vrot.slane %v779, %v786
  %v789 = vunpack.c.l.s4 1934713408
  %v790 = vunpack.c.0.s8 %v789
  %v791 = vlaneseq
  %v792 = vshrl.u32 %v791, 7
  %v793 = vsub.s32 %v790, %v792
  %v794 = vrot.slane %v780, %v793
  %v795 = vcombine.low %v762, %v778
  %v796 = vcombine.high %v762, %v778
  %v798 = vunpack.c.l.s4 1934713408
  %v799 = vunpack.c.0.s8 %v798
  %v800 = vlaneseq
  %v801 = vshrl.u32 %v800, 7
  %v802 = vsub.s32 %v799, %v801
  %v803 = vrot.slane %v795, %v802
  %v805 = vunpack.c.l.s4 1934713408
  %v806 = vunpack.c.0.s8 %v805
  %v807 = vlaneseq
  %v808 = vshrl.u32 %v807, 7
  %v809 = vsub.s32 %v806, %v808
  %v810 = vrot.slane %v796, %v809
  %v811 = vcombine.high %v787, 0.0
  %v812 = vcombine.high %v794, 0.0
  %v813 = vcombine.high %v803, 0.0
  %v814 = vcombine.high %v810, 0.0
  %v815 = vcombine.low %v719, %v726
  %v817 = vunpack.c.l.s4 1983009808
  %v818 = vunpack.c.0.s8 %v817
  %v819 = vlaneseq
  %v820 = vshrl.u32 %v819, 7
  %v821 = vsub.s32 %v818, %v820
  %v822 = vrot.slane %v815, %v821
  %v823 = vcombine.low %v743, %v744
  %v825 = vunpack.c.l.s4 1983009808
  %v826 = vunpack.c.0.s8 %v825
  %v827 = vlaneseq
  %v828 = vshrl.u32 %v827, 7
  %v829 = vsub.s32 %v826, %v828
  %v830 = vrot.slane %v823, %v829
  %v831 = vcombine.low %v735, %v742
  %v833 = vunpack.c.l.s4 1983009808
  %v834 = vunpack.c.0.s8 %v833
  %v835 = vlaneseq
  %v836 = vshrl.u32 %v835, 7
  %v837 = vsub.s32 %v834, %v836
  %v838 = vrot.slane %v831, %v837
  %v839 = vcombine.low %v745, %v746
  %v841 = vunpack.c.l.s4 1983009808
  %v842 = vunpack.c.0.s8 %v841
  %v843 = vlaneseq
  %v844 = vshrl.u32 %v843, 7
  %v845 = vsub.s32 %v842, %v844
  %v846 = vrot.slane %v839, %v845
  %v847 = vcombine.low %v822, %v830
  %v848 = vcombine.high %v822, %v830
  %v850 = vunpack.c.l.s4 1934713408
  %v851 = vunpack.c.0.s8 %v850
  %v852 = vlaneseq
  %v853 = vshrl.u32 %v852, 7
  %v854 = vsub.s32 %v851, %v853
  %v855 = vrot.slane %v847, %v854
  %v857 = vunpack.c.l.s4 1934713408
  %v858 = vunpack.c.0.s8 %v857
  %v859 = vlaneseq
  %v860 = vshrl.u32 %v859, 7
  %v861 = vsub.s32 %v858, %v860
  %v862 = vrot.slane %v848, %v861
  %v863 = vcombine.low %v838, %v846
  %v864 = vcombine.high %v838, %v846
  %v866 = vunpack.c.l.s4 1934713408
  %v867 = vunpack.c.0.s8 %v866
  %v868 = vlaneseq
  %v869 = vshrl.u32 %v868, 7
  %v870 = vsub.s32 %v867, %v869
  %v871 = vrot.slane %v863, %v870
  %v873 = vunpack.c.l.s4 1934713408
  %v874 = vunpack.c.0.s8 %v873
  %v875 = vlaneseq
  %v876 = vshrl.u32 %v875, 7
  %v877 = vsub.s32 %v874, %v876
  %v878 = vrot.slane %v864, %v877
  %v879 = vcombine.low %v855, %v871
  %v880 = vcombine.high %v855, %v871
  %v881 = vcombine.low %v862, %v878
  %v882 = vcombine.high %v862, %v878
  %v883 = vcombine.low %v787, %v794
  %v885 = vunpack.c.l.s4 1983009808
  %v886 = vunpack.c.0.s8 %v885
  %v887 = vlaneseq
  %v888 = vshrl.u32 %v887, 7
  %v889 = vsub.s32 %v886, %v888
  %v890 = vrot.slane %v883, %v889
  %v891 = vcombine.low %v811, %v812
  %v893 = vunpack.c.l.s4 1983009808
  %v894 = vunpack.c.0.s8 %v893
  %v895 = vlaneseq
  %v896 = vshrl.u32 %v895, 7
  %v897 = vsub.s32 %v894, %v896
  %v898 = vrot.slane %v891, %v897
  %v899 = vcombine.low %v803, %v810
  %v901 = vunpack.c.l.s4 1983009808
  %v902 = vunpack.c.0.s8 %v901
  %v903 = vlaneseq
  %v904 = vshrl.u32 %v903, 7
  %v905 = vsub.s32 %v902, %v904
  %v906 = vrot.slane %v899, %v905
  %v907 = vcombine.low %v813, %v814
  %v909 = vunpack.c.l.s4 1983009808
  %v910 = vunpack.c.0.s8 %v909
  %v911 = vlaneseq
  %v912 = vshrl.u32 %v911, 7
  %v913 = vsub.s32 %v910, %v912
  %v914 = vrot.slane %v907, %v913
  %v915 = vcombine.low %v890, %v898
  %v916 = vcombine.high %v890, %v898
  %v918 = vunpack.c.l.s4 1934713408
  %v919 = vunpack.c.0.s8 %v918
  %v920 = vlaneseq
  %v921 = vshrl.u32 %v920, 7
  %v922 = vsub.s32 %v919, %v921
  %v923 = vrot.slane %v915, %v922
  %v925 = vunpack.c.l.s4 1934713408
  %v926 = vunpack.c.0.s8 %v925
  %v927 = vlaneseq
  %v928 = vshrl.u32 %v927, 7
  %v929 = vsub.s32 %v926, %v928
  %v930 = vrot.slane %v916, %v929
  %v931 = vcombine.low %v906, %v914
  %v932 = vcombine.high %v906, %v914
  %v934 = vunpack.c.l.s4 1934713408
  %v935 = vunpack.c.0.s8 %v934
  %v936 = vlaneseq
  %v937 = vshrl.u32 %v936, 7
  %v938 = vsub.s32 %v935, %v937
  %v939 = vrot.slane %v931, %v938
  %v941 = vunpack.c.l.s4 1934713408
  %v942 = vunpack.c.0.s8 %v941
  %v943 = vlaneseq
  %v944 = vshrl.u32 %v943, 7
  %v945 = vsub.s32 %v942, %v944
  %v946 = vrot.slane %v932, %v945
  %v947 = vcombine.low %v923, %v939
  %v948 = vcombine.high %v923, %v939
  %v949 = vcombine.low %v930, %v946
  %v950 = vcombine.high %v930, %v946
  %951 = vrot.lane.b32.xlu0 %v355, 64
  %v952 = vpop.permute.xlu0 %951
  %953 = vrot.lane.b32.xlu0 %v360, 64
  %v954 = vpop.permute.xlu0 %953
  %955 = vrot.lane.b32.xlu0 %v366, 64
  %v956 = vpop.permute.xlu0 %955
  %957 = vrot.lane.b32.xlu0 %v368, 64
  %v958 = vpop.permute.xlu0 %957
  %959 = vrot.lane.b32.xlu0 %v372, 64
  %v960 = vpop.permute.xlu0 %959
  %961 = vrot.lane.b32.xlu0 %v374, 64
  %v962 = vpop.permute.xlu0 %961
  %963 = vrot.lane.b32.xlu0 %v378, 64
  %v964 = vpop.permute.xlu0 %963
  %965 = vrot.lane.b32.xlu0 %v380, 64
  %v966 = vpop.permute.xlu0 %965
  %v975 = vcombine.low %v952, %v960
  %v976 = vcombine.high %v952, %v960
  %v978 = vunpack.c.l.s4 1983009808
  %v979 = vunpack.c.0.s8 %v978
  %v980 = vlaneseq
  %v981 = vshrl.u32 %v980, 7
  %v982 = vsub.s32 %v979, %v981
  %v983 = vrot.slane %v975, %v982
  %v985 = vunpack.c.l.s4 1983009808
  %v986 = vunpack.c.0.s8 %v985
  %v987 = vlaneseq
  %v988 = vshrl.u32 %v987, 7
  %v989 = vsub.s32 %v986, %v988
  %v990 = vrot.slane %v976, %v989
  %v991 = vcombine.low %v956, %v964
  %v992 = vcombine.high %v956, %v964
  %v994 = vunpack.c.l.s4 1983009808
  %v995 = vunpack.c.0.s8 %v994
  %v996 = vlaneseq
  %v997 = vshrl.u32 %v996, 7
  %v998 = vsub.s32 %v995, %v997
  %v999 = vrot.slane %v991, %v998
  %v1001 = vunpack.c.l.s4 1983009808
  %v1002 = vunpack.c.0.s8 %v1001
  %v1003 = vlaneseq
  %v1004 = vshrl.u32 %v1003, 7
  %v1005 = vsub.s32 %v1002, %v1004
  %v1006 = vrot.slane %v992, %v1005
  %v1007 = vcombine.low %v983, %v999
  %v1008 = vcombine.high %v983, %v999
  %v1010 = vunpack.c.l.s4 1934713408
  %v1011 = vunpack.c.0.s8 %v1010
  %v1012 = vlaneseq
  %v1013 = vshrl.u32 %v1012, 7
  %v1014 = vsub.s32 %v1011, %v1013
  %v1015 = vrot.slane %v1007, %v1014
  %v1017 = vunpack.c.l.s4 1934713408
  %v1018 = vunpack.c.0.s8 %v1017
  %v1019 = vlaneseq
  %v1020 = vshrl.u32 %v1019, 7
  %v1021 = vsub.s32 %v1018, %v1020
  %v1022 = vrot.slane %v1008, %v1021
  %v1023 = vcombine.low %v990, %v1006
  %v1024 = vcombine.high %v990, %v1006
  %v1026 = vunpack.c.l.s4 1934713408
  %v1027 = vunpack.c.0.s8 %v1026
  %v1028 = vlaneseq
  %v1029 = vshrl.u32 %v1028, 7
  %v1030 = vsub.s32 %v1027, %v1029
  %v1031 = vrot.slane %v1023, %v1030
  %v1033 = vunpack.c.l.s4 1934713408
  %v1034 = vunpack.c.0.s8 %v1033
  %v1035 = vlaneseq
  %v1036 = vshrl.u32 %v1035, 7
  %v1037 = vsub.s32 %v1034, %v1036
  %v1038 = vrot.slane %v1024, %v1037
  %v1039 = vcombine.high %v1015, 0.0
  %v1040 = vcombine.high %v1022, 0.0
  %v1041 = vcombine.high %v1031, 0.0
  %v1042 = vcombine.high %v1038, 0.0
  %v1043 = vcombine.low %v954, %v962
  %v1044 = vcombine.high %v954, %v962
  %v1046 = vunpack.c.l.s4 1983009808
  %v1047 = vunpack.c.0.s8 %v1046
  %v1048 = vlaneseq
  %v1049 = vshrl.u32 %v1048, 7
  %v1050 = vsub.s32 %v1047, %v1049
  %v1051 = vrot.slane %v1043, %v1050
  %v1053 = vunpack.c.l.s4 1983009808
  %v1054 = vunpack.c.0.s8 %v1053
  %v1055 = vlaneseq
  %v1056 = vshrl.u32 %v1055, 7
  %v1057 = vsub.s32 %v1054, %v1056
  %v1058 = vrot.slane %v1044, %v1057
  %v1059 = vcombine.low %v958, %v966
  %v1060 = vcombine.high %v958, %v966
  %v1062 = vunpack.c.l.s4 1983009808
  %v1063 = vunpack.c.0.s8 %v1062
  %v1064 = vlaneseq
  %v1065 = vshrl.u32 %v1064, 7
  %v1066 = vsub.s32 %v1063, %v1065
  %v1067 = vrot.slane %v1059, %v1066
  %v1069 = vunpack.c.l.s4 1983009808
  %v1070 = vunpack.c.0.s8 %v1069
  %v1071 = vlaneseq
  %v1072 = vshrl.u32 %v1071, 7
  %v1073 = vsub.s32 %v1070, %v1072
  %v1074 = vrot.slane %v1060, %v1073
  %v1075 = vcombine.low %v1051, %v1067
  %v1076 = vcombine.high %v1051, %v1067
  %v1078 = vunpack.c.l.s4 1934713408
  %v1079 = vunpack.c.0.s8 %v1078
  %v1080 = vlaneseq
  %v1081 = vshrl.u32 %v1080, 7
  %v1082 = vsub.s32 %v1079, %v1081
  %v1083 = vrot.slane %v1075, %v1082
  %v1085 = vunpack.c.l.s4 1934713408
  %v1086 = vunpack.c.0.s8 %v1085
  %v1087 = vlaneseq
  %v1088 = vshrl.u32 %v1087, 7
  %v1089 = vsub.s32 %v1086, %v1088
  %v1090 = vrot.slane %v1076, %v1089
  %v1091 = vcombine.low %v1058, %v1074
  %v1092 = vcombine.high %v1058, %v1074
  %v1094 = vunpack.c.l.s4 1934713408
  %v1095 = vunpack.c.0.s8 %v1094
  %v1096 = vlaneseq
  %v1097 = vshrl.u32 %v1096, 7
  %v1098 = vsub.s32 %v1095, %v1097
  %v1099 = vrot.slane %v1091, %v1098
  %v1101 = vunpack.c.l.s4 1934713408
  %v1102 = vunpack.c.0.s8 %v1101
  %v1103 = vlaneseq
  %v1104 = vshrl.u32 %v1103, 7
  %v1105 = vsub.s32 %v1102, %v1104
  %v1106 = vrot.slane %v1092, %v1105
  %v1107 = vcombine.high %v1083, 0.0
  %v1108 = vcombine.high %v1090, 0.0
  %v1109 = vcombine.high %v1099, 0.0
  %v1110 = vcombine.high %v1106, 0.0
  %v1111 = vcombine.low %v1015, %v1022
  %v1113 = vunpack.c.l.s4 1983009808
  %v1114 = vunpack.c.0.s8 %v1113
  %v1115 = vlaneseq
  %v1116 = vshrl.u32 %v1115, 7
  %v1117 = vsub.s32 %v1114, %v1116
  %v1118 = vrot.slane %v1111, %v1117
  %v1119 = vcombine.low %v1039, %v1040
  %v1121 = vunpack.c.l.s4 1983009808
  %v1122 = vunpack.c.0.s8 %v1121
  %v1123 = vlaneseq
  %v1124 = vshrl.u32 %v1123, 7
  %v1125 = vsub.s32 %v1122, %v1124
  %v1126 = vrot.slane %v1119, %v1125
  %v1127 = vcombine.low %v1031, %v1038
  %v1129 = vunpack.c.l.s4 1983009808
  %v1130 = vunpack.c.0.s8 %v1129
  %v1131 = vlaneseq
  %v1132 = vshrl.u32 %v1131, 7
  %v1133 = vsub.s32 %v1130, %v1132
  %v1134 = vrot.slane %v1127, %v1133
  %v1135 = vcombine.low %v1041, %v1042
  %v1137 = vunpack.c.l.s4 1983009808
  %v1138 = vunpack.c.0.s8 %v1137
  %v1139 = vlaneseq
  %v1140 = vshrl.u32 %v1139, 7
  %v1141 = vsub.s32 %v1138, %v1140
  %v1142 = vrot.slane %v1135, %v1141
  %v1143 = vcombine.low %v1118, %v1126
  %v1144 = vcombine.high %v1118, %v1126
  %v1146 = vunpack.c.l.s4 1934713408
  %v1147 = vunpack.c.0.s8 %v1146
  %v1148 = vlaneseq
  %v1149 = vshrl.u32 %v1148, 7
  %v1150 = vsub.s32 %v1147, %v1149
  %v1151 = vrot.slane %v1143, %v1150
  %v1153 = vunpack.c.l.s4 1934713408
  %v1154 = vunpack.c.0.s8 %v1153
  %v1155 = vlaneseq
  %v1156 = vshrl.u32 %v1155, 7
  %v1157 = vsub.s32 %v1154, %v1156
  %v1158 = vrot.slane %v1144, %v1157
  %v1159 = vcombine.low %v1134, %v1142
  %v1160 = vcombine.high %v1134, %v1142
  %v1162 = vunpack.c.l.s4 1934713408
  %v1163 = vunpack.c.0.s8 %v1162
  %v1164 = vlaneseq
  %v1165 = vshrl.u32 %v1164, 7
  %v1166 = vsub.s32 %v1163, %v1165
  %v1167 = vrot.slane %v1159, %v1166
  %v1169 = vunpack.c.l.s4 1934713408
  %v1170 = vunpack.c.0.s8 %v1169
  %v1171 = vlaneseq
  %v1172 = vshrl.u32 %v1171, 7
  %v1173 = vsub.s32 %v1170, %v1172
  %v1174 = vrot.slane %v1160, %v1173
  %v1175 = vcombine.low %v1151, %v1167
  %v1176 = vcombine.high %v1151, %v1167
  %v1177 = vcombine.low %v1158, %v1174
  %v1178 = vcombine.high %v1158, %v1174
  %v1179 = vcombine.low %v1083, %v1090
  %v1181 = vunpack.c.l.s4 1983009808
  %v1182 = vunpack.c.0.s8 %v1181
  %v1183 = vlaneseq
  %v1184 = vshrl.u32 %v1183, 7
  %v1185 = vsub.s32 %v1182, %v1184
  %v1186 = vrot.slane %v1179, %v1185
  %v1187 = vcombine.low %v1107, %v1108
  %v1189 = vunpack.c.l.s4 1983009808
  %v1190 = vunpack.c.0.s8 %v1189
  %v1191 = vlaneseq
  %v1192 = vshrl.u32 %v1191, 7
  %v1193 = vsub.s32 %v1190, %v1192
  %v1194 = vrot.slane %v1187, %v1193
  %v1195 = vcombine.low %v1099, %v1106
  %v1197 = vunpack.c.l.s4 1983009808
  %v1198 = vunpack.c.0.s8 %v1197
  %v1199 = vlaneseq
  %v1200 = vshrl.u32 %v1199, 7
  %v1201 = vsub.s32 %v1198, %v1200
  %v1202 = vrot.slane %v1195, %v1201
  %v1203 = vcombine.low %v1109, %v1110
  %v1205 = vunpack.c.l.s4 1983009808
  %v1206 = vunpack.c.0.s8 %v1205
  %v1207 = vlaneseq
  %v1208 = vshrl.u32 %v1207, 7
  %v1209 = vsub.s32 %v1206, %v1208
  %v1210 = vrot.slane %v1203, %v1209
  %v1211 = vcombine.low %v1186, %v1194
  %v1212 = vcombine.high %v1186, %v1194
  %v1214 = vunpack.c.l.s4 1934713408
  %v1215 = vunpack.c.0.s8 %v1214
  %v1216 = vlaneseq
  %v1217 = vshrl.u32 %v1216, 7
  %v1218 = vsub.s32 %v1215, %v1217
  %v1219 = vrot.slane %v1211, %v1218
  %v1221 = vunpack.c.l.s4 1934713408
  %v1222 = vunpack.c.0.s8 %v1221
  %v1223 = vlaneseq
  %v1224 = vshrl.u32 %v1223, 7
  %v1225 = vsub.s32 %v1222, %v1224
  %v1226 = vrot.slane %v1212, %v1225
  %v1227 = vcombine.low %v1202, %v1210
  %v1228 = vcombine.high %v1202, %v1210
  %v1230 = vunpack.c.l.s4 1934713408
  %v1231 = vunpack.c.0.s8 %v1230
  %v1232 = vlaneseq
  %v1233 = vshrl.u32 %v1232, 7
  %v1234 = vsub.s32 %v1231, %v1233
  %v1235 = vrot.slane %v1227, %v1234
  %v1237 = vunpack.c.l.s4 1934713408
  %v1238 = vunpack.c.0.s8 %v1237
  %v1239 = vlaneseq
  %v1240 = vshrl.u32 %v1239, 7
  %v1241 = vsub.s32 %v1238, %v1240
  %v1242 = vrot.slane %v1228, %v1241
  %v1243 = vcombine.low %v1219, %v1235
  %v1244 = vcombine.high %v1219, %v1235
  %v1245 = vcombine.low %v1226, %v1242
  %v1246 = vcombine.high %v1226, %v1242
  %v1247 = vlaneseq
  %v1248 = vshrl.u32 %v1247, 7
  %v1249 = vsub.s32 0, %v1248
  %v1250 = vrot.slane %v239, %v1249
  %v1251 = vlaneseq
  %v1252 = vshrl.u32 %v1251, 7
  %v1253 = vsub.s32 0, %v1252
  %v1254 = vrot.slane %v246, %v1253
  %v1255 = vlaneseq
  %v1256 = vshrl.u32 %v1255, 7
  %v1257 = vsub.s32 0, %v1256
  %v1258 = vrot.slane %v247, %v1257
  %v1259 = vlaneseq
  %v1260 = vshrl.u32 %v1259, 7
  %v1261 = vsub.s32 0, %v1260
  %v1262 = vrot.slane %v248, %v1261
  %v1263 = vlaneseq
  %v1264 = vshrl.u32 %v1263, 7
  %v1265 = vsub.s32 0, %v1264
  %v1266 = vrot.slane %v263, %v1265
  %v1267 = vlaneseq
  %v1268 = vshrl.u32 %v1267, 7
  %v1269 = vsub.s32 0, %v1268
  %v1270 = vrot.slane %v270, %v1269
  %v1271 = vlaneseq
  %v1272 = vshrl.u32 %v1271, 7
  %v1273 = vsub.s32 0, %v1272
  %v1274 = vrot.slane %v271, %v1273
  %v1275 = vlaneseq
  %v1276 = vshrl.u32 %v1275, 7
  %v1277 = vsub.s32 0, %v1276
  %v1278 = vrot.slane %v272, %v1277
  %vm1287 = vcmask 64512
  %v1289 = vsel %vm1287, %v583, 0
  %v1292 = vsel %vm1287, %v879, 0
  %1294 = vmatprep.subr.mxu0 0.0
  %1295 = vmatpush1.xpose.msra.mxu0 %v1292
  %1296 = vmatprep.subr.mxu0 0.0
  %1297 = vmatpush1.xpose.msra.mxu0 0.0
  %1298 = vmatprep.subr.mxu0 0.0
  %1299 = vmatpush1.xpose.msra.mxu0 0.0
  %1300 = vmatprep.subr.mxu0 0.0
  %1301 = vmatpush1.xpose.msra.mxu0 0.0
  %1302 = vmatprep.subr.mxu0 0.0
  %1303 = vmatpush1.xpose.msra.mxu0 0.0
  %1304 = vmatprep.subr.mxu0 0.0
  %1305 = vmatpush1.xpose.msra.mxu0 0.0
  %1306 = vmatprep.subr.mxu0 0.0
  %1307 = vmatpush1.xpose.msra.mxu0 0.0
  %1308 = vmatprep.subr.mxu0 0.0
  %1309 = vmatpush1.xpose.msra.mxu0 0.0
  %1310 = vmatprep.subr.mxu0 0.0
  %1311 = vmatpush1.xpose.msra.mxu0 0.0
  %1312 = vmatprep.subr.mxu0 0.0
  %1313 = vmatpush1.xpose.msra.mxu0 0.0
  %1314 = vmatprep.subr.mxu0 0.0
  %1315 = vmatpush1.xpose.msra.mxu0 0.0
  %1316 = vmatprep.subr.mxu0 0.0
  %1317 = vmatpush1.xpose.msra.mxu0 0.0
  %1318 = vmatprep.subr.mxu0 0.0
  %1319 = vmatpush1.xpose.msra.mxu0 0.0
  %1320 = vmatprep.subr.mxu0 0.0
  %1321 = vmatpush1.xpose.msra.mxu0 0.0
  %1322 = vmatprep.subr.mxu0 0.0
  %1323 = vmatpush1.xpose.msra.mxu0 0.0
  %1324 = vmatprep.subr.mxu0 0.0
  %1325 = vmatpush1.xpose.msra.mxu0 0.0
  %1326 = vmatprep.subr.mxu0 0.0
  %1327 = vmatpush1.xpose.msra.mxu0 0.0
  %1328 = vmatprep.subr.mxu0 0.0
  %1329 = vmatpush1.xpose.msra.mxu0 0.0
  %1330 = vmatprep.subr.mxu0 0.0
  %1331 = vmatpush1.xpose.msra.mxu0 0.0
  %1332 = vmatprep.subr.mxu0 0.0
  %1333 = vmatpush1.xpose.msra.mxu0 0.0
  %1334 = vmatprep.subr.mxu0 0.0
  %1335 = vmatpush1.xpose.msra.mxu0 0.0
  %1336 = vmatprep.subr.mxu0 0.0
  %1337 = vmatpush1.xpose.msra.mxu0 0.0
  %1338 = vmatprep.subr.mxu0 0.0
  %1339 = vmatpush1.xpose.msra.mxu0 0.0
  %1340 = vmatprep.subr.mxu0 0.0
  %1341 = vmatpush1.xpose.msra.mxu0 0.0
  %1342 = vmatprep.subr.mxu0 0.0
  %1343 = vmatpush1.xpose.msra.mxu0 0.0
  %1344 = vmatprep.subr.mxu0 0.0
  %1345 = vmatpush1.xpose.msra.mxu0 0.0
  %1346 = vmatprep.subr.mxu0 0.0
  %1347 = vmatpush1.xpose.msra.mxu0 0.0
  %1348 = vmatprep.subr.mxu0 0.0
  %1349 = vmatpush1.xpose.msra.mxu0 0.0
  %1350 = vmatprep.subr.mxu0 0.0
  %1351 = vmatpush1.xpose.msra.mxu0 0.0
  %1352 = vmatprep.subr.mxu0 0.0
  %1353 = vmatpush1.xpose.msra.mxu0 0.0
  %1354 = vmatprep.subr.mxu0 0.0
  %1355 = vmatpush1.xpose.msra.mxu0 0.0
  %1356 = vmatprep.subr.mxu0 0.0
  %1357 = vmatpush1.xpose.msra.mxu0 0.0
  %1358 = vmatprep.mubr.f32.mxu0 0.0
  %1359 = vmatmul.mubr.f32.gmra.mrb[0].mxu0 %v1289
  %v1360 = vpop.f32.mrb[0].mxu0
  %v1361 = vadd.f32 %v1250, %v1360
  %v1362 = vpop.f32.mrb[0].mxu0
  %1363 = vdwg.mxu0
  %v1365 = vsel %vm1287, %v584, 0
  %v1368 = vsel %vm1287, %v880, 0
  %1370 = vmatprep.subr.mxu0 0.0
  %1371 = vmatpush1.xpose.msra.mxu0 %v1368
  %1372 = vmatprep.subr.mxu0 0.0
  %1373 = vmatpush1.xpose.msra.mxu0 0.0
  %1374 = vmatprep.subr.mxu0 0.0
  %1375 = vmatpush1.xpose.msra.mxu0 0.0
  %1376 = vmatprep.subr.mxu0 0.0
  %1377 = vmatpush1.xpose.msra.mxu0 0.0
  %1378 = vmatprep.subr.mxu0 0.0
  %1379 = vmatpush1.xpose.msra.mxu0 0.0
  %1380 = vmatprep.subr.mxu0 0.0
  %1381 = vmatpush1.xpose.msra.mxu0 0.0
  %1382 = vmatprep.subr.mxu0 0.0
  %1383 = vmatpush1.xpose.msra.mxu0 0.0
  %1384 = vmatprep.subr.mxu0 0.0
  %1385 = vmatpush1.xpose.msra.mxu0 0.0
  %1386 = vmatprep.subr.mxu0 0.0
  %1387 = vmatpush1.xpose.msra.mxu0 0.0
  %1388 = vmatprep.subr.mxu0 0.0
  %1389 = vmatpush1.xpose.msra.mxu0 0.0
  %1390 = vmatprep.subr.mxu0 0.0
  %1391 = vmatpush1.xpose.msra.mxu0 0.0
  %1392 = vmatprep.subr.mxu0 0.0
  %1393 = vmatpush1.xpose.msra.mxu0 0.0
  %1394 = vmatprep.subr.mxu0 0.0
  %1395 = vmatpush1.xpose.msra.mxu0 0.0
  %1396 = vmatprep.subr.mxu0 0.0
  %1397 = vmatpush1.xpose.msra.mxu0 0.0
  %1398 = vmatprep.subr.mxu0 0.0
  %1399 = vmatpush1.xpose.msra.mxu0 0.0
  %1400 = vmatprep.subr.mxu0 0.0
  %1401 = vmatpush1.xpose.msra.mxu0 0.0
  %1402 = vmatprep.subr.mxu0 0.0
  %1403 = vmatpush1.xpose.msra.mxu0 0.0
  %1404 = vmatprep.subr.mxu0 0.0
  %1405 = vmatpush1.xpose.msra.mxu0 0.0
  %1406 = vmatprep.subr.mxu0 0.0
  %1407 = vmatpush1.xpose.msra.mxu0 0.0
  %1408 = vmatprep.subr.mxu0 0.0
  %1409 = vmatpush1.xpose.msra.mxu0 0.0
  %1410 = vmatprep.subr.mxu0 0.0
  %1411 = vmatpush1.xpose.msra.mxu0 0.0
  %1412 = vmatprep.subr.mxu0 0.0
  %1413 = vmatpush1.xpose.msra.mxu0 0.0
  %1414 = vmatprep.subr.mxu0 0.0
  %1415 = vmatpush1.xpose.msra.mxu0 0.0
  %1416 = vmatprep.subr.mxu0 0.0
  %1417 = vmatpush1.xpose.msra.mxu0 0.0
  %1418 = vmatprep.subr.mxu0 0.0
  %1419 = vmatpush1.xpose.msra.mxu0 0.0
  %1420 = vmatprep.subr.mxu0 0.0
  %1421 = vmatpush1.xpose.msra.mxu0 0.0
  %1422 = vmatprep.subr.mxu0 0.0
  %1423 = vmatpush1.xpose.msra.mxu0 0.0
  %1424 = vmatprep.subr.mxu0 0.0
  %1425 = vmatpush1.xpose.msra.mxu0 0.0
  %1426 = vmatprep.subr.mxu0 0.0
  %1427 = vmatpush1.xpose.msra.mxu0 0.0
  %1428 = vmatprep.subr.mxu0 0.0
  %1429 = vmatpush1.xpose.msra.mxu0 0.0
  %1430 = vmatprep.subr.mxu0 0.0
  %1431 = vmatpush1.xpose.msra.mxu0 0.0
  %1432 = vmatprep.subr.mxu0 0.0
  %1433 = vmatpush1.xpose.msra.mxu0 0.0
  %1434 = vmatprep.mubr.f32.mxu0 0.0
  %1435 = vmatmul.mubr.f32.gmra.mrb[0].mxu0 %v1365
  %v1436 = vpop.f32.mrb[0].mxu0
  %v1437 = vadd.f32 %v1254, %v1436
  %v1438 = vpop.f32.mrb[0].mxu0
  %1439 = vdwg.mxu0
  %v1441 = vsel %vm1287, %v585, 0
  %v1444 = vsel %vm1287, %v881, 0
  %1446 = vmatprep.subr.mxu0 0.0
  %1447 = vmatpush1.xpose.msra.mxu0 %v1444
  %1448 = vmatprep.subr.mxu0 0.0
  %1449 = vmatpush1.xpose.msra.mxu0 0.0
  %1450 = vmatprep.subr.mxu0 0.0
  %1451 = vmatpush1.xpose.msra.mxu0 0.0
  %1452 = vmatprep.subr.mxu0 0.0
  %1453 = vmatpush1.xpose.msra.mxu0 0.0
  %1454 = vmatprep.subr.mxu0 0.0
  %1455 = vmatpush1.xpose.msra.mxu0 0.0
  %1456 = vmatprep.subr.mxu0 0.0
  %1457 = vmatpush1.xpose.msra.mxu0 0.0
  %1458 = vmatprep.subr.mxu0 0.0
  %1459 = vmatpush1.xpose.msra.mxu0 0.0
  %1460 = vmatprep.subr.mxu0 0.0
  %1461 = vmatpush1.xpose.msra.mxu0 0.0
  %1462 = vmatprep.subr.mxu0 0.0
  %1463 = vmatpush1.xpose.msra.mxu0 0.0
  %1464 = vmatprep.subr.mxu0 0.0
  %1465 = vmatpush1.xpose.msra.mxu0 0.0
  %1466 = vmatprep.subr.mxu0 0.0
  %1467 = vmatpush1.xpose.msra.mxu0 0.0
  %1468 = vmatprep.subr.mxu0 0.0
  %1469 = vmatpush1.xpose.msra.mxu0 0.0
  %1470 = vmatprep.subr.mxu0 0.0
  %1471 = vmatpush1.xpose.msra.mxu0 0.0
  %1472 = vmatprep.subr.mxu0 0.0
  %1473 = vmatpush1.xpose.msra.mxu0 0.0
  %1474 = vmatprep.subr.mxu0 0.0
  %1475 = vmatpush1.xpose.msra.mxu0 0.0
  %1476 = vmatprep.subr.mxu0 0.0
  %1477 = vmatpush1.xpose.msra.mxu0 0.0
  %1478 = vmatprep.subr.mxu0 0.0
  %1479 = vmatpush1.xpose.msra.mxu0 0.0
  %1480 = vmatprep.subr.mxu0 0.0
  %1481 = vmatpush1.xpose.msra.mxu0 0.0
  %1482 = vmatprep.subr.mxu0 0.0
  %1483 = vmatpush1.xpose.msra.mxu0 0.0
  %1484 = vmatprep.subr.mxu0 0.0
  %1485 = vmatpush1.xpose.msra.mxu0 0.0
  %1486 = vmatprep.subr.mxu0 0.0
  %1487 = vmatpush1.xpose.msra.mxu0 0.0
  %1488 = vmatprep.subr.mxu0 0.0
  %1489 = vmatpush1.xpose.msra.mxu0 0.0
  %1490 = vmatprep.subr.mxu0 0.0
  %1491 = vmatpush1.xpose.msra.mxu0 0.0
  %1492 = vmatprep.subr.mxu0 0.0
  %1493 = vmatpush1.xpose.msra.mxu0 0.0
  %1494 = vmatprep.subr.mxu0 0.0
  %1495 = vmatpush1.xpose.msra.mxu0 0.0
  %1496 = vmatprep.subr.mxu0 0.0
  %1497 = vmatpush1.xpose.msra.mxu0 0.0
  %1498 = vmatprep.subr.mxu0 0.0
  %1499 = vmatpush1.xpose.msra.mxu0 0.0
  %1500 = vmatprep.subr.mxu0 0.0
  %1501 = vmatpush1.xpose.msra.mxu0 0.0
  %1502 = vmatprep.subr.mxu0 0.0
  %1503 = vmatpush1.xpose.msra.mxu0 0.0
  %1504 = vmatprep.subr.mxu0 0.0
  %1505 = vmatpush1.xpose.msra.mxu0 0.0
  %1506 = vmatprep.subr.mxu0 0.0
  %1507 = vmatpush1.xpose.msra.mxu0 0.0
  %1508 = vmatprep.subr.mxu0 0.0
  %1509 = vmatpush1.xpose.msra.mxu0 0.0
  %1510 = vmatprep.mubr.f32.mxu0 0.0
  %1511 = vmatmul.mubr.f32.gmra.mrb[0].mxu0 %v1441
  %v1512 = vpop.f32.mrb[0].mxu0
  %v1513 = vadd.f32 %v1258, %v1512
  %v1514 = vpop.f32.mrb[0].mxu0
  %1515 = vdwg.mxu0
  %v1517 = vsel %vm1287, %v586, 0
  %v1520 = vsel %vm1287, %v882, 0
  %1522 = vmatprep.subr.mxu0 0.0
  %1523 = vmatpush1.xpose.msra.mxu0 %v1520
  %1524 = vmatprep.subr.mxu0 0.0
  %1525 = vmatpush1.xpose.msra.mxu0 0.0
  %1526 = vmatprep.subr.mxu0 0.0
  %1527 = vmatpush1.xpose.msra.mxu0 0.0
  %1528 = vmatprep.subr.mxu0 0.0
  %1529 = vmatpush1.xpose.msra.mxu0 0.0
  %1530 = vmatprep.subr.mxu0 0.0
  %1531 = vmatpush1.xpose.msra.mxu0 0.0
  %1532 = vmatprep.subr.mxu0 0.0
  %1533 = vmatpush1.xpose.msra.mxu0 0.0
  %1534 = vmatprep.subr.mxu0 0.0
  %1535 = vmatpush1.xpose.msra.mxu0 0.0
  %1536 = vmatprep.subr.mxu0 0.0
  %1537 = vmatpush1.xpose.msra.mxu0 0.0
  %1538 = vmatprep.subr.mxu0 0.0
  %1539 = vmatpush1.xpose.msra.mxu0 0.0
  %1540 = vmatprep.subr.mxu0 0.0
  %1541 = vmatpush1.xpose.msra.mxu0 0.0
  %1542 = vmatprep.subr.mxu0 0.0
  %1543 = vmatpush1.xpose.msra.mxu0 0.0
  %1544 = vmatprep.subr.mxu0 0.0
  %1545 = vmatpush1.xpose.msra.mxu0 0.0
  %1546 = vmatprep.subr.mxu0 0.0
  %1547 = vmatpush1.xpose.msra.mxu0 0.0
  %1548 = vmatprep.subr.mxu0 0.0
  %1549 = vmatpush1.xpose.msra.mxu0 0.0
  %1550 = vmatprep.subr.mxu0 0.0
  %1551 = vmatpush1.xpose.msra.mxu0 0.0
  %1552 = vmatprep.subr.mxu0 0.0
  %1553 = vmatpush1.xpose.msra.mxu0 0.0
  %1554 = vmatprep.subr.mxu0 0.0
  %1555 = vmatpush1.xpose.msra.mxu0 0.0
  %1556 = vmatprep.subr.mxu0 0.0
  %1557 = vmatpush1.xpose.msra.mxu0 0.0
  %1558 = vmatprep.subr.mxu0 0.0
  %1559 = vmatpush1.xpose.msra.mxu0 0.0
  %1560 = vmatprep.subr.mxu0 0.0
  %1561 = vmatpush1.xpose.msra.mxu0 0.0
  %1562 = vmatprep.subr.mxu0 0.0
  %1563 = vmatpush1.xpose.msra.mxu0 0.0
  %1564 = vmatprep.subr.mxu0 0.0
  %1565 = vmatpush1.xpose.msra.mxu0 0.0
  %1566 = vmatprep.subr.mxu0 0.0
  %1567 = vmatpush1.xpose.msra.mxu0 0.0
  %1568 = vmatprep.subr.mxu0 0.0
  %1569 = vmatpush1.xpose.msra.mxu0 0.0
  %1570 = vmatprep.subr.mxu0 0.0
  %1571 = vmatpush1.xpose.msra.mxu0 0.0
  %1572 = vmatprep.subr.mxu0 0.0
  %1573 = vmatpush1.xpose.msra.mxu0 0.0
  %1574 = vmatprep.subr.mxu0 0.0
  %1575 = vmatpush1.xpose.msra.mxu0 0.0
  %1576 = vmatprep.subr.mxu0 0.0
  %1577 = vmatpush1.xpose.msra.mxu0 0.0
  %1578 = vmatprep.subr.mxu0 0.0
  %1579 = vmatpush1.xpose.msra.mxu0 0.0
  %1580 = vmatprep.subr.mxu0 0.0
  %1581 = vmatpush1.xpose.msra.mxu0 0.0
  %1582 = vmatprep.subr.mxu0 0.0
  %1583 = vmatpush1.xpose.msra.mxu0 0.0
  %1584 = vmatprep.subr.mxu0 0.0
  %1585 = vmatpush1.xpose.msra.mxu0 0.0
  %1586 = vmatprep.mubr.f32.mxu0 0.0
  %1587 = vmatmul.mubr.f32.gmra.mrb[0].mxu0 %v1517
  %v1588 = vpop.f32.mrb[0].mxu0
  %v1589 = vadd.f32 %v1262, %v1588
  %v1590 = vpop.f32.mrb[0].mxu0
  %1591 = vdwg.mxu0
  %v1593 = vsel %vm1287, %v651, 0
  %v1596 = vsel %vm1287, %v947, 0
  %1598 = vmatprep.subr.mxu0 0.0
  %1599 = vmatpush1.xpose.msra.mxu0 %v1596
  %1600 = vmatprep.subr.mxu0 0.0
  %1601 = vmatpush1.xpose.msra.mxu0 0.0
  %1602 = vmatprep.subr.mxu0 0.0
  %1603 = vmatpush1.xpose.msra.mxu0 0.0
  %1604 = vmatprep.subr.mxu0 0.0
  %1605 = vmatpush1.xpose.msra.mxu0 0.0
  %1606 = vmatprep.subr.mxu0 0.0
  %1607 = vmatpush1.xpose.msra.mxu0 0.0
  %1608 = vmatprep.subr.mxu0 0.0
  %1609 = vmatpush1.xpose.msra.mxu0 0.0
  %1610 = vmatprep.subr.mxu0 0.0
  %1611 = vmatpush1.xpose.msra.mxu0 0.0
  %1612 = vmatprep.subr.mxu0 0.0
  %1613 = vmatpush1.xpose.msra.mxu0 0.0
  %1614 = vmatprep.subr.mxu0 0.0
  %1615 = vmatpush1.xpose.msra.mxu0 0.0
  %1616 = vmatprep.subr.mxu0 0.0
  %1617 = vmatpush1.xpose.msra.mxu0 0.0
  %1618 = vmatprep.subr.mxu0 0.0
  %1619 = vmatpush1.xpose.msra.mxu0 0.0
  %1620 = vmatprep.subr.mxu0 0.0
  %1621 = vmatpush1.xpose.msra.mxu0 0.0
  %1622 = vmatprep.subr.mxu0 0.0
  %1623 = vmatpush1.xpose.msra.mxu0 0.0
  %1624 = vmatprep.subr.mxu0 0.0
  %1625 = vmatpush1.xpose.msra.mxu0 0.0
  %1626 = vmatprep.subr.mxu0 0.0
  %1627 = vmatpush1.xpose.msra.mxu0 0.0
  %1628 = vmatprep.subr.mxu0 0.0
  %1629 = vmatpush1.xpose.msra.mxu0 0.0
  %1630 = vmatprep.subr.mxu0 0.0
  %1631 = vmatpush1.xpose.msra.mxu0 0.0
  %1632 = vmatprep.subr.mxu0 0.0
  %1633 = vmatpush1.xpose.msra.mxu0 0.0
  %1634 = vmatprep.subr.mxu0 0.0
  %1635 = vmatpush1.xpose.msra.mxu0 0.0
  %1636 = vmatprep.subr.mxu0 0.0
  %1637 = vmatpush1.xpose.msra.mxu0 0.0
  %1638 = vmatprep.subr.mxu0 0.0
  %1639 = vmatpush1.xpose.msra.mxu0 0.0
  %1640 = vmatprep.subr.mxu0 0.0
  %1641 = vmatpush1.xpose.msra.mxu0 0.0
  %1642 = vmatprep.subr.mxu0 0.0
  %1643 = vmatpush1.xpose.msra.mxu0 0.0
  %1644 = vmatprep.subr.mxu0 0.0
  %1645 = vmatpush1.xpose.msra.mxu0 0.0
  %1646 = vmatprep.subr.mxu0 0.0
  %1647 = vmatpush1.xpose.msra.mxu0 0.0
  %1648 = vmatprep.subr.mxu0 0.0
  %1649 = vmatpush1.xpose.msra.mxu0 0.0
  %1650 = vmatprep.subr.mxu0 0.0
  %1651 = vmatpush1.xpose.msra.mxu0 0.0
  %1652 = vmatprep.subr.mxu0 0.0
  %1653 = vmatpush1.xpose.msra.mxu0 0.0
  %1654 = vmatprep.subr.mxu0 0.0
  %1655 = vmatpush1.xpose.msra.mxu0 0.0
  %1656 = vmatprep.subr.mxu0 0.0
  %1657 = vmatpush1.xpose.msra.mxu0 0.0
  %1658 = vmatprep.subr.mxu0 0.0
  %1659 = vmatpush1.xpose.msra.mxu0 0.0
  %1660 = vmatprep.subr.mxu0 0.0
  %1661 = vmatpush1.xpose.msra.mxu0 0.0
  %1662 = vmatprep.mubr.f32.mxu0 0.0
  %1663 = vmatmul.mubr.f32.gmra.mrb[0].mxu0 %v1593
  %v1664 = vpop.f32.mrb[0].mxu0
  %v1665 = vadd.f32 %v1266, %v1664
  %v1666 = vpop.f32.mrb[0].mxu0
  %1667 = vdwg.mxu0
  %v1669 = vsel %vm1287, %v652, 0
  %v1672 = vsel %vm1287, %v948, 0
  %1674 = vmatprep.subr.mxu0 0.0
  %1675 = vmatpush1.xpose.msra.mxu0 %v1672
  %1676 = vmatprep.subr.mxu0 0.0
  %1677 = vmatpush1.xpose.msra.mxu0 0.0
  %1678 = vmatprep.subr.mxu0 0.0
  %1679 = vmatpush1.xpose.msra.mxu0 0.0
  %1680 = vmatprep.subr.mxu0 0.0
  %1681 = vmatpush1.xpose.msra.mxu0 0.0
  %1682 = vmatprep.subr.mxu0 0.0
  %1683 = vmatpush1.xpose.msra.mxu0 0.0
  %1684 = vmatprep.subr.mxu0 0.0
  %1685 = vmatpush1.xpose.msra.mxu0 0.0
  %1686 = vmatprep.subr.mxu0 0.0
  %1687 = vmatpush1.xpose.msra.mxu0 0.0
  %1688 = vmatprep.subr.mxu0 0.0
  %1689 = vmatpush1.xpose.msra.mxu0 0.0
  %1690 = vmatprep.subr.mxu0 0.0
  %1691 = vmatpush1.xpose.msra.mxu0 0.0
  %1692 = vmatprep.subr.mxu0 0.0
  %1693 = vmatpush1.xpose.msra.mxu0 0.0
  %1694 = vmatprep.subr.mxu0 0.0
  %1695 = vmatpush1.xpose.msra.mxu0 0.0
  %1696 = vmatprep.subr.mxu0 0.0
  %1697 = vmatpush1.xpose.msra.mxu0 0.0
  %1698 = vmatprep.subr.mxu0 0.0
  %1699 = vmatpush1.xpose.msra.mxu0 0.0
  %1700 = vmatprep.subr.mxu0 0.0
  %1701 = vmatpush1.xpose.msra.mxu0 0.0
  %1702 = vmatprep.subr.mxu0 0.0
  %1703 = vmatpush1.xpose.msra.mxu0 0.0
  %1704 = vmatprep.subr.mxu0 0.0
  %1705 = vmatpush1.xpose.msra.mxu0 0.0
  %1706 = vmatprep.subr.mxu0 0.0
  %1707 = vmatpush1.xpose.msra.mxu0 0.0
  %1708 = vmatprep.subr.mxu0 0.0
  %1709 = vmatpush1.xpose.msra.mxu0 0.0
  %1710 = vmatprep.subr.mxu0 0.0
  %1711 = vmatpush1.xpose.msra.mxu0 0.0
  %1712 = vmatprep.subr.mxu0 0.0
  %1713 = vmatpush1.xpose.msra.mxu0 0.0
  %1714 = vmatprep.subr.mxu0 0.0
  %1715 = vmatpush1.xpose.msra.mxu0 0.0
  %1716 = vmatprep.subr.mxu0 0.0
  %1717 = vmatpush1.xpose.msra.mxu0 0.0
  %1718 = vmatprep.subr.mxu0 0.0
  %1719 = vmatpush1.xpose.msra.mxu0 0.0
  %1720 = vmatprep.subr.mxu0 0.0
  %1721 = vmatpush1.xpose.msra.mxu0 0.0
  %1722 = vmatprep.subr.mxu0 0.0
  %1723 = vmatpush1.xpose.msra.mxu0 0.0
  %1724 = vmatprep.subr.mxu0 0.0
  %1725 = vmatpush1.xpose.msra.mxu0 0.0
  %1726 = vmatprep.subr.mxu0 0.0
  %1727 = vmatpush1.xpose.msra.mxu0 0.0
  %1728 = vmatprep.subr.mxu0 0.0
  %1729 = vmatpush1.xpose.msra.mxu0 0.0
  %1730 = vmatprep.subr.mxu0 0.0
  %1731 = vmatpush1.xpose.msra.mxu0 0.0
  %1732 = vmatprep.subr.mxu0 0.0
  %1733 = vmatpush1.xpose.msra.mxu0 0.0
  %1734 = vmatprep.subr.mxu0 0.0
  %1735 = vmatpush1.xpose.msra.mxu0 0.0
  %1736 = vmatprep.subr.mxu0 0.0
  %1737 = vmatpush1.xpose.msra.mxu0 0.0
  %1738 = vmatprep.mubr.f32.mxu0 0.0
  %1739 = vmatmul.mubr.f32.gmra.mrb[0].mxu0 %v1669
  %v1740 = vpop.f32.mrb[0].mxu0
  %v1741 = vadd.f32 %v1270, %v1740
  %v1742 = vpop.f32.mrb[0].mxu0
  %1743 = vdwg.mxu0
  %v1745 = vsel %vm1287, %v653, 0
  %v1748 = vsel %vm1287, %v949, 0
  %1750 = vmatprep.subr.mxu0 0.0
  %1751 = vmatpush1.xpose.msra.mxu0 %v1748
  %1752 = vmatprep.subr.mxu0 0.0
  %1753 = vmatpush1.xpose.msra.mxu0 0.0
  %1754 = vmatprep.subr.mxu0 0.0
  %1755 = vmatpush1.xpose.msra.mxu0 0.0
  %1756 = vmatprep.subr.mxu0 0.0
  %1757 = vmatpush1.xpose.msra.mxu0 0.0
  %1758 = vmatprep.subr.mxu0 0.0
  %1759 = vmatpush1.xpose.msra.mxu0 0.0
  %1760 = vmatprep.subr.mxu0 0.0
  %1761 = vmatpush1.xpose.msra.mxu0 0.0
  %1762 = vmatprep.subr.mxu0 0.0
  %1763 = vmatpush1.xpose.msra.mxu0 0.0
  %1764 = vmatprep.subr.mxu0 0.0
  %1765 = vmatpush1.xpose.msra.mxu0 0.0
  %1766 = vmatprep.subr.mxu0 0.0
  %1767 = vmatpush1.xpose.msra.mxu0 0.0
  %1768 = vmatprep.subr.mxu0 0.0
  %1769 = vmatpush1.xpose.msra.mxu0 0.0
  %1770 = vmatprep.subr.mxu0 0.0
  %1771 = vmatpush1.xpose.msra.mxu0 0.0
  %1772 = vmatprep.subr.mxu0 0.0
  %1773 = vmatpush1.xpose.msra.mxu0 0.0
  %1774 = vmatprep.subr.mxu0 0.0
  %1775 = vmatpush1.xpose.msra.mxu0 0.0
  %1776 = vmatprep.subr.mxu0 0.0
  %1777 = vmatpush1.xpose.msra.mxu0 0.0
  %1778 = vmatprep.subr.mxu0 0.0
  %1779 = vmatpush1.xpose.msra.mxu0 0.0
  %1780 = vmatprep.subr.mxu0 0.0
  %1781 = vmatpush1.xpose.msra.mxu0 0.0
  %1782 = vmatprep.subr.mxu0 0.0
  %1783 = vmatpush1.xpose.msra.mxu0 0.0
  %1784 = vmatprep.subr.mxu0 0.0
  %1785 = vmatpush1.xpose.msra.mxu0 0.0
  %1786 = vmatprep.subr.mxu0 0.0
  %1787 = vmatpush1.xpose.msra.mxu0 0.0
  %1788 = vmatprep.subr.mxu0 0.0
  %1789 = vmatpush1.xpose.msra.mxu0 0.0
  %1790 = vmatprep.subr.mxu0 0.0
  %1791 = vmatpush1.xpose.msra.mxu0 0.0
  %1792 = vmatprep.subr.mxu0 0.0
  %1793 = vmatpush1.xpose.msra.mxu0 0.0
  %1794 = vmatprep.subr.mxu0 0.0
  %1795 = vmatpush1.xpose.msra.mxu0 0.0
  %1796 = vmatprep.subr.mxu0 0.0
  %1797 = vmatpush1.xpose.msra.mxu0 0.0
  %1798 = vmatprep.subr.mxu0 0.0
  %1799 = vmatpush1.xpose.msra.mxu0 0.0
  %1800 = vmatprep.subr.mxu0 0.0
  %1801 = vmatpush1.xpose.msra.mxu0 0.0
  %1802 = vmatprep.subr.mxu0 0.0
  %1803 = vmatpush1.xpose.msra.mxu0 0.0
  %1804 = vmatprep.subr.mxu0 0.0
  %1805 = vmatpush1.xpose.msra.mxu0 0.0
  %1806 = vmatprep.subr.mxu0 0.0
  %1807 = vmatpush1.xpose.msra.mxu0 0.0
  %1808 = vmatprep.subr.mxu0 0.0
  %1809 = vmatpush1.xpose.msra.mxu0 0.0
  %1810 = vmatprep.subr.mxu0 0.0
  %1811 = vmatpush1.xpose.msra.mxu0 0.0
  %1812 = vmatprep.subr.mxu0 0.0
  %1813 = vmatpush1.xpose.msra.mxu0 0.0
  %1814 = vmatprep.mubr.f32.mxu0 0.0
  %1815 = vmatmul.mubr.f32.gmra.mrb[0].mxu0 %v1745
  %v1816 = vpop.f32.mrb[0].mxu0
  %v1817 = vadd.f32 %v1274, %v1816
  %v1818 = vpop.f32.mrb[0].mxu0
  %1819 = vdwg.mxu0
  %v1821 = vsel %vm1287, %v654, 0
  %v1824 = vsel %vm1287, %v950, 0
  %1826 = vmatprep.subr.mxu0 0.0
  %1827 = vmatpush1.xpose.msra.mxu0 %v1824
  %1828 = vmatprep.subr.mxu0 0.0
  %1829 = vmatpush1.xpose.msra.mxu0 0.0
  %1830 = vmatprep.subr.mxu0 0.0
  %1831 = vmatpush1.xpose.msra.mxu0 0.0
  %1832 = vmatprep.subr.mxu0 0.0
  %1833 = vmatpush1.xpose.msra.mxu0 0.0
  %1834 = vmatprep.subr.mxu0 0.0
  %1835 = vmatpush1.xpose.msra.mxu0 0.0
  %1836 = vmatprep.subr.mxu0 0.0
  %1837 = vmatpush1.xpose.msra.mxu0 0.0
  %1838 = vmatprep.subr.mxu0 0.0
  %1839 = vmatpush1.xpose.msra.mxu0 0.0
  %1840 = vmatprep.subr.mxu0 0.0
  %1841 = vmatpush1.xpose.msra.mxu0 0.0
  %1842 = vmatprep.subr.mxu0 0.0
  %1843 = vmatpush1.xpose.msra.mxu0 0.0
  %1844 = vmatprep.subr.mxu0 0.0
  %1845 = vmatpush1.xpose.msra.mxu0 0.0
  %1846 = vmatprep.subr.mxu0 0.0
  %1847 = vmatpush1.xpose.msra.mxu0 0.0
  %1848 = vmatprep.subr.mxu0 0.0
  %1849 = vmatpush1.xpose.msra.mxu0 0.0
  %1850 = vmatprep.subr.mxu0 0.0
  %1851 = vmatpush1.xpose.msra.mxu0 0.0
  %1852 = vmatprep.subr.mxu0 0.0
  %1853 = vmatpush1.xpose.msra.mxu0 0.0
  %1854 = vmatprep.subr.mxu0 0.0
  %1855 = vmatpush1.xpose.msra.mxu0 0.0
  %1856 = vmatprep.subr.mxu0 0.0
  %1857 = vmatpush1.xpose.msra.mxu0 0.0
  %1858 = vmatprep.subr.mxu0 0.0
  %1859 = vmatpush1.xpose.msra.mxu0 0.0
  %1860 = vmatprep.subr.mxu0 0.0
  %1861 = vmatpush1.xpose.msra.mxu0 0.0
  %1862 = vmatprep.subr.mxu0 0.0
  %1863 = vmatpush1.xpose.msra.mxu0 0.0
  %1864 = vmatprep.subr.mxu0 0.0
  %1865 = vmatpush1.xpose.msra.mxu0 0.0
  %1866 = vmatprep.subr.mxu0 0.0
  %1867 = vmatpush1.xpose.msra.mxu0 0.0
  %1868 = vmatprep.subr.mxu0 0.0
  %1869 = vmatpush1.xpose.msra.mxu0 0.0
  %1870 = vmatprep.subr.mxu0 0.0
  %1871 = vmatpush1.xpose.msra.mxu0 0.0
  %1872 = vmatprep.subr.mxu0 0.0
  %1873 = vmatpush1.xpose.msra.mxu0 0.0
  %1874 = vmatprep.subr.mxu0 0.0
  %1875 = vmatpush1.xpose.msra.mxu0 0.0
  %1876 = vmatprep.subr.mxu0 0.0
  %1877 = vmatpush1.xpose.msra.mxu0 0.0
  %1878 = vmatprep.subr.mxu0 0.0
  %1879 = vmatpush1.xpose.msra.mxu0 0.0
  %1880 = vmatprep.subr.mxu0 0.0
  %1881 = vmatpush1.xpose.msra.mxu0 0.0
  %1882 = vmatprep.subr.mxu0 0.0
  %1883 = vmatpush1.xpose.msra.mxu0 0.0
  %1884 = vmatprep.subr.mxu0 0.0
  %1885 = vmatpush1.xpose.msra.mxu0 0.0
  %1886 = vmatprep.subr.mxu0 0.0
  %1887 = vmatpush1.xpose.msra.mxu0 0.0
  %1888 = vmatprep.subr.mxu0 0.0
  %1889 = vmatpush1.xpose.msra.mxu0 0.0
  %1890 = vmatprep.mubr.f32.mxu0 0.0
  %1891 = vmatmul.mubr.f32.gmra.mrb[0].mxu0 %v1821
  %v1892 = vpop.f32.mrb[0].mxu0
  %v1893 = vadd.f32 %v1278, %v1892
  %v1894 = vpop.f32.mrb[0].mxu0
  %1895 = vdwg.mxu0
  %v1896 = vsel %vm1287, %v1361, -inf
  %1897 = vmax.xlane.f32.xlu0 %v1896
  %v1898 = vpop.xlane.xlu0 %1897
  %v1899 = vsel %vm1287, %v1437, -inf
  %1900 = vmax.xlane.f32.xlu0 %v1899
  %v1901 = vpop.xlane.xlu0 %1900
  %v1902 = vsel %vm1287, %v1513, -inf
  %1903 = vmax.xlane.f32.xlu0 %v1902
  %v1904 = vpop.xlane.xlu0 %1903
  %v1905 = vsel %vm1287, %v1589, -inf
  %1906 = vmax.xlane.f32.xlu0 %v1905
  %v1907 = vpop.xlane.xlu0 %1906
  %v1908 = vsel %vm1287, %v1665, -inf
  %1909 = vmax.xlane.f32.xlu0 %v1908
  %v1910 = vpop.xlane.xlu0 %1909
  %v1911 = vsel %vm1287, %v1741, -inf
  %1912 = vmax.xlane.f32.xlu0 %v1911
  %v1913 = vpop.xlane.xlu0 %1912
  %v1914 = vsel %vm1287, %v1817, -inf
  %1915 = vmax.xlane.f32.xlu0 %v1914
  %v1916 = vpop.xlane.xlu0 %1915
  %v1917 = vsel %vm1287, %v1893, -inf
  %1918 = vmax.xlane.f32.xlu0 %v1917
  %v1919 = vpop.xlane.xlu0 %1918
  %v1920 = vsub.f32 %v1361, %v1898
  %v1921 = vsub.f32 %v1437, %v1901
  %v1922 = vsub.f32 %v1513, %v1904
  %v1923 = vsub.f32 %v1589, %v1907
  %v1924 = vsub.f32 %v1665, %v1910
  %v1925 = vsub.f32 %v1741, %v1913
  %v1926 = vsub.f32 %v1817, %v1916
  %v1927 = vsub.f32 %v1893, %v1919
  %v1928 = vmul.f32 %v1920, 1.442695
  %v1929 = vpow.pop %v1928
  %v1930 = vmul.f32 %v1921, 1.442695
  %v1931 = vpow.pop %v1930
  %v1932 = vmul.f32 %v1922, 1.442695
  %v1933 = vpow.pop %v1932
  %v1934 = vmul.f32 %v1923, 1.442695
  %v1935 = vpow.pop %v1934
  %v1936 = vmul.f32 %v1924, 1.442695
  %v1937 = vpow.pop %v1936
  %v1938 = vmul.f32 %v1925, 1.442695
  %v1939 = vpow.pop %v1938
  %v1940 = vmul.f32 %v1926, 1.442695
  %v1941 = vpow.pop %v1940
  %v1942 = vmul.f32 %v1927, 1.442695
  %v1943 = vpow.pop %v1942
  %v1944 = vsel %vm1287, %v1929, 0.0
  %1945 = vadd.xlane.f32.xlu0 %v1944
  %v1946 = vpop.xlane.xlu0 %1945
  %v1947 = vsel %vm1287, %v1931, 0.0
  %1948 = vadd.xlane.f32.xlu0 %v1947
  %v1949 = vpop.xlane.xlu0 %1948
  %v1950 = vsel %vm1287, %v1933, 0.0
  %1951 = vadd.xlane.f32.xlu0 %v1950
  %v1952 = vpop.xlane.xlu0 %1951
  %v1953 = vsel %vm1287, %v1935, 0.0
  %1954 = vadd.xlane.f32.xlu0 %v1953
  %v1955 = vpop.xlane.xlu0 %1954
  %v1956 = vsel %vm1287, %v1937, 0.0
  %1957 = vadd.xlane.f32.xlu0 %v1956
  %v1958 = vpop.xlane.xlu0 %1957
  %v1959 = vsel %vm1287, %v1939, 0.0
  %1960 = vadd.xlane.f32.xlu0 %v1959
  %v1961 = vpop.xlane.xlu0 %1960
  %v1962 = vsel %vm1287, %v1941, 0.0
  %1963 = vadd.xlane.f32.xlu0 %v1962
  %v1964 = vpop.xlane.xlu0 %1963
  %v1965 = vsel %vm1287, %v1943, 0.0
  %1966 = vadd.xlane.f32.xlu0 %v1965
  %v1967 = vpop.xlane.xlu0 %1966
  %v1968 = vrcp.pop %v1946
  %v1969 = vrcp.pop %v1949
  %v1970 = vrcp.pop %v1952
  %v1971 = vrcp.pop %v1955
  %v1972 = vrcp.pop %v1958
  %v1973 = vrcp.pop %v1961
  %v1974 = vrcp.pop %v1964
  %v1975 = vrcp.pop %v1967
  %v1976 = vmul.f32 %v1929, %v1968
  %v1977 = vmul.f32 %v1931, %v1969
  %v1978 = vmul.f32 %v1933, %v1970
  %v1979 = vmul.f32 %v1935, %v1971
  %v1980 = vmul.f32 %v1937, %v1972
  %v1981 = vmul.f32 %v1939, %v1973
  %v1982 = vmul.f32 %v1941, %v1974
  %v1983 = vmul.f32 %v1943, %v1975
  %v1985 = vsel %vm1287, %v1976, 0
  %1987 = vmatprep.subr.mxu0 0.0
  %1988 = vmatpush1.msra.mxu0 %v1175
  %1989 = vmatprep.subr.mxu0 0.0
  %1990 = vmatpush1.msra.mxu0 0.0
  %1991 = vmatprep.subr.mxu0 0.0
  %1992 = vmatpush1.msra.mxu0 0.0
  %1993 = vmatprep.subr.mxu0 0.0
  %1994 = vmatpush1.msra.mxu0 0.0
  %1995 = vmatprep.subr.mxu0 0.0
  %1996 = vmatpush1.msra.mxu0 0.0
  %1997 = vmatprep.subr.mxu0 0.0
  %1998 = vmatpush1.msra.mxu0 0.0
  %1999 = vmatprep.subr.mxu0 0.0
  %2000 = vmatpush1.msra.mxu0 0.0
  %2001 = vmatprep.subr.mxu0 0.0
  %2002 = vmatpush1.msra.mxu0 0.0
  %2003 = vmatprep.subr.mxu0 0.0
  %2004 = vmatpush1.msra.mxu0 0.0
  %2005 = vmatprep.subr.mxu0 0.0
  %2006 = vmatpush1.msra.mxu0 0.0
  %2007 = vmatprep.subr.mxu0 0.0
  %2008 = vmatpush1.msra.mxu0 0.0
  %2009 = vmatprep.subr.mxu0 0.0
  %2010 = vmatpush1.msra.mxu0 0.0
  %2011 = vmatprep.subr.mxu0 0.0
  %2012 = vmatpush1.msra.mxu0 0.0
  %2013 = vmatprep.subr.mxu0 0.0
  %2014 = vmatpush1.msra.mxu0 0.0
  %2015 = vmatprep.subr.mxu0 0.0
  %2016 = vmatpush1.msra.mxu0 0.0
  %2017 = vmatprep.subr.mxu0 0.0
  %2018 = vmatpush1.msra.mxu0 0.0
  %2019 = vmatprep.subr.mxu0 0.0
  %2020 = vmatpush1.msra.mxu0 0.0
  %2021 = vmatprep.subr.mxu0 0.0
  %2022 = vmatpush1.msra.mxu0 0.0
  %2023 = vmatprep.subr.mxu0 0.0
  %2024 = vmatpush1.msra.mxu0 0.0
  %2025 = vmatprep.subr.mxu0 0.0
  %2026 = vmatpush1.msra.mxu0 0.0
  %2027 = vmatprep.subr.mxu0 0.0
  %2028 = vmatpush1.msra.mxu0 0.0
  %2029 = vmatprep.subr.mxu0 0.0
  %2030 = vmatpush1.msra.mxu0 0.0
  %2031 = vmatprep.subr.mxu0 0.0
  %2032 = vmatpush1.msra.mxu0 0.0
  %2033 = vmatprep.subr.mxu0 0.0
  %2034 = vmatpush1.msra.mxu0 0.0
  %2035 = vmatprep.subr.mxu0 0.0
  %2036 = vmatpush1.msra.mxu0 0.0
  %2037 = vmatprep.subr.mxu0 0.0
  %2038 = vmatpush1.msra.mxu0 0.0
  %2039 = vmatprep.subr.mxu0 0.0
  %2040 = vmatpush1.msra.mxu0 0.0
  %2041 = vmatprep.subr.mxu0 0.0
  %2042 = vmatpush1.msra.mxu0 0.0
  %2043 = vmatprep.subr.mxu0 0.0
  %2044 = vmatpush1.msra.mxu0 0.0
  %2045 = vmatprep.subr.mxu0 0.0
  %2046 = vmatpush1.msra.mxu0 0.0
  %2047 = vmatprep.subr.mxu0 0.0
  %2048 = vmatpush1.msra.mxu0 0.0
  %2049 = vmatprep.subr.mxu0 0.0
  %2050 = vmatpush1.msra.mxu0 0.0
  %2051 = vmatprep.mubr.f32.mxu0 0.0
  %2052 = vmatmul.mubr.f32.gmra.mrb[0].mxu0 %v1985
  %v2053 = vpop.f32.mrb[0].mxu0
  %v2054 = vadd.f32 0.0, %v2053
  %v2055 = vpop.f32.mrb[0].mxu0
  %2056 = vdwg.mxu0
  %v2058 = vsel %vm1287, %v1977, 0
  %2060 = vmatprep.subr.mxu0 0.0
  %2061 = vmatpush1.msra.mxu0 %v1176
  %2062 = vmatprep.subr.mxu0 0.0
  %2063 = vmatpush1.msra.mxu0 0.0
  %2064 = vmatprep.subr.mxu0 0.0
  %2065 = vmatpush1.msra.mxu0 0.0
  %2066 = vmatprep.subr.mxu0 0.0
  %2067 = vmatpush1.msra.mxu0 0.0
  %2068 = vmatprep.subr.mxu0 0.0
  %2069 = vmatpush1.msra.mxu0 0.0
  %2070 = vmatprep.subr.mxu0 0.0
  %2071 = vmatpush1.msra.mxu0 0.0
  %2072 = vmatprep.subr.mxu0 0.0
  %2073 = vmatpush1.msra.mxu0 0.0
  %2074 = vmatprep.subr.mxu0 0.0
  %2075 = vmatpush1.msra.mxu0 0.0
  %2076 = vmatprep.subr.mxu0 0.0
  %2077 = vmatpush1.msra.mxu0 0.0
  %2078 = vmatprep.subr.mxu0 0.0
  %2079 = vmatpush1.msra.mxu0 0.0
  %2080 = vmatprep.subr.mxu0 0.0
  %2081 = vmatpush1.msra.mxu0 0.0
  %2082 = vmatprep.subr.mxu0 0.0
  %2083 = vmatpush1.msra.mxu0 0.0
  %2084 = vmatprep.subr.mxu0 0.0
  %2085 = vmatpush1.msra.mxu0 0.0
  %2086 = vmatprep.subr.mxu0 0.0
  %2087 = vmatpush1.msra.mxu0 0.0
  %2088 = vmatprep.subr.mxu0 0.0
  %2089 = vmatpush1.msra.mxu0 0.0
  %2090 = vmatprep.subr.mxu0 0.0
  %2091 = vmatpush1.msra.mxu0 0.0
  %2092 = vmatprep.subr.mxu0 0.0
  %2093 = vmatpush1.msra.mxu0 0.0
  %2094 = vmatprep.subr.mxu0 0.0
  %2095 = vmatpush1.msra.mxu0 0.0
  %2096 = vmatprep.subr.mxu0 0.0
  %2097 = vmatpush1.msra.mxu0 0.0
  %2098 = vmatprep.subr.mxu0 0.0
  %2099 = vmatpush1.msra.mxu0 0.0
  %2100 = vmatprep.subr.mxu0 0.0
  %2101 = vmatpush1.msra.mxu0 0.0
  %2102 = vmatprep.subr.mxu0 0.0
  %2103 = vmatpush1.msra.mxu0 0.0
  %2104 = vmatprep.subr.mxu0 0.0
  %2105 = vmatpush1.msra.mxu0 0.0
  %2106 = vmatprep.subr.mxu0 0.0
  %2107 = vmatpush1.msra.mxu0 0.0
  %2108 = vmatprep.subr.mxu0 0.0
  %2109 = vmatpush1.msra.mxu0 0.0
  %2110 = vmatprep.subr.mxu0 0.0
  %2111 = vmatpush1.msra.mxu0 0.0
  %2112 = vmatprep.subr.mxu0 0.0
  %2113 = vmatpush1.msra.mxu0 0.0
  %2114 = vmatprep.subr.mxu0 0.0
  %2115 = vmatpush1.msra.mxu0 0.0
  %2116 = vmatprep.subr.mxu0 0.0
  %2117 = vmatpush1.msra.mxu0 0.0
  %2118 = vmatprep.subr.mxu0 0.0
  %2119 = vmatpush1.msra.mxu0 0.0
  %2120 = vmatprep.subr.mxu0 0.0
  %2121 = vmatpush1.msra.mxu0 0.0
  %2122 = vmatprep.subr.mxu0 0.0
  %2123 = vmatpush1.msra.mxu0 0.0
  %2124 = vmatprep.mubr.f32.mxu0 0.0
  %2125 = vmatmul.mubr.f32.gmra.mrb[0].mxu0 %v2058
  %v2126 = vpop.f32.mrb[0].mxu0
  %v2127 = vadd.f32 0.0, %v2126
  %v2128 = vpop.f32.mrb[0].mxu0
  %2129 = vdwg.mxu0
  %v2131 = vsel %vm1287, %v1978, 0
  %2133 = vmatprep.subr.mxu0 0.0
  %2134 = vmatpush1.msra.mxu0 %v1177
  %2135 = vmatprep.subr.mxu0 0.0
  %2136 = vmatpush1.msra.mxu0 0.0
  %2137 = vmatprep.subr.mxu0 0.0
  %2138 = vmatpush1.msra.mxu0 0.0
  %2139 = vmatprep.subr.mxu0 0.0
  %2140 = vmatpush1.msra.mxu0 0.0
  %2141 = vmatprep.subr.mxu0 0.0
  %2142 = vmatpush1.msra.mxu0 0.0
  %2143 = vmatprep.subr.mxu0 0.0
  %2144 = vmatpush1.msra.mxu0 0.0
  %2145 = vmatprep.subr.mxu0 0.0
  %2146 = vmatpush1.msra.mxu0 0.0
  %2147 = vmatprep.subr.mxu0 0.0
  %2148 = vmatpush1.msra.mxu0 0.0
  %2149 = vmatprep.subr.mxu0 0.0
  %2150 = vmatpush1.msra.mxu0 0.0
  %2151 = vmatprep.subr.mxu0 0.0
  %2152 = vmatpush1.msra.mxu0 0.0
  %2153 = vmatprep.subr.mxu0 0.0
  %2154 = vmatpush1.msra.mxu0 0.0
  %2155 = vmatprep.subr.mxu0 0.0
  %2156 = vmatpush1.msra.mxu0 0.0
  %2157 = vmatprep.subr.mxu0 0.0
  %2158 = vmatpush1.msra.mxu0 0.0
  %2159 = vmatprep.subr.mxu0 0.0
  %2160 = vmatpush1.msra.mxu0 0.0
  %2161 = vmatprep.subr.mxu0 0.0
  %2162 = vmatpush1.msra.mxu0 0.0
  %2163 = vmatprep.subr.mxu0 0.0
  %2164 = vmatpush1.msra.mxu0 0.0
  %2165 = vmatprep.subr.mxu0 0.0
  %2166 = vmatpush1.msra.mxu0 0.0
  %2167 = vmatprep.subr.mxu0 0.0
  %2168 = vmatpush1.msra.mxu0 0.0
  %2169 = vmatprep.subr.mxu0 0.0
  %2170 = vmatpush1.msra.mxu0 0.0
  %2171 = vmatprep.subr.mxu0 0.0
  %2172 = vmatpush1.msra.mxu0 0.0
  %2173 = vmatprep.subr.mxu0 0.0
  %2174 = vmatpush1.msra.mxu0 0.0
  %2175 = vmatprep.subr.mxu0 0.0
  %2176 = vmatpush1.msra.mxu0 0.0
  %2177 = vmatprep.subr.mxu0 0.0
  %2178 = vmatpush1.msra.mxu0 0.0
  %2179 = vmatprep.subr.mxu0 0.0
  %2180 = vmatpush1.msra.mxu0 0.0
  %2181 = vmatprep.subr.mxu0 0.0
  %2182 = vmatpush1.msra.mxu0 0.0
  %2183 = vmatprep.subr.mxu0 0.0
  %2184 = vmatpush1.msra.mxu0 0.0
  %2185 = vmatprep.subr.mxu0 0.0
  %2186 = vmatpush1.msra.mxu0 0.0
  %2187 = vmatprep.subr.mxu0 0.0
  %2188 = vmatpush1.msra.mxu0 0.0
  %2189 = vmatprep.subr.mxu0 0.0
  %2190 = vmatpush1.msra.mxu0 0.0
  %2191 = vmatprep.subr.mxu0 0.0
  %2192 = vmatpush1.msra.mxu0 0.0
  %2193 = vmatprep.subr.mxu0 0.0
  %2194 = vmatpush1.msra.mxu0 0.0
  %2195 = vmatprep.subr.mxu0 0.0
  %2196 = vmatpush1.msra.mxu0 0.0
  %2197 = vmatprep.mubr.f32.mxu0 0.0
  %2198 = vmatmul.mubr.f32.gmra.mrb[0].mxu0 %v2131
  %v2199 = vpop.f32.mrb[0].mxu0
  %v2200 = vadd.f32 0.0, %v2199
  %v2201 = vpop.f32.mrb[0].mxu0
  %2202 = vdwg.mxu0
  %v2204 = vsel %vm1287, %v1979, 0
  %2206 = vmatprep.subr.mxu0 0.0
  %2207 = vmatpush1.msra.mxu0 %v1178
  %2208 = vmatprep.subr.mxu0 0.0
  %2209 = vmatpush1.msra.mxu0 0.0
  %2210 = vmatprep.subr.mxu0 0.0
  %2211 = vmatpush1.msra.mxu0 0.0
  %2212 = vmatprep.subr.mxu0 0.0
  %2213 = vmatpush1.msra.mxu0 0.0
  %2214 = vmatprep.subr.mxu0 0.0
  %2215 = vmatpush1.msra.mxu0 0.0
  %2216 = vmatprep.subr.mxu0 0.0
  %2217 = vmatpush1.msra.mxu0 0.0
  %2218 = vmatprep.subr.mxu0 0.0
  %2219 = vmatpush1.msra.mxu0 0.0
  %2220 = vmatprep.subr.mxu0 0.0
  %2221 = vmatpush1.msra.mxu0 0.0
  %2222 = vmatprep.subr.mxu0 0.0
  %2223 = vmatpush1.msra.mxu0 0.0
  %2224 = vmatprep.subr.mxu0 0.0
  %2225 = vmatpush1.msra.mxu0 0.0
  %2226 = vmatprep.subr.mxu0 0.0
  %2227 = vmatpush1.msra.mxu0 0.0
  %2228 = vmatprep.subr.mxu0 0.0
  %2229 = vmatpush1.msra.mxu0 0.0
  %2230 = vmatprep.subr.mxu0 0.0
  %2231 = vmatpush1.msra.mxu0 0.0
  %2232 = vmatprep.subr.mxu0 0.0
  %2233 = vmatpush1.msra.mxu0 0.0
  %2234 = vmatprep.subr.mxu0 0.0
  %2235 = vmatpush1.msra.mxu0 0.0
  %2236 = vmatprep.subr.mxu0 0.0
  %2237 = vmatpush1.msra.mxu0 0.0
  %2238 = vmatprep.subr.mxu0 0.0
  %2239 = vmatpush1.msra.mxu0 0.0
  %2240 = vmatprep.subr.mxu0 0.0
  %2241 = vmatpush1.msra.mxu0 0.0
  %2242 = vmatprep.subr.mxu0 0.0
  %2243 = vmatpush1.msra.mxu0 0.0
  %2244 = vmatprep.subr.mxu0 0.0
  %2245 = vmatpush1.msra.mxu0 0.0
  %2246 = vmatprep.subr.mxu0 0.0
  %2247 = vmatpush1.msra.mxu0 0.0
  %2248 = vmatprep.subr.mxu0 0.0
  %2249 = vmatpush1.msra.mxu0 0.0
  %2250 = vmatprep.subr.mxu0 0.0
  %2251 = vmatpush1.msra.mxu0 0.0
  %2252 = vmatprep.subr.mxu0 0.0
  %2253 = vmatpush1.msra.mxu0 0.0
  %2254 = vmatprep.subr.mxu0 0.0
  %2255 = vmatpush1.msra.mxu0 0.0
  %2256 = vmatprep.subr.mxu0 0.0
  %2257 = vmatpush1.msra.mxu0 0.0
  %2258 = vmatprep.subr.mxu0 0.0
  %2259 = vmatpush1.msra.mxu0 0.0
  %2260 = vmatprep.subr.mxu0 0.0
  %2261 = vmatpush1.msra.mxu0 0.0
  %2262 = vmatprep.subr.mxu0 0.0
  %2263 = vmatpush1.msra.mxu0 0.0
  %2264 = vmatprep.subr.mxu0 0.0
  %2265 = vmatpush1.msra.mxu0 0.0
  %2266 = vmatprep.subr.mxu0 0.0
  %2267 = vmatpush1.msra.mxu0 0.0
  %2268 = vmatprep.subr.mxu0 0.0
  %2269 = vmatpush1.msra.mxu0 0.0
  %2270 = vmatprep.mubr.f32.mxu0 0.0
  %2271 = vmatmul.mubr.f32.gmra.mrb[0].mxu0 %v2204
  %v2272 = vpop.f32.mrb[0].mxu0
  %v2273 = vadd.f32 0.0, %v2272
  %v2274 = vpop.f32.mrb[0].mxu0
  %2275 = vdwg.mxu0
  %v2277 = vsel %vm1287, %v1980, 0
  %2279 = vmatprep.subr.mxu0 0.0
  %2280 = vmatpush1.msra.mxu0 %v1243
  %2281 = vmatprep.subr.mxu0 0.0
  %2282 = vmatpush1.msra.mxu0 0.0
  %2283 = vmatprep.subr.mxu0 0.0
  %2284 = vmatpush1.msra.mxu0 0.0
  %2285 = vmatprep.subr.mxu0 0.0
  %2286 = vmatpush1.msra.mxu0 0.0
  %2287 = vmatprep.subr.mxu0 0.0
  %2288 = vmatpush1.msra.mxu0 0.0
  %2289 = vmatprep.subr.mxu0 0.0
  %2290 = vmatpush1.msra.mxu0 0.0
  %2291 = vmatprep.subr.mxu0 0.0
  %2292 = vmatpush1.msra.mxu0 0.0
  %2293 = vmatprep.subr.mxu0 0.0
  %2294 = vmatpush1.msra.mxu0 0.0
  %2295 = vmatprep.subr.mxu0 0.0
  %2296 = vmatpush1.msra.mxu0 0.0
  %2297 = vmatprep.subr.mxu0 0.0
  %2298 = vmatpush1.msra.mxu0 0.0
  %2299 = vmatprep.subr.mxu0 0.0
  %2300 = vmatpush1.msra.mxu0 0.0
  %2301 = vmatprep.subr.mxu0 0.0
  %2302 = vmatpush1.msra.mxu0 0.0
  %2303 = vmatprep.subr.mxu0 0.0
  %2304 = vmatpush1.msra.mxu0 0.0
  %2305 = vmatprep.subr.mxu0 0.0
  %2306 = vmatpush1.msra.mxu0 0.0
  %2307 = vmatprep.subr.mxu0 0.0
  %2308 = vmatpush1.msra.mxu0 0.0
  %2309 = vmatprep.subr.mxu0 0.0
  %2310 = vmatpush1.msra.mxu0 0.0
  %2311 = vmatprep.subr.mxu0 0.0
  %2312 = vmatpush1.msra.mxu0 0.0
  %2313 = vmatprep.subr.mxu0 0.0
  %2314 = vmatpush1.msra.mxu0 0.0
  %2315 = vmatprep.subr.mxu0 0.0
  %2316 = vmatpush1.msra.mxu0 0.0
  %2317 = vmatprep.subr.mxu0 0.0
  %2318 = vmatpush1.msra.mxu0 0.0
  %2319 = vmatprep.subr.mxu0 0.0
  %2320 = vmatpush1.msra.mxu0 0.0
  %2321 = vmatprep.subr.mxu0 0.0
  %2322 = vmatpush1.msra.mxu0 0.0
  %2323 = vmatprep.subr.mxu0 0.0
  %2324 = vmatpush1.msra.mxu0 0.0
  %2325 = vmatprep.subr.mxu0 0.0
  %2326 = vmatpush1.msra.mxu0 0.0
  %2327 = vmatprep.subr.mxu0 0.0
  %2328 = vmatpush1.msra.mxu0 0.0
  %2329 = vmatprep.subr.mxu0 0.0
  %2330 = vmatpush1.msra.mxu0 0.0
  %2331 = vmatprep.subr.mxu0 0.0
  %2332 = vmatpush1.msra.mxu0 0.0
  %2333 = vmatprep.subr.mxu0 0.0
  %2334 = vmatpush1.msra.mxu0 0.0
  %2335 = vmatprep.subr.mxu0 0.0
  %2336 = vmatpush1.msra.mxu0 0.0
  %2337 = vmatprep.subr.mxu0 0.0
  %2338 = vmatpush1.msra.mxu0 0.0
  %2339 = vmatprep.subr.mxu0 0.0
  %2340 = vmatpush1.msra.mxu0 0.0
  %2341 = vmatprep.subr.mxu0 0.0
  %2342 = vmatpush1.msra.mxu0 0.0
  %2343 = vmatprep.mubr.f32.mxu0 0.0
  %2344 = vmatmul.mubr.f32.gmra.mrb[0].mxu0 %v2277
  %v2345 = vpop.f32.mrb[0].mxu0
  %v2346 = vadd.f32 0.0, %v2345
  %v2347 = vpop.f32.mrb[0].mxu0
  %2348 = vdwg.mxu0
  %v2350 = vsel %vm1287, %v1981, 0
  %2352 = vmatprep.subr.mxu0 0.0
  %2353 = vmatpush1.msra.mxu0 %v1244
  %2354 = vmatprep.subr.mxu0 0.0
  %2355 = vmatpush1.msra.mxu0 0.0
  %2356 = vmatprep.subr.mxu0 0.0
  %2357 = vmatpush1.msra.mxu0 0.0
  %2358 = vmatprep.subr.mxu0 0.0
  %2359 = vmatpush1.msra.mxu0 0.0
  %2360 = vmatprep.subr.mxu0 0.0
  %2361 = vmatpush1.msra.mxu0 0.0
  %2362 = vmatprep.subr.mxu0 0.0
  %2363 = vmatpush1.msra.mxu0 0.0
  %2364 = vmatprep.subr.mxu0 0.0
  %2365 = vmatpush1.msra.mxu0 0.0
  %2366 = vmatprep.subr.mxu0 0.0
  %2367 = vmatpush1.msra.mxu0 0.0
  %2368 = vmatprep.subr.mxu0 0.0
  %2369 = vmatpush1.msra.mxu0 0.0
  %2370 = vmatprep.subr.mxu0 0.0
  %2371 = vmatpush1.msra.mxu0 0.0
  %2372 = vmatprep.subr.mxu0 0.0
  %2373 = vmatpush1.msra.mxu0 0.0
  %2374 = vmatprep.subr.mxu0 0.0
  %2375 = vmatpush1.msra.mxu0 0.0
  %2376 = vmatprep.subr.mxu0 0.0
  %2377 = vmatpush1.msra.mxu0 0.0
  %2378 = vmatprep.subr.mxu0 0.0
  %2379 = vmatpush1.msra.mxu0 0.0
  %2380 = vmatprep.subr.mxu0 0.0
  %2381 = vmatpush1.msra.mxu0 0.0
  %2382 = vmatprep.subr.mxu0 0.0
  %2383 = vmatpush1.msra.mxu0 0.0
  %2384 = vmatprep.subr.mxu0 0.0
  %2385 = vmatpush1.msra.mxu0 0.0
  %2386 = vmatprep.subr.mxu0 0.0
  %2387 = vmatpush1.msra.mxu0 0.0
  %2388 = vmatprep.subr.mxu0 0.0
  %2389 = vmatpush1.msra.mxu0 0.0
  %2390 = vmatprep.subr.mxu0 0.0
  %2391 = vmatpush1.msra.mxu0 0.0
  %2392 = vmatprep.subr.mxu0 0.0
  %2393 = vmatpush1.msra.mxu0 0.0
  %2394 = vmatprep.subr.mxu0 0.0
  %2395 = vmatpush1.msra.mxu0 0.0
  %2396 = vmatprep.subr.mxu0 0.0
  %2397 = vmatpush1.msra.mxu0 0.0
  %2398 = vmatprep.subr.mxu0 0.0
  %2399 = vmatpush1.msra.mxu0 0.0
  %2400 = vmatprep.subr.mxu0 0.0
  %2401 = vmatpush1.msra.mxu0 0.0
  %2402 = vmatprep.subr.mxu0 0.0
  %2403 = vmatpush1.msra.mxu0 0.0
  %2404 = vmatprep.subr.mxu0 0.0
  %2405 = vmatpush1.msra.mxu0 0.0
  %2406 = vmatprep.subr.mxu0 0.0
  %2407 = vmatpush1.msra.mxu0 0.0
  %2408 = vmatprep.subr.mxu0 0.0
  %2409 = vmatpush1.msra.mxu0 0.0
  %2410 = vmatprep.subr.mxu0 0.0
  %2411 = vmatpush1.msra.mxu0 0.0
  %2412 = vmatprep.subr.mxu0 0.0
  %2413 = vmatpush1.msra.mxu0 0.0
  %2414 = vmatprep.subr.mxu0 0.0
  %2415 = vmatpush1.msra.mxu0 0.0
  %2416 = vmatprep.mubr.f32.mxu0 0.0
  %2417 = vmatmul.mubr.f32.gmra.mrb[0].mxu0 %v2350
  %v2418 = vpop.f32.mrb[0].mxu0
  %v2419 = vadd.f32 0.0, %v2418
  %v2420 = vpop.f32.mrb[0].mxu0
  %2421 = vdwg.mxu0
  %v2423 = vsel %vm1287, %v1982, 0
  %2425 = vmatprep.subr.mxu0 0.0
  %2426 = vmatpush1.msra.mxu0 %v1245
  %2427 = vmatprep.subr.mxu0 0.0
  %2428 = vmatpush1.msra.mxu0 0.0
  %2429 = vmatprep.subr.mxu0 0.0
  %2430 = vmatpush1.msra.mxu0 0.0
  %2431 = vmatprep.subr.mxu0 0.0
  %2432 = vmatpush1.msra.mxu0 0.0
  %2433 = vmatprep.subr.mxu0 0.0
  %2434 = vmatpush1.msra.mxu0 0.0
  %2435 = vmatprep.subr.mxu0 0.0
  %2436 = vmatpush1.msra.mxu0 0.0
  %2437 = vmatprep.subr.mxu0 0.0
  %2438 = vmatpush1.msra.mxu0 0.0
  %2439 = vmatprep.subr.mxu0 0.0
  %2440 = vmatpush1.msra.mxu0 0.0
  %2441 = vmatprep.subr.mxu0 0.0
  %2442 = vmatpush1.msra.mxu0 0.0
  %2443 = vmatprep.subr.mxu0 0.0
  %2444 = vmatpush1.msra.mxu0 0.0
  %2445 = vmatprep.subr.mxu0 0.0
  %2446 = vmatpush1.msra.mxu0 0.0
  %2447 = vmatprep.subr.mxu0 0.0
  %2448 = vmatpush1.msra.mxu0 0.0
  %2449 = vmatprep.subr.mxu0 0.0
  %2450 = vmatpush1.msra.mxu0 0.0
  %2451 = vmatprep.subr.mxu0 0.0
  %2452 = vmatpush1.msra.mxu0 0.0
  %2453 = vmatprep.subr.mxu0 0.0
  %2454 = vmatpush1.msra.mxu0 0.0
  %2455 = vmatprep.subr.mxu0 0.0
  %2456 = vmatpush1.msra.mxu0 0.0
  %2457 = vmatprep.subr.mxu0 0.0
  %2458 = vmatpush1.msra.mxu0 0.0
  %2459 = vmatprep.subr.mxu0 0.0
  %2460 = vmatpush1.msra.mxu0 0.0
  %2461 = vmatprep.subr.mxu0 0.0
  %2462 = vmatpush1.msra.mxu0 0.0
  %2463 = vmatprep.subr.mxu0 0.0
  %2464 = vmatpush1.msra.mxu0 0.0
  %2465 = vmatprep.subr.mxu0 0.0
  %2466 = vmatpush1.msra.mxu0 0.0
  %2467 = vmatprep.subr.mxu0 0.0
  %2468 = vmatpush1.msra.mxu0 0.0
  %2469 = vmatprep.subr.mxu0 0.0
  %2470 = vmatpush1.msra.mxu0 0.0
  %2471 = vmatprep.subr.mxu0 0.0
  %2472 = vmatpush1.msra.mxu0 0.0
  %2473 = vmatprep.subr.mxu0 0.0
  %2474 = vmatpush1.msra.mxu0 0.0
  %2475 = vmatprep.subr.mxu0 0.0
  %2476 = vmatpush1.msra.mxu0 0.0
  %2477 = vmatprep.subr.mxu0 0.0
  %2478 = vmatpush1.msra.mxu0 0.0
  %2479 = vmatprep.subr.mxu0 0.0
  %2480 = vmatpush1.msra.mxu0 0.0
  %2481 = vmatprep.subr.mxu0 0.0
  %2482 = vmatpush1.msra.mxu0 0.0
  %2483 = vmatprep.subr.mxu0 0.0
  %2484 = vmatpush1.msra.mxu0 0.0
  %2485 = vmatprep.subr.mxu0 0.0
  %2486 = vmatpush1.msra.mxu0 0.0
  %2487 = vmatprep.subr.mxu0 0.0
  %2488 = vmatpush1.msra.mxu0 0.0
  %2489 = vmatprep.mubr.f32.mxu0 0.0
  %2490 = vmatmul.mubr.f32.gmra.mrb[0].mxu0 %v2423
  %v2491 = vpop.f32.mrb[0].mxu0
  %v2492 = vadd.f32 0.0, %v2491
  %v2493 = vpop.f32.mrb[0].mxu0
  %2494 = vdwg.mxu0
  %v2496 = vsel %vm1287, %v1983, 0
  %2498 = vmatprep.subr.mxu0 0.0
  %2499 = vmatpush1.msra.mxu0 %v1246
  %2500 = vmatprep.subr.mxu0 0.0
  %2501 = vmatpush1.msra.mxu0 0.0
  %2502 = vmatprep.subr.mxu0 0.0
  %2503 = vmatpush1.msra.mxu0 0.0
  %2504 = vmatprep.subr.mxu0 0.0
  %2505 = vmatpush1.msra.mxu0 0.0
  %2506 = vmatprep.subr.mxu0 0.0
  %2507 = vmatpush1.msra.mxu0 0.0
  %2508 = vmatprep.subr.mxu0 0.0
  %2509 = vmatpush1.msra.mxu0 0.0
  %2510 = vmatprep.subr.mxu0 0.0
  %2511 = vmatpush1.msra.mxu0 0.0
  %2512 = vmatprep.subr.mxu0 0.0
  %2513 = vmatpush1.msra.mxu0 0.0
  %2514 = vmatprep.subr.mxu0 0.0
  %2515 = vmatpush1.msra.mxu0 0.0
  %2516 = vmatprep.subr.mxu0 0.0
  %2517 = vmatpush1.msra.mxu0 0.0
  %2518 = vmatprep.subr.mxu0 0.0
  %2519 = vmatpush1.msra.mxu0 0.0
  %2520 = vmatprep.subr.mxu0 0.0
  %2521 = vmatpush1.msra.mxu0 0.0
  %2522 = vmatprep.subr.mxu0 0.0
  %2523 = vmatpush1.msra.mxu0 0.0
  %2524 = vmatprep.subr.mxu0 0.0
  %2525 = vmatpush1.msra.mxu0 0.0
  %2526 = vmatprep.subr.mxu0 0.0
  %2527 = vmatpush1.msra.mxu0 0.0
  %2528 = vmatprep.subr.mxu0 0.0
  %2529 = vmatpush1.msra.mxu0 0.0
  %2530 = vmatprep.subr.mxu0 0.0
  %2531 = vmatpush1.msra.mxu0 0.0
  %2532 = vmatprep.subr.mxu0 0.0
  %2533 = vmatpush1.msra.mxu0 0.0
  %2534 = vmatprep.subr.mxu0 0.0
  %2535 = vmatpush1.msra.mxu0 0.0
  %2536 = vmatprep.subr.mxu0 0.0
  %2537 = vmatpush1.msra.mxu0 0.0
  %2538 = vmatprep.subr.mxu0 0.0
  %2539 = vmatpush1.msra.mxu0 0.0
  %2540 = vmatprep.subr.mxu0 0.0
  %2541 = vmatpush1.msra.mxu0 0.0
  %2542 = vmatprep.subr.mxu0 0.0
  %2543 = vmatpush1.msra.mxu0 0.0
  %2544 = vmatprep.subr.mxu0 0.0
  %2545 = vmatpush1.msra.mxu0 0.0
  %2546 = vmatprep.subr.mxu0 0.0
  %2547 = vmatpush1.msra.mxu0 0.0
  %2548 = vmatprep.subr.mxu0 0.0
  %2549 = vmatpush1.msra.mxu0 0.0
  %2550 = vmatprep.subr.mxu0 0.0
  %2551 = vmatpush1.msra.mxu0 0.0
  %2552 = vmatprep.subr.mxu0 0.0
  %2553 = vmatpush1.msra.mxu0 0.0
  %2554 = vmatprep.subr.mxu0 0.0
  %2555 = vmatpush1.msra.mxu0 0.0
  %2556 = vmatprep.subr.mxu0 0.0
  %2557 = vmatpush1.msra.mxu0 0.0
  %2558 = vmatprep.subr.mxu0 0.0
  %2559 = vmatpush1.msra.mxu0 0.0
  %2560 = vmatprep.subr.mxu0 0.0
  %2561 = vmatpush1.msra.mxu0 0.0
  %2562 = vmatprep.mubr.f32.mxu0 0.0
  %2563 = vmatmul.mubr.f32.gmra.mrb[0].mxu0 %v2496
  %v2564 = vpop.f32.mrb[0].mxu0
  %v2565 = vadd.f32 0.0, %v2564
  %v2566 = vpop.f32.mrb[0].mxu0
  %2567 = vdwg.mxu0
  %v2568 = vcombine.low %v2054, %v2200
  %v2569 = vcombine.high %v2054, %v2200
  %v2571 = vunpack.c.l.s4 1983009808
  %v2572 = vunpack.c.0.s8 %v2571
  %v2573 = vlaneseq
  %v2574 = vshrl.u32 %v2573, 7
  %v2575 = vsub.s32 %v2572, %v2574
  %v2576 = vrot.slane %v2568, %v2575
  %v2578 = vunpack.c.l.s4 1983009808
  %v2579 = vunpack.c.0.s8 %v2578
  %v2580 = vlaneseq
  %v2581 = vshrl.u32 %v2580, 7
  %v2582 = vsub.s32 %v2579, %v2581
  %v2583 = vrot.slane %v2569, %v2582
  %v2584 = vcombine.low %v2127, %v2273
  %v2585 = vcombine.high %v2127, %v2273
  %v2587 = vunpack.c.l.s4 1983009808
  %v2588 = vunpack.c.0.s8 %v2587
  %v2589 = vlaneseq
  %v2590 = vshrl.u32 %v2589, 7
  %v2591 = vsub.s32 %v2588, %v2590
  %v2592 = vrot.slane %v2584, %v2591
  %v2594 = vunpack.c.l.s4 1983009808
  %v2595 = vunpack.c.0.s8 %v2594
  %v2596 = vlaneseq
  %v2597 = vshrl.u32 %v2596, 7
  %v2598 = vsub.s32 %v2595, %v2597
  %v2599 = vrot.slane %v2585, %v2598
  %v2600 = vcombine.low %v2576, %v2592
  %v2601 = vcombine.high %v2576, %v2592
  %v2603 = vunpack.c.l.s4 1934713408
  %v2604 = vunpack.c.0.s8 %v2603
  %v2605 = vlaneseq
  %v2606 = vshrl.u32 %v2605, 7
  %v2607 = vsub.s32 %v2604, %v2606
  %v2608 = vrot.slane %v2600, %v2607
  %v2610 = vunpack.c.l.s4 1934713408
  %v2611 = vunpack.c.0.s8 %v2610
  %v2612 = vlaneseq
  %v2613 = vshrl.u32 %v2612, 7
  %v2614 = vsub.s32 %v2611, %v2613
  %v2615 = vrot.slane %v2601, %v2614
  %v2616 = vcombine.low %v2583, %v2599
  %v2617 = vcombine.high %v2583, %v2599
  %v2619 = vunpack.c.l.s4 1934713408
  %v2620 = vunpack.c.0.s8 %v2619
  %v2621 = vlaneseq
  %v2622 = vshrl.u32 %v2621, 7
  %v2623 = vsub.s32 %v2620, %v2622
  %v2624 = vrot.slane %v2616, %v2623
  %v2626 = vunpack.c.l.s4 1934713408
  %v2627 = vunpack.c.0.s8 %v2626
  %v2628 = vlaneseq
  %v2629 = vshrl.u32 %v2628, 7
  %v2630 = vsub.s32 %v2627, %v2629
  %v2631 = vrot.slane %v2617, %v2630
  %v2632 = vcombine.high %v2608, 0.0
  %v2633 = vcombine.high %v2615, 0.0
  %v2634 = vcombine.high %v2624, 0.0
  %v2635 = vcombine.high %v2631, 0.0
  %v2636 = vcombine.low %v2346, %v2492
  %v2637 = vcombine.high %v2346, %v2492
  %v2639 = vunpack.c.l.s4 1983009808
  %v2640 = vunpack.c.0.s8 %v2639
  %v2641 = vlaneseq
  %v2642 = vshrl.u32 %v2641, 7
  %v2643 = vsub.s32 %v2640, %v2642
  %v2644 = vrot.slane %v2636, %v2643
  %v2646 = vunpack.c.l.s4 1983009808
  %v2647 = vunpack.c.0.s8 %v2646
  %v2648 = vlaneseq
  %v2649 = vshrl.u32 %v2648, 7
  %v2650 = vsub.s32 %v2647, %v2649
  %v2651 = vrot.slane %v2637, %v2650
  %v2652 = vcombine.low %v2419, %v2565
  %v2653 = vcombine.high %v2419, %v2565
  %v2655 = vunpack.c.l.s4 1983009808
  %v2656 = vunpack.c.0.s8 %v2655
  %v2657 = vlaneseq
  %v2658 = vshrl.u32 %v2657, 7
  %v2659 = vsub.s32 %v2656, %v2658
  %v2660 = vrot.slane %v2652, %v2659
  %v2662 = vunpack.c.l.s4 1983009808
  %v2663 = vunpack.c.0.s8 %v2662
  %v2664 = vlaneseq
  %v2665 = vshrl.u32 %v2664, 7
  %v2666 = vsub.s32 %v2663, %v2665
  %v2667 = vrot.slane %v2653, %v2666
  %v2668 = vcombine.low %v2644, %v2660
  %v2669 = vcombine.high %v2644, %v2660
  %v2671 = vunpack.c.l.s4 1934713408
  %v2672 = vunpack.c.0.s8 %v2671
  %v2673 = vlaneseq
  %v2674 = vshrl.u32 %v2673, 7
  %v2675 = vsub.s32 %v2672, %v2674
  %v2676 = vrot.slane %v2668, %v2675
  %v2678 = vunpack.c.l.s4 1934713408
  %v2679 = vunpack.c.0.s8 %v2678
  %v2680 = vlaneseq
  %v2681 = vshrl.u32 %v2680, 7
  %v2682 = vsub.s32 %v2679, %v2681
  %v2683 = vrot.slane %v2669, %v2682
  %v2684 = vcombine.low %v2651, %v2667
  %v2685 = vcombine.high %v2651, %v2667
  %v2687 = vunpack.c.l.s4 1934713408
  %v2688 = vunpack.c.0.s8 %v2687
  %v2689 = vlaneseq
  %v2690 = vshrl.u32 %v2689, 7
  %v2691 = vsub.s32 %v2688, %v2690
  %v2692 = vrot.slane %v2684, %v2691
  %v2694 = vunpack.c.l.s4 1934713408
  %v2695 = vunpack.c.0.s8 %v2694
  %v2696 = vlaneseq
  %v2697 = vshrl.u32 %v2696, 7
  %v2698 = vsub.s32 %v2695, %v2697
  %v2699 = vrot.slane %v2685, %v2698
  %v2700 = vcombine.high %v2676, 0.0
  %v2701 = vcombine.high %v2683, 0.0
  %v2702 = vcombine.high %v2692, 0.0
  %v2703 = vcombine.high %v2699, 0.0
  %v2704 = vcombine.low %v2608, %v2615
  %v2706 = vunpack.c.l.s4 1983009808
  %v2707 = vunpack.c.0.s8 %v2706
  %v2708 = vlaneseq
  %v2709 = vshrl.u32 %v2708, 7
  %v2710 = vsub.s32 %v2707, %v2709
  %v2711 = vrot.slane %v2704, %v2710
  %v2712 = vcombine.low %v2632, %v2633
  %v2714 = vunpack.c.l.s4 1983009808
  %v2715 = vunpack.c.0.s8 %v2714
  %v2716 = vlaneseq
  %v2717 = vshrl.u32 %v2716, 7
  %v2718 = vsub.s32 %v2715, %v2717
  %v2719 = vrot.slane %v2712, %v2718
  %v2720 = vcombine.low %v2624, %v2631
  %v2722 = vunpack.c.l.s4 1983009808
  %v2723 = vunpack.c.0.s8 %v2722
  %v2724 = vlaneseq
  %v2725 = vshrl.u32 %v2724, 7
  %v2726 = vsub.s32 %v2723, %v2725
  %v2727 = vrot.slane %v2720, %v2726
  %v2728 = vcombine.low %v2634, %v2635
  %v2730 = vunpack.c.l.s4 1983009808
  %v2731 = vunpack.c.0.s8 %v2730
  %v2732 = vlaneseq
  %v2733 = vshrl.u32 %v2732, 7
  %v2734 = vsub.s32 %v2731, %v2733
  %v2735 = vrot.slane %v2728, %v2734
  %v2736 = vcombine.low %v2711, %v2719
  %v2737 = vcombine.high %v2711, %v2719
  %v2739 = vunpack.c.l.s4 1934713408
  %v2740 = vunpack.c.0.s8 %v2739
  %v2741 = vlaneseq
  %v2742 = vshrl.u32 %v2741, 7
  %v2743 = vsub.s32 %v2740, %v2742
  %v2744 = vrot.slane %v2736, %v2743
  %v2746 = vunpack.c.l.s4 1934713408
  %v2747 = vunpack.c.0.s8 %v2746
  %v2748 = vlaneseq
  %v2749 = vshrl.u32 %v2748, 7
  %v2750 = vsub.s32 %v2747, %v2749
  %v2751 = vrot.slane %v2737, %v2750
  %v2752 = vcombine.low %v2727, %v2735
  %v2753 = vcombine.high %v2727, %v2735
  %v2755 = vunpack.c.l.s4 1934713408
  %v2756 = vunpack.c.0.s8 %v2755
  %v2757 = vlaneseq
  %v2758 = vshrl.u32 %v2757, 7
  %v2759 = vsub.s32 %v2756, %v2758
  %v2760 = vrot.slane %v2752, %v2759
  %v2762 = vunpack.c.l.s4 1934713408
  %v2763 = vunpack.c.0.s8 %v2762
  %v2764 = vlaneseq
  %v2765 = vshrl.u32 %v2764, 7
  %v2766 = vsub.s32 %v2763, %v2765
  %v2767 = vrot.slane %v2753, %v2766
  %v2768 = vcombine.low %v2744, %v2760
  %v2769 = vcombine.high %v2744, %v2760
  %v2770 = vcombine.low %v2751, %v2767
  %v2771 = vcombine.high %v2751, %v2767
  %v2772 = vcombine.low %v2676, %v2683
  %v2774 = vunpack.c.l.s4 1983009808
  %v2775 = vunpack.c.0.s8 %v2774
  %v2776 = vlaneseq
  %v2777 = vshrl.u32 %v2776, 7
  %v2778 = vsub.s32 %v2775, %v2777
  %v2779 = vrot.slane %v2772, %v2778
  %v2780 = vcombine.low %v2700, %v2701
  %v2782 = vunpack.c.l.s4 1983009808
  %v2783 = vunpack.c.0.s8 %v2782
  %v2784 = vlaneseq
  %v2785 = vshrl.u32 %v2784, 7
  %v2786 = vsub.s32 %v2783, %v2785
  %v2787 = vrot.slane %v2780, %v2786
  %v2788 = vcombine.low %v2692, %v2699
  %v2790 = vunpack.c.l.s4 1983009808
  %v2791 = vunpack.c.0.s8 %v2790
  %v2792 = vlaneseq
  %v2793 = vshrl.u32 %v2792, 7
  %v2794 = vsub.s32 %v2791, %v2793
  %v2795 = vrot.slane %v2788, %v2794
  %v2796 = vcombine.low %v2702, %v2703
  %v2798 = vunpack.c.l.s4 1983009808
  %v2799 = vunpack.c.0.s8 %v2798
  %v2800 = vlaneseq
  %v2801 = vshrl.u32 %v2800, 7
  %v2802 = vsub.s32 %v2799, %v2801
  %v2803 = vrot.slane %v2796, %v2802
  %v2804 = vcombine.low %v2779, %v2787
  %v2805 = vcombine.high %v2779, %v2787
  %v2807 = vunpack.c.l.s4 1934713408
  %v2808 = vunpack.c.0.s8 %v2807
  %v2809 = vlaneseq
  %v2810 = vshrl.u32 %v2809, 7
  %v2811 = vsub.s32 %v2808, %v2810
  %v2812 = vrot.slane %v2804, %v2811
  %v2814 = vunpack.c.l.s4 1934713408
  %v2815 = vunpack.c.0.s8 %v2814
  %v2816 = vlaneseq
  %v2817 = vshrl.u32 %v2816, 7
  %v2818 = vsub.s32 %v2815, %v2817
  %v2819 = vrot.slane %v2805, %v2818
  %v2820 = vcombine.low %v2795, %v2803
  %v2821 = vcombine.high %v2795, %v2803
  %v2823 = vunpack.c.l.s4 1934713408
  %v2824 = vunpack.c.0.s8 %v2823
  %v2825 = vlaneseq
  %v2826 = vshrl.u32 %v2825, 7
  %v2827 = vsub.s32 %v2824, %v2826
  %v2828 = vrot.slane %v2820, %v2827
  %v2830 = vunpack.c.l.s4 1934713408
  %v2831 = vunpack.c.0.s8 %v2830
  %v2832 = vlaneseq
  %v2833 = vshrl.u32 %v2832, 7
  %v2834 = vsub.s32 %v2831, %v2833
  %v2835 = vrot.slane %v2821, %v2834
  %v2836 = vcombine.low %v2812, %v2828
  %v2837 = vcombine.high %v2812, %v2828
  %v2838 = vcombine.low %v2819, %v2835
  %v2839 = vcombine.high %v2819, %v2835
  %2842 = vrot.lane.b32.xlu0 %v2769, 8
  %v2843 = vpop.permute.xlu0 %2842
  %2844 = vrot.lane.b32.xlu0 %v2837, 8
  %v2845 = vpop.permute.xlu0 %2844
  %2850 = vrot.lane.b32.xlu0 %v2770, 16
  %v2851 = vpop.permute.xlu0 %2850
  %2852 = vrot.lane.b32.xlu0 %v2838, 16
  %v2853 = vpop.permute.xlu0 %2852
  %2858 = vrot.lane.b32.xlu0 %v2771, 24
  %v2859 = vpop.permute.xlu0 %2858
  %2860 = vrot.lane.b32.xlu0 %v2839, 24
  %v2861 = vpop.permute.xlu0 %2860
  %v2864 = vsel %vm1287, %v2768, %v2843
  %v2865 = vsel %vm1287, %v2836, %v2845
  %vm2866 = vcmask 130048
  %v2867 = vsel %vm2866, %v2864, %v2851
  %v2868 = vsel %vm2866, %v2865, %v2853
  %vm2869 = vcmask 195584
  %v2870 = vsel %vm2869, %v2867, %v2859
  %v2871 = vsel %vm2869, %v2868, %v2861
  %v2872 = vld [vmem:[%s6] sm:$0xff]
  %v2873 = vld [vmem:[%s6 + $0x8] sm:$0xff]
  %v2874 = vld [vmem:[%s6 + $0x10] sm:$0xff]
  %v2875 = vld [vmem:[%s6 + $0x18] sm:$0xff]
  %v2876 = vlaneseq
  %v2877 = vshrl.u32 %v2876, 7
  %v2878 = vsub.s32 1, %v2877
  %v2879 = vrot.slane %v273, %v2878
  %v2881 = vsel %vm150, %v2870, 0
  %v2884 = vsel %vm150, %v2871, 0
  %2886 = vmatprep.subr.mxu0 0.0
  %2887 = vmatpush1.msra.mxu0 %v2872
  %2888 = vmatprep.subr.mxu0 0.0
  %2889 = vmatpush1.msra.mxu0 %v2873
  %2890 = vmatprep.subr.mxu0 0.0
  %2891 = vmatpush1.msra.mxu0 %v2874
  %2892 = vmatprep.subr.mxu0 0.0
  %2893 = vmatpush1.msra.mxu0 %v2875
  %2894 = vmatprep.subr.mxu0 0.0
  %2895 = vmatpush1.msra.mxu0 0.0
  %2896 = vmatprep.subr.mxu0 0.0
  %2897 = vmatpush1.msra.mxu0 0.0
  %2898 = vmatprep.subr.mxu0 0.0
  %2899 = vmatpush1.msra.mxu0 0.0
  %2900 = vmatprep.subr.mxu0 0.0
  %2901 = vmatpush1.msra.mxu0 0.0
  %2902 = vmatprep.subr.mxu0 0.0
  %2903 = vmatpush1.msra.mxu0 0.0
  %2904 = vmatprep.subr.mxu0 0.0
  %2905 = vmatpush1.msra.mxu0 0.0
  %2906 = vmatprep.subr.mxu0 0.0
  %2907 = vmatpush1.msra.mxu0 0.0
  %2908 = vmatprep.subr.mxu0 0.0
  %2909 = vmatpush1.msra.mxu0 0.0
  %2910 = vmatprep.subr.mxu0 0.0
  %2911 = vmatpush1.msra.mxu0 0.0
  %2912 = vmatprep.subr.mxu0 0.0
  %2913 = vmatpush1.msra.mxu0 0.0
  %2914 = vmatprep.subr.mxu0 0.0
  %2915 = vmatpush1.msra.mxu0 0.0
  %2916 = vmatprep.subr.mxu0 0.0
  %2917 = vmatpush1.msra.mxu0 0.0
  %2918 = vmatprep.subr.mxu0 0.0
  %2919 = vmatpush1.msra.mxu0 0.0
  %2920 = vmatprep.subr.mxu0 0.0
  %2921 = vmatpush1.msra.mxu0 0.0
  %2922 = vmatprep.subr.mxu0 0.0
  %2923 = vmatpush1.msra.mxu0 0.0
  %2924 = vmatprep.subr.mxu0 0.0
  %2925 = vmatpush1.msra.mxu0 0.0
  %2926 = vmatprep.subr.mxu0 0.0
  %2927 = vmatpush1.msra.mxu0 0.0
  %2928 = vmatprep.subr.mxu0 0.0
  %2929 = vmatpush1.msra.mxu0 0.0
  %2930 = vmatprep.subr.mxu0 0.0
  %2931 = vmatpush1.msra.mxu0 0.0
  %2932 = vmatprep.subr.mxu0 0.0
  %2933 = vmatpush1.msra.mxu0 0.0
  %2934 = vmatprep.subr.mxu0 0.0
  %2935 = vmatpush1.msra.mxu0 0.0
  %2936 = vmatprep.subr.mxu0 0.0
  %2937 = vmatpush1.msra.mxu0 0.0
  %2938 = vmatprep.subr.mxu0 0.0
  %2939 = vmatpush1.msra.mxu0 0.0
  %2940 = vmatprep.subr.mxu0 0.0
  %2941 = vmatpush1.msra.mxu0 0.0
  %2942 = vmatprep.subr.mxu0 0.0
  %2943 = vmatpush1.msra.mxu0 0.0
  %2944 = vmatprep.subr.mxu0 0.0
  %2945 = vmatpush1.msra.mxu0 0.0
  %2946 = vmatprep.subr.mxu0 0.0
  %2947 = vmatpush1.msra.mxu0 0.0
  %2948 = vmatprep.subr.mxu0 0.0
  %2949 = vmatpush1.msra.mxu0 0.0
  %2950 = vmatprep.mubr.f32.mxu0 0.0
  %2951 = vmatmul.mubr.f32.gmra.mrb[0].mxu0 %v2881
  %v2952 = vpop.f32.mrb[0].mxu0
  %v2953 = vadd.f32 %v2879, %v2952
  %v2954 = vpop.f32.mrb[0].mxu0
  %2955 = vmatprep.mubr.f32.mxu0 0.0
  %2956 = vmatmul.mubr.f32.gmra.mrb[0].mxu0 %v2884
  %v2957 = vpop.f32.mrb[0].mxu0
  %v2958 = vadd.f32 %v2879, %v2957
  %v2959 = vpop.f32.mrb[0].mxu0
  %2960 = vdwg.mxu0
  %v2961 = vadd.f32 %v188, %v2953
  %v2962 = vadd.f32 %v189, %v2958
  %v2963 = vsel %vm150, %v2961, 0.0
  %2964 = vadd.xlane.f32.xlu0 %v2963
  %v2965 = vpop.xlane.xlu0 %2964
  %v2966 = vsel %vm150, %v2962, 0.0
  %2967 = vadd.xlane.f32.xlu0 %v2966
  %v2968 = vpop.xlane.xlu0 %2967
  %v2969 = vmul.f32 %v2965, %v157
  %v2970 = vmul.f32 %v2968, %v157
  %v2971 = vsub.f32 %v2961, %v2969
  %v2972 = vsub.f32 %v2962, %v2970
  %v2973 = vmul.f32 %v2971, %v2971
  %v2974 = vmul.f32 %v2972, %v2972
  %v2975 = vsel %vm150, %v2973, 0.0
  %2976 = vadd.xlane.f32.xlu0 %v2975
  %v2977 = vpop.xlane.xlu0 %2976
  %v2978 = vsel %vm150, %v2974, 0.0
  %2979 = vadd.xlane.f32.xlu0 %v2978
  %v2980 = vpop.xlane.xlu0 %2979
  %v2981 = vmul.f32 %v2977, %v157
  %v2982 = vmul.f32 %v2980, %v157
  %v2983 = vadd.f32 %v2981, 1e-05
  %v2984 = vadd.f32 %v2982, 1e-05
  %v2985 = vrsqrt.pop %v2983
  %v2986 = vrsqrt.pop %v2984
  %v2987 = vmul.f32 %v2971, %v2985
  %v2988 = vmul.f32 %v2972, %v2986
  %v2989 = vlaneseq
  %v2990 = vshrl.u32 %v2989, 7
  %v2991 = vsub.s32 2, %v2990
  %v2992 = vrot.slane %v273, %v2991
  %v2993 = vmul.f32 %v2987, %v2992
  %v2994 = vmul.f32 %v2988, %v2992
  %v2995 = vlaneseq
  %v2996 = vshrl.u32 %v2995, 7
  %v2997 = vsub.s32 3, %v2996
  %v2998 = vrot.slane %v273, %v2997
  %v2999 = vadd.f32 %v2993, %v2998
  %v3000 = vadd.f32 %v2994, %v2998
  %v3001 = vld [vmem:[%s7] sm:$0xff]
  %v3002 = vld [vmem:[%s7 + $0x8] sm:$0xff]
  %v3003 = vld [vmem:[%s7 + $0x10] sm:$0xff]
  %v3004 = vld [vmem:[%s7 + $0x18] sm:$0xff]
  %v3005 = vlaneseq
  %v3006 = vshrl.u32 %v3005, 7
  %v3007 = vsub.s32 4, %v3006
  %v3008 = vrot.slane %v273, %v3007
  %v3010 = vsel %vm150, %v2999, 0
  %v3013 = vsel %vm150, %v3000, 0
  %3015 = vmatprep.subr.mxu0 0.0
  %3016 = vmatpush1.msra.mxu0 %v3001
  %3017 = vmatprep.subr.mxu0 0.0
  %3018 = vmatpush1.msra.mxu0 %v3002
  %3019 = vmatprep.subr.mxu0 0.0
  %3020 = vmatpush1.msra.mxu0 %v3003
  %3021 = vmatprep.subr.mxu0 0.0
  %3022 = vmatpush1.msra.mxu0 %v3004
  %3023 = vmatprep.subr.mxu0 0.0
  %3024 = vmatpush1.msra.mxu0 0.0
  %3025 = vmatprep.subr.mxu0 0.0
  %3026 = vmatpush1.msra.mxu0 0.0
  %3027 = vmatprep.subr.mxu0 0.0
  %3028 = vmatpush1.msra.mxu0 0.0
  %3029 = vmatprep.subr.mxu0 0.0
  %3030 = vmatpush1.msra.mxu0 0.0
  %3031 = vmatprep.subr.mxu0 0.0
  %3032 = vmatpush1.msra.mxu0 0.0
  %3033 = vmatprep.subr.mxu0 0.0
  %3034 = vmatpush1.msra.mxu0 0.0
  %3035 = vmatprep.subr.mxu0 0.0
  %3036 = vmatpush1.msra.mxu0 0.0
  %3037 = vmatprep.subr.mxu0 0.0
  %3038 = vmatpush1.msra.mxu0 0.0
  %3039 = vmatprep.subr.mxu0 0.0
  %3040 = vmatpush1.msra.mxu0 0.0
  %3041 = vmatprep.subr.mxu0 0.0
  %3042 = vmatpush1.msra.mxu0 0.0
  %3043 = vmatprep.subr.mxu0 0.0
  %3044 = vmatpush1.msra.mxu0 0.0
  %3045 = vmatprep.subr.mxu0 0.0
  %3046 = vmatpush1.msra.mxu0 0.0
  %3047 = vmatprep.subr.mxu0 0.0
  %3048 = vmatpush1.msra.mxu0 0.0
  %3049 = vmatprep.subr.mxu0 0.0
  %3050 = vmatpush1.msra.mxu0 0.0
  %3051 = vmatprep.subr.mxu0 0.0
  %3052 = vmatpush1.msra.mxu0 0.0
  %3053 = vmatprep.subr.mxu0 0.0
  %3054 = vmatpush1.msra.mxu0 0.0
  %3055 = vmatprep.subr.mxu0 0.0
  %3056 = vmatpush1.msra.mxu0 0.0
  %3057 = vmatprep.subr.mxu0 0.0
  %3058 = vmatpush1.msra.mxu0 0.0
  %3059 = vmatprep.subr.mxu0 0.0
  %3060 = vmatpush1.msra.mxu0 0.0
  %3061 = vmatprep.subr.mxu0 0.0
  %3062 = vmatpush1.msra.mxu0 0.0
  %3063 = vmatprep.subr.mxu0 0.0
  %3064 = vmatpush1.msra.mxu0 0.0
  %3065 = vmatprep.subr.mxu0 0.0
  %3066 = vmatpush1.msra.mxu0 0.0
  %3067 = vmatprep.subr.mxu0 0.0
  %3068 = vmatpush1.msra.mxu0 0.0
  %3069 = vmatprep.subr.mxu0 0.0
  %3070 = vmatpush1.msra.mxu0 0.0
  %3071 = vmatprep.subr.mxu0 0.0
  %3072 = vmatpush1.msra.mxu0 0.0
  %3073 = vmatprep.subr.mxu0 0.0
  %3074 = vmatpush1.msra.mxu0 0.0
  %3075 = vmatprep.subr.mxu0 0.0
  %3076 = vmatpush1.msra.mxu0 0.0
  %3077 = vmatprep.subr.mxu0 0.0
  %3078 = vmatpush1.msra.mxu0 0.0
  %3079 = vmatprep.mubr.f32.mxu0 0.0
  %3080 = vmatmul.mubr.f32.gmra.mrb[0].mxu0 %v3010
  %v3081 = vpop.f32.mrb[0].mxu0
  %v3082 = vadd.f32 %v3008, %v3081
  %v3083 = vpop.f32.mrb[0].mxu0
  %3084 = vmatprep.mubr.f32.mxu0 0.0
  %3085 = vmatmul.mubr.f32.gmra.mrb[0].mxu0 %v3013
  %v3086 = vpop.f32.mrb[0].mxu0
  %v3087 = vadd.f32 %v3008, %v3086
  %v3088 = vpop.f32.mrb[0].mxu0
  %3089 = vdwg.mxu0
  %v3090 = vmul.f32 %v3082, %v3082
  %v3091 = vmul.f32 %v3087, %v3087
  %v3092 = vmul.f32 %v3082, %v3090
  %v3093 = vmul.f32 %v3087, %v3091
  %v3094 = vmul.f32 %v3092, 0.044715
  %v3095 = vmul.f32 %v3093, 0.044715
  %v3096 = vadd.f32 %v3082, %v3094
  %v3097 = vadd.f32 %v3087, %v3095
  %v3098 = vmul.f32 %v3096, 0.7978846
  %v3099 = vmul.f32 %v3097, 0.7978846
  %v3100 = vtanh.pop %v3098
  %v3101 = vtanh.pop %v3099
  %v3102 = vadd.f32 %v3100, 1.0
  %v3103 = vadd.f32 %v3101, 1.0
  %v3104 = vmul.f32 %v3102, 0.5
  %v3105 = vmul.f32 %v3103, 0.5
  %v3106 = vmul.f32 %v3082, %v3104
  %v3107 = vmul.f32 %v3087, %v3105
  %v3108 = vld [vmem:[%s8] sm:$0xff]
  %v3109 = vld [vmem:[%s8 + $0x8] sm:$0xff]
  %v3110 = vld [vmem:[%s8 + $0x10] sm:$0xff]
  %v3111 = vld [vmem:[%s8 + $0x18] sm:$0xff]
  %v3112 = vld [vmem:[%s8 + $0x20] sm:$0xff]
  %v3113 = vld [vmem:[%s8 + $0x28] sm:$0xff]
  %v3114 = vld [vmem:[%s8 + $0x30] sm:$0xff]
  %v3115 = vld [vmem:[%s8 + $0x38] sm:$0xff]
  %v3116 = vlaneseq
  %v3117 = vshrl.u32 %v3116, 7
  %v3118 = vsub.s32 5, %v3117
  %v3119 = vrot.slane %v273, %v3118
  %v3121 = vsel %vm68, %v3106, 0
  %v3124 = vsel %vm68, %v3107, 0
  %3126 = vmatprep.subr.mxu0 0.0
  %3127 = vmatpush1.msra.mxu0 %v3108
  %3128 = vmatprep.subr.mxu0 0.0
  %3129 = vmatpush1.msra.mxu0 %v3109
  %3130 = vmatprep.subr.mxu0 0.0
  %3131 = vmatpush1.msra.mxu0 %v3110
  %3132 = vmatprep.subr.mxu0 0.0
  %3133 = vmatpush1.msra.mxu0 %v3111
  %3134 = vmatprep.subr.mxu0 0.0
  %3135 = vmatpush1.msra.mxu0 %v3112
  %3136 = vmatprep.subr.mxu0 0.0
  %3137 = vmatpush1.msra.mxu0 %v3113
  %3138 = vmatprep.subr.mxu0 0.0
  %3139 = vmatpush1.msra.mxu0 %v3114
  %3140 = vmatprep.subr.mxu0 0.0
  %3141 = vmatpush1.msra.mxu0 %v3115
  %3142 = vmatprep.subr.mxu0 0.0
  %3143 = vmatpush1.msra.mxu0 0.0
  %3144 = vmatprep.subr.mxu0 0.0
  %3145 = vmatpush1.msra.mxu0 0.0
  %3146 = vmatprep.subr.mxu0 0.0
  %3147 = vmatpush1.msra.mxu0 0.0
  %3148 = vmatprep.subr.mxu0 0.0
  %3149 = vmatpush1.msra.mxu0 0.0
  %3150 = vmatprep.subr.mxu0 0.0
  %3151 = vmatpush1.msra.mxu0 0.0
  %3152 = vmatprep.subr.mxu0 0.0
  %3153 = vmatpush1.msra.mxu0 0.0
  %3154 = vmatprep.subr.mxu0 0.0
  %3155 = vmatpush1.msra.mxu0 0.0
  %3156 = vmatprep.subr.mxu0 0.0
  %3157 = vmatpush1.msra.mxu0 0.0
  %3158 = vmatprep.subr.mxu0 0.0
  %3159 = vmatpush1.msra.mxu0 0.0
  %3160 = vmatprep.subr.mxu0 0.0
  %3161 = vmatpush1.msra.mxu0 0.0
  %3162 = vmatprep.subr.mxu0 0.0
  %3163 = vmatpush1.msra.mxu0 0.0
  %3164 = vmatprep.subr.mxu0 0.0
  %3165 = vmatpush1.msra.mxu0 0.0
  %3166 = vmatprep.subr.mxu0 0.0
  %3167 = vmatpush1.msra.mxu0 0.0
  %3168 = vmatprep.subr.mxu0 0.0
  %3169 = vmatpush1.msra.mxu0 0.0
  %3170 = vmatprep.subr.mxu0 0.0
  %3171 = vmatpush1.msra.mxu0 0.0
  %3172 = vmatprep.subr.mxu0 0.0
  %3173 = vmatpush1.msra.mxu0 0.0
  %3174 = vmatprep.subr.mxu0 0.0
  %3175 = vmatpush1.msra.mxu0 0.0
  %3176 = vmatprep.subr.mxu0 0.0
  %3177 = vmatpush1.msra.mxu0 0.0
  %3178 = vmatprep.subr.mxu0 0.0
  %3179 = vmatpush1.msra.mxu0 0.0
  %3180 = vmatprep.subr.mxu0 0.0
  %3181 = vmatpush1.msra.mxu0 0.0
  %3182 = vmatprep.subr.mxu0 0.0
  %3183 = vmatpush1.msra.mxu0 0.0
  %3184 = vmatprep.subr.mxu0 0.0
  %3185 = vmatpush1.msra.mxu0 0.0
  %3186 = vmatprep.subr.mxu0 0.0
  %3187 = vmatpush1.msra.mxu0 0.0
  %3188 = vmatprep.subr.mxu0 0.0
  %3189 = vmatpush1.msra.mxu0 0.0
  %3190 = vmatprep.mubr.f32.mxu0 0.0
  %3191 = vmatmul.mubr.f32.gmra.mrb[0].mxu0 %v3121
  %v3192 = vpop.f32.mrb[0].mxu0
  %v3193 = vadd.f32 %v3119, %v3192
  %v3194 = vpop.f32.mrb[0].mxu0
  %3195 = vmatprep.mubr.f32.mxu0 0.0
  %3196 = vmatmul.mubr.f32.gmra.mrb[0].mxu0 %v3124
  %v3197 = vpop.f32.mrb[0].mxu0
  %v3198 = vadd.f32 %v3119, %v3197
  %v3199 = vpop.f32.mrb[0].mxu0
  %3200 = vdwg.mxu0
  %v3201 = vadd.f32 %v2999, %v3193
  %v3202 = vadd.f32 %v3000, %v3198
  %v3203 = vsel %vm150, %v3201, 0.0
  %3204 = vadd.xlane.f32.xlu0 %v3203
  %v3205 = vpop.xlane.xlu0 %3204
  %v3206 = vsel %vm150, %v3202, 0.0
  %3207 = vadd.xlane.f32.xlu0 %v3206
  %v3208 = vpop.xlane.xlu0 %3207
  %v3209 = vmul.f32 %v3205, %v157
  %v3210 = vmul.f32 %v3208, %v157
  %v3211 = vsub.f32 %v3201, %v3209
  %v3212 = vsub.f32 %v3202, %v3210
  %v3213 = vmul.f32 %v3211, %v3211
  %v3214 = vmul.f32 %v3212, %v3212
  %v3215 = vsel %vm150, %v3213, 0.0
  %3216 = vadd.xlane.f32.xlu0 %v3215
  %v3217 = vpop.xlane.xlu0 %3216
  %v3218 = vsel %vm150, %v3214, 0.0
  %3219 = vadd.xlane.f32.xlu0 %v3218
  %v3220 = vpop.xlane.xlu0 %3219
  %v3221 = vmul.f32 %v3217, %v157
  %v3222 = vmul.f32 %v3220, %v157
  %v3223 = vadd.f32 %v3221, 1e-05
  %v3224 = vadd.f32 %v3222, 1e-05
  %v3225 = vrsqrt.pop %v3223
  %v3226 = vrsqrt.pop %v3224
  %v3227 = vmul.f32 %v3211, %v3225
  %v3228 = vmul.f32 %v3212, %v3226
  %v3229 = vlaneseq
  %v3230 = vshrl.u32 %v3229, 7
  %v3231 = vsub.s32 6, %v3230
  %v3232 = vrot.slane %v273, %v3231
  %v3233 = vmul.f32 %v3227, %v3232
  %v3234 = vmul.f32 %v3228, %v3232
  %v3235 = vlaneseq
  %v3236 = vshrl.u32 %v3235, 7
  %v3237 = vsub.s32 7, %v3236
  %v3238 = vrot.slane %v273, %v3237
  %v3239 = vadd.f32 %v3233, %v3238
  %v3240 = vadd.f32 %v3234, %v3238
  %s3241 = scalar_lea.vmem %s9, 8
  %v3242 = vld [vmem:[%s3241] sm:$0xff]
  %s3243 = scalar_lea.vmem %s5, 32
  %v3244 = vld [vmem:[%s3243] sm:$0xff]
  %v3245 = vld [vmem:[%s3243 + $0x8] sm:$0xff]
  %v3246 = vld [vmem:[%s3243 + $0x10] sm:$0xff]
  %v3247 = vld [vmem:[%s3243 + $0x18] sm:$0xff]
  %v3248 = vlaneseq
  %v3249 = vshrl.u32 %v3248, 7
  %v3250 = vsub.s32 0, %v3249
  %v3251 = vrot.slane %v3242, %v3250
  %v3253 = vsel %vm150, %v3239, 0
  %v3256 = vsel %vm150, %v3240, 0
  %3258 = vmatprep.subr.mxu0 0.0
  %3259 = vmatpush1.msra.mxu0 %v3244
  %3260 = vmatprep.subr.mxu0 0.0
  %3261 = vmatpush1.msra.mxu0 %v3245
  %3262 = vmatprep.subr.mxu0 0.0
  %3263 = vmatpush1.msra.mxu0 %v3246
  %3264 = vmatprep.subr.mxu0 0.0
  %3265 = vmatpush1.msra.mxu0 %v3247
  %3266 = vmatprep.subr.mxu0 0.0
  %3267 = vmatpush1.msra.mxu0 0.0
  %3268 = vmatprep.subr.mxu0 0.0
  %3269 = vmatpush1.msra.mxu0 0.0
  %3270 = vmatprep.subr.mxu0 0.0
  %3271 = vmatpush1.msra.mxu0 0.0
  %3272 = vmatprep.subr.mxu0 0.0
  %3273 = vmatpush1.msra.mxu0 0.0
  %3274 = vmatprep.subr.mxu0 0.0
  %3275 = vmatpush1.msra.mxu0 0.0
  %3276 = vmatprep.subr.mxu0 0.0
  %3277 = vmatpush1.msra.mxu0 0.0
  %3278 = vmatprep.subr.mxu0 0.0
  %3279 = vmatpush1.msra.mxu0 0.0
  %3280 = vmatprep.subr.mxu0 0.0
  %3281 = vmatpush1.msra.mxu0 0.0
  %3282 = vmatprep.subr.mxu0 0.0
  %3283 = vmatpush1.msra.mxu0 0.0
  %3284 = vmatprep.subr.mxu0 0.0
  %3285 = vmatpush1.msra.mxu0 0.0
  %3286 = vmatprep.subr.mxu0 0.0
  %3287 = vmatpush1.msra.mxu0 0.0
  %3288 = vmatprep.subr.mxu0 0.0
  %3289 = vmatpush1.msra.mxu0 0.0
  %3290 = vmatprep.subr.mxu0 0.0
  %3291 = vmatpush1.msra.mxu0 0.0
  %3292 = vmatprep.subr.mxu0 0.0
  %3293 = vmatpush1.msra.mxu0 0.0
  %3294 = vmatprep.subr.mxu0 0.0
  %3295 = vmatpush1.msra.mxu0 0.0
  %3296 = vmatprep.subr.mxu0 0.0
  %3297 = vmatpush1.msra.mxu0 0.0
  %3298 = vmatprep.subr.mxu0 0.0
  %3299 = vmatpush1.msra.mxu0 0.0
  %3300 = vmatprep.subr.mxu0 0.0
  %3301 = vmatpush1.msra.mxu0 0.0
  %3302 = vmatprep.subr.mxu0 0.0
  %3303 = vmatpush1.msra.mxu0 0.0
  %3304 = vmatprep.subr.mxu0 0.0
  %3305 = vmatpush1.msra.mxu0 0.0
  %3306 = vmatprep.subr.mxu0 0.0
  %3307 = vmatpush1.msra.mxu0 0.0
  %3308 = vmatprep.subr.mxu0 0.0
  %3309 = vmatpush1.msra.mxu0 0.0
  %3310 = vmatprep.subr.mxu0 0.0
  %3311 = vmatpush1.msra.mxu0 0.0
  %3312 = vmatprep.subr.mxu0 0.0
  %3313 = vmatpush1.msra.mxu0 0.0
  %3314 = vmatprep.subr.mxu0 0.0
  %3315 = vmatpush1.msra.mxu0 0.0
  %3316 = vmatprep.subr.mxu0 0.0
  %3317 = vmatpush1.msra.mxu0 0.0
  %3318 = vmatprep.subr.mxu0 0.0
  %3319 = vmatpush1.msra.mxu0 0.0
  %3320 = vmatprep.subr.mxu0 0.0
  %3321 = vmatpush1.msra.mxu0 0.0
  %3322 = vmatprep.mubr.f32.mxu0 0.0
  %3323 = vmatmul.mubr.f32.gmra.mrb[0].mxu0 %v3253
  %v3324 = vpop.f32.mrb[0].mxu0
  %v3325 = vadd.f32 %v3251, %v3324
  %v3326 = vpop.f32.mrb[0].mxu0
  %3327 = vmatprep.mubr.f32.mxu0 0.0
  %3328 = vmatmul.mubr.f32.gmra.mrb[0].mxu0 %v3256
  %v3329 = vpop.f32.mrb[0].mxu0
  %v3330 = vadd.f32 %v3251, %v3329
  %v3331 = vpop.f32.mrb[0].mxu0
  %3332 = vdwg.mxu0
  %3335 = vrot.lane.b32.xlu0 %v3325, 120
  %v3336 = vpop.permute.xlu0 %3335
  %3337 = vrot.lane.b32.xlu0 %v3330, 120
  %v3338 = vpop.permute.xlu0 %3337
  %3341 = vrot.lane.b32.xlu0 %v3325, 112
  %v3342 = vpop.permute.xlu0 %3341
  %3343 = vrot.lane.b32.xlu0 %v3330, 112
  %v3344 = vpop.permute.xlu0 %3343
  %3347 = vrot.lane.b32.xlu0 %v3325, 104
  %v3348 = vpop.permute.xlu0 %3347
  %3349 = vrot.lane.b32.xlu0 %v3330, 104
  %v3350 = vpop.permute.xlu0 %3349
  %v3353 = vcombine.low %v3325, %v3342
  %v3354 = vcombine.high %v3325, %v3342
  %v3356 = vunpack.c.l.s4 1983009808
  %v3357 = vunpack.c.0.s8 %v3356
  %v3358 = vlaneseq
  %v3359 = vshrl.u32 %v3358, 7
  %v3360 = vsub.s32 %v3357, %v3359
  %v3361 = vrot.slane %v3353, %v3360
  %v3363 = vunpack.c.l.s4 1983009808
  %v3364 = vunpack.c.0.s8 %v3363
  %v3365 = vlaneseq
  %v3366 = vshrl.u32 %v3365, 7
  %v3367 = vsub.s32 %v3364, %v3366
  %v3368 = vrot.slane %v3354, %v3367
  %v3369 = vcombine.low %v3336, %v3348
  %v3370 = vcombine.high %v3336, %v3348
  %v3372 = vunpack.c.l.s4 1983009808
  %v3373 = vunpack.c.0.s8 %v3372
  %v3374 = vlaneseq
  %v3375 = vshrl.u32 %v3374, 7
  %v3376 = vsub.s32 %v3373, %v3375
  %v3377 = vrot.slane %v3369, %v3376
  %v3379 = vunpack.c.l.s4 1983009808
  %v3380 = vunpack.c.0.s8 %v3379
  %v3381 = vlaneseq
  %v3382 = vshrl.u32 %v3381, 7
  %v3383 = vsub.s32 %v3380, %v3382
  %v3384 = vrot.slane %v3370, %v3383
  %v3385 = vcombine.low %v3361, %v3377
  %v3386 = vcombine.high %v3361, %v3377
  %v3388 = vunpack.c.l.s4 1934713408
  %v3389 = vunpack.c.0.s8 %v3388
  %v3390 = vlaneseq
  %v3391 = vshrl.u32 %v3390, 7
  %v3392 = vsub.s32 %v3389, %v3391
  %v3393 = vrot.slane %v3385, %v3392
  %v3395 = vunpack.c.l.s4 1934713408
  %v3396 = vunpack.c.0.s8 %v3395
  %v3397 = vlaneseq
  %v3398 = vshrl.u32 %v3397, 7
  %v3399 = vsub.s32 %v3396, %v3398
  %v3400 = vrot.slane %v3386, %v3399
  %v3401 = vcombine.low %v3368, %v3384
  %v3402 = vcombine.high %v3368, %v3384
  %v3404 = vunpack.c.l.s4 1934713408
  %v3405 = vunpack.c.0.s8 %v3404
  %v3406 = vlaneseq
  %v3407 = vshrl.u32 %v3406, 7
  %v3408 = vsub.s32 %v3405, %v3407
  %v3409 = vrot.slane %v3401, %v3408
  %v3411 = vunpack.c.l.s4 1934713408
  %v3412 = vunpack.c.0.s8 %v3411
  %v3413 = vlaneseq
  %v3414 = vshrl.u32 %v3413, 7
  %v3415 = vsub.s32 %v3412, %v3414
  %v3416 = vrot.slane %v3402, %v3415
  %v3417 = vcombine.high %v3393, 0.0
  %v3418 = vcombine.high %v3400, 0.0
  %v3419 = vcombine.high %v3409, 0.0
  %v3420 = vcombine.high %v3416, 0.0
  %v3421 = vcombine.low %v3330, %v3344
  %v3422 = vcombine.high %v3330, %v3344
  %v3424 = vunpack.c.l.s4 1983009808
  %v3425 = vunpack.c.0.s8 %v3424
  %v3426 = vlaneseq
  %v3427 = vshrl.u32 %v3426, 7
  %v3428 = vsub.s32 %v3425, %v3427
  %v3429 = vrot.slane %v3421, %v3428
  %v3431 = vunpack.c.l.s4 1983009808
  %v3432 = vunpack.c.0.s8 %v3431
  %v3433 = vlaneseq
  %v3434 = vshrl.u32 %v3433, 7
  %v3435 = vsub.s32 %v3432, %v3434
  %v3436 = vrot.slane %v3422, %v3435
  %v3437 = vcombine.low %v3338, %v3350
  %v3438 = vcombine.high %v3338, %v3350
  %v3440 = vunpack.c.l.s4 1983009808
  %v3441 = vunpack.c.0.s8 %v3440
  %v3442 = vlaneseq
  %v3443 = vshrl.u32 %v3442, 7
  %v3444 = vsub.s32 %v3441, %v3443
  %v3445 = vrot.slane %v3437, %v3444
  %v3447 = vunpack.c.l.s4 1983009808
  %v3448 = vunpack.c.0.s8 %v3447
  %v3449 = vlaneseq
  %v3450 = vshrl.u32 %v3449, 7
  %v3451 = vsub.s32 %v3448, %v3450
  %v3452 = vrot.slane %v3438, %v3451
  %v3453 = vcombine.low %v3429, %v3445
  %v3454 = vcombine.high %v3429, %v3445
  %v3456 = vunpack.c.l.s4 1934713408
  %v3457 = vunpack.c.0.s8 %v3456
  %v3458 = vlaneseq
  %v3459 = vshrl.u32 %v3458, 7
  %v3460 = vsub.s32 %v3457, %v3459
  %v3461 = vrot.slane %v3453, %v3460
  %v3463 = vunpack.c.l.s4 1934713408
  %v3464 = vunpack.c.0.s8 %v3463
  %v3465 = vlaneseq
  %v3466 = vshrl.u32 %v3465, 7
  %v3467 = vsub.s32 %v3464, %v3466
  %v3468 = vrot.slane %v3454, %v3467
  %v3469 = vcombine.low %v3436, %v3452
  %v3470 = vcombine.high %v3436, %v3452
  %v3472 = vunpack.c.l.s4 1934713408
  %v3473 = vunpack.c.0.s8 %v3472
  %v3474 = vlaneseq
  %v3475 = vshrl.u32 %v3474, 7
  %v3476 = vsub.s32 %v3473, %v3475
  %v3477 = vrot.slane %v3469, %v3476
  %v3479 = vunpack.c.l.s4 1934713408
  %v3480 = vunpack.c.0.s8 %v3479
  %v3481 = vlaneseq
  %v3482 = vshrl.u32 %v3481, 7
  %v3483 = vsub.s32 %v3480, %v3482
  %v3484 = vrot.slane %v3470, %v3483
  %v3485 = vcombine.high %v3461, 0.0
  %v3486 = vcombine.high %v3468, 0.0
  %v3487 = vcombine.high %v3477, 0.0
  %v3488 = vcombine.high %v3484, 0.0
  %v3489 = vcombine.low %v3393, %v3400
  %v3491 = vunpack.c.l.s4 1983009808
  %v3492 = vunpack.c.0.s8 %v3491
  %v3493 = vlaneseq
  %v3494 = vshrl.u32 %v3493, 7
  %v3495 = vsub.s32 %v3492, %v3494
  %v3496 = vrot.slane %v3489, %v3495
  %v3497 = vcombine.low %v3417, %v3418
  %v3499 = vunpack.c.l.s4 1983009808
  %v3500 = vunpack.c.0.s8 %v3499
  %v3501 = vlaneseq
  %v3502 = vshrl.u32 %v3501, 7
  %v3503 = vsub.s32 %v3500, %v3502
  %v3504 = vrot.slane %v3497, %v3503
  %v3505 = vcombine.low %v3409, %v3416
  %v3507 = vunpack.c.l.s4 1983009808
  %v3508 = vunpack.c.0.s8 %v3507
  %v3509 = vlaneseq
  %v3510 = vshrl.u32 %v3509, 7
  %v3511 = vsub.s32 %v3508, %v3510
  %v3512 = vrot.slane %v3505, %v3511
  %v3513 = vcombine.low %v3419, %v3420
  %v3515 = vunpack.c.l.s4 1983009808
  %v3516 = vunpack.c.0.s8 %v3515
  %v3517 = vlaneseq
  %v3518 = vshrl.u32 %v3517, 7
  %v3519 = vsub.s32 %v3516, %v3518
  %v3520 = vrot.slane %v3513, %v3519
  %v3521 = vcombine.low %v3496, %v3504
  %v3522 = vcombine.high %v3496, %v3504
  %v3524 = vunpack.c.l.s4 1934713408
  %v3525 = vunpack.c.0.s8 %v3524
  %v3526 = vlaneseq
  %v3527 = vshrl.u32 %v3526, 7
  %v3528 = vsub.s32 %v3525, %v3527
  %v3529 = vrot.slane %v3521, %v3528
  %v3531 = vunpack.c.l.s4 1934713408
  %v3532 = vunpack.c.0.s8 %v3531
  %v3533 = vlaneseq
  %v3534 = vshrl.u32 %v3533, 7
  %v3535 = vsub.s32 %v3532, %v3534
  %v3536 = vrot.slane %v3522, %v3535
  %v3537 = vcombine.low %v3512, %v3520
  %v3538 = vcombine.high %v3512, %v3520
  %v3540 = vunpack.c.l.s4 1934713408
  %v3541 = vunpack.c.0.s8 %v3540
  %v3542 = vlaneseq
  %v3543 = vshrl.u32 %v3542, 7
  %v3544 = vsub.s32 %v3541, %v3543
  %v3545 = vrot.slane %v3537, %v3544
  %v3547 = vunpack.c.l.s4 1934713408
  %v3548 = vunpack.c.0.s8 %v3547
  %v3549 = vlaneseq
  %v3550 = vshrl.u32 %v3549, 7
  %v3551 = vsub.s32 %v3548, %v3550
  %v3552 = vrot.slane %v3538, %v3551
  %v3553 = vcombine.low %v3529, %v3545
  %v3554 = vcombine.high %v3529, %v3545
  %v3555 = vcombine.low %v3536, %v3552
  %v3556 = vcombine.high %v3536, %v3552
  %v3557 = vcombine.low %v3461, %v3468
  %v3559 = vunpack.c.l.s4 1983009808
  %v3560 = vunpack.c.0.s8 %v3559
  %v3561 = vlaneseq
  %v3562 = vshrl.u32 %v3561, 7
  %v3563 = vsub.s32 %v3560, %v3562
  %v3564 = vrot.slane %v3557, %v3563
  %v3565 = vcombine.low %v3485, %v3486
  %v3567 = vunpack.c.l.s4 1983009808
  %v3568 = vunpack.c.0.s8 %v3567
  %v3569 = vlaneseq
  %v3570 = vshrl.u32 %v3569, 7
  %v3571 = vsub.s32 %v3568, %v3570
  %v3572 = vrot.slane %v3565, %v3571
  %v3573 = vcombine.low %v3477, %v3484
  %v3575 = vunpack.c.l.s4 1983009808
  %v3576 = vunpack.c.0.s8 %v3575
  %v3577 = vlaneseq
  %v3578 = vshrl.u32 %v3577, 7
  %v3579 = vsub.s32 %v3576, %v3578
  %v3580 = vrot.slane %v3573, %v3579
  %v3581 = vcombine.low %v3487, %v3488
  %v3583 = vunpack.c.l.s4 1983009808
  %v3584 = vunpack.c.0.s8 %v3583
  %v3585 = vlaneseq
  %v3586 = vshrl.u32 %v3585, 7
  %v3587 = vsub.s32 %v3584, %v3586
  %v3588 = vrot.slane %v3581, %v3587
  %v3589 = vcombine.low %v3564, %v3572
  %v3590 = vcombine.high %v3564, %v3572
  %v3592 = vunpack.c.l.s4 1934713408
  %v3593 = vunpack.c.0.s8 %v3592
  %v3594 = vlaneseq
  %v3595 = vshrl.u32 %v3594, 7
  %v3596 = vsub.s32 %v3593, %v3595
  %v3597 = vrot.slane %v3589, %v3596
  %v3599 = vunpack.c.l.s4 1934713408
  %v3600 = vunpack.c.0.s8 %v3599
  %v3601 = vlaneseq
  %v3602 = vshrl.u32 %v3601, 7
  %v3603 = vsub.s32 %v3600, %v3602
  %v3604 = vrot.slane %v3590, %v3603
  %v3605 = vcombine.low %v3580, %v3588
  %v3606 = vcombine.high %v3580, %v3588
  %v3608 = vunpack.c.l.s4 1934713408
  %v3609 = vunpack.c.0.s8 %v3608
  %v3610 = vlaneseq
  %v3611 = vshrl.u32 %v3610, 7
  %v3612 = vsub.s32 %v3609, %v3611
  %v3613 = vrot.slane %v3605, %v3612
  %v3615 = vunpack.c.l.s4 1934713408
  %v3616 = vunpack.c.0.s8 %v3615
  %v3617 = vlaneseq
  %v3618 = vshrl.u32 %v3617, 7
  %v3619 = vsub.s32 %v3616, %v3618
  %v3620 = vrot.slane %v3606, %v3619
  %v3621 = vcombine.low %v3597, %v3613
  %v3622 = vcombine.high %v3597, %v3613
  %v3623 = vcombine.low %v3604, %v3620
  %v3624 = vcombine.high %v3604, %v3620
  %3625 = vrot.lane.b32.xlu0 %v3325, 96
  %v3626 = vpop.permute.xlu0 %3625
  %3627 = vrot.lane.b32.xlu0 %v3330, 96
  %v3628 = vpop.permute.xlu0 %3627
  %3629 = vrot.lane.b32.xlu0 %v3336, 96
  %v3630 = vpop.permute.xlu0 %3629
  %3631 = vrot.lane.b32.xlu0 %v3338, 96
  %v3632 = vpop.permute.xlu0 %3631
  %3633 = vrot.lane.b32.xlu0 %v3342, 96
  %v3634 = vpop.permute.xlu0 %3633
  %3635 = vrot.lane.b32.xlu0 %v3344, 96
  %v3636 = vpop.permute.xlu0 %3635
  %3637 = vrot.lane.b32.xlu0 %v3348, 96
  %v3638 = vpop.permute.xlu0 %3637
  %3639 = vrot.lane.b32.xlu0 %v3350, 96
  %v3640 = vpop.permute.xlu0 %3639
  %v3649 = vcombine.low %v3626, %v3634
  %v3650 = vcombine.high %v3626, %v3634
  %v3652 = vunpack.c.l.s4 1983009808
  %v3653 = vunpack.c.0.s8 %v3652
  %v3654 = vlaneseq
  %v3655 = vshrl.u32 %v3654, 7
  %v3656 = vsub.s32 %v3653, %v3655
  %v3657 = vrot.slane %v3649, %v3656
  %v3659 = vunpack.c.l.s4 1983009808
  %v3660 = vunpack.c.0.s8 %v3659
  %v3661 = vlaneseq
  %v3662 = vshrl.u32 %v3661, 7
  %v3663 = vsub.s32 %v3660, %v3662
  %v3664 = vrot.slane %v3650, %v3663
  %v3665 = vcombine.low %v3630, %v3638
  %v3666 = vcombine.high %v3630, %v3638
  %v3668 = vunpack.c.l.s4 1983009808
  %v3669 = vunpack.c.0.s8 %v3668
  %v3670 = vlaneseq
  %v3671 = vshrl.u32 %v3670, 7
  %v3672 = vsub.s32 %v3669, %v3671
  %v3673 = vrot.slane %v3665, %v3672
  %v3675 = vunpack.c.l.s4 1983009808
  %v3676 = vunpack.c.0.s8 %v3675
  %v3677 = vlaneseq
  %v3678 = vshrl.u32 %v3677, 7
  %v3679 = vsub.s32 %v3676, %v3678
  %v3680 = vrot.slane %v3666, %v3679
  %v3681 = vcombine.low %v3657, %v3673
  %v3682 = vcombine.high %v3657, %v3673
  %v3684 = vunpack.c.l.s4 1934713408
  %v3685 = vunpack.c.0.s8 %v3684
  %v3686 = vlaneseq
  %v3687 = vshrl.u32 %v3686, 7
  %v3688 = vsub.s32 %v3685, %v3687
  %v3689 = vrot.slane %v3681, %v3688
  %v3691 = vunpack.c.l.s4 1934713408
  %v3692 = vunpack.c.0.s8 %v3691
  %v3693 = vlaneseq
  %v3694 = vshrl.u32 %v3693, 7
  %v3695 = vsub.s32 %v3692, %v3694
  %v3696 = vrot.slane %v3682, %v3695
  %v3697 = vcombine.low %v3664, %v3680
  %v3698 = vcombine.high %v3664, %v3680
  %v3700 = vunpack.c.l.s4 1934713408
  %v3701 = vunpack.c.0.s8 %v3700
  %v3702 = vlaneseq
  %v3703 = vshrl.u32 %v3702, 7
  %v3704 = vsub.s32 %v3701, %v3703
  %v3705 = vrot.slane %v3697, %v3704
  %v3707 = vunpack.c.l.s4 1934713408
  %v3708 = vunpack.c.0.s8 %v3707
  %v3709 = vlaneseq
  %v3710 = vshrl.u32 %v3709, 7
  %v3711 = vsub.s32 %v3708, %v3710
  %v3712 = vrot.slane %v3698, %v3711
  %v3713 = vcombine.high %v3689, 0.0
  %v3714 = vcombine.high %v3696, 0.0
  %v3715 = vcombine.high %v3705, 0.0
  %v3716 = vcombine.high %v3712, 0.0
  %v3717 = vcombine.low %v3628, %v3636
  %v3718 = vcombine.high %v3628, %v3636
  %v3720 = vunpack.c.l.s4 1983009808
  %v3721 = vunpack.c.0.s8 %v3720
  %v3722 = vlaneseq
  %v3723 = vshrl.u32 %v3722, 7
  %v3724 = vsub.s32 %v3721, %v3723
  %v3725 = vrot.slane %v3717, %v3724
  %v3727 = vunpack.c.l.s4 1983009808
  %v3728 = vunpack.c.0.s8 %v3727
  %v3729 = vlaneseq
  %v3730 = vshrl.u32 %v3729, 7
  %v3731 = vsub.s32 %v3728, %v3730
  %v3732 = vrot.slane %v3718, %v3731
  %v3733 = vcombine.low %v3632, %v3640
  %v3734 = vcombine.high %v3632, %v3640
  %v3736 = vunpack.c.l.s4 1983009808
  %v3737 = vunpack.c.0.s8 %v3736
  %v3738 = vlaneseq
  %v3739 = vshrl.u32 %v3738, 7
  %v3740 = vsub.s32 %v3737, %v3739
  %v3741 = vrot.slane %v3733, %v3740
  %v3743 = vunpack.c.l.s4 1983009808
  %v3744 = vunpack.c.0.s8 %v3743
  %v3745 = vlaneseq
  %v3746 = vshrl.u32 %v3745, 7
  %v3747 = vsub.s32 %v3744, %v3746
  %v3748 = vrot.slane %v3734, %v3747
  %v3749 = vcombine.low %v3725, %v3741
  %v3750 = vcombine.high %v3725, %v3741
  %v3752 = vunpack.c.l.s4 1934713408
  %v3753 = vunpack.c.0.s8 %v3752
  %v3754 = vlaneseq
  %v3755 = vshrl.u32 %v3754, 7
  %v3756 = vsub.s32 %v3753, %v3755
  %v3757 = vrot.slane %v3749, %v3756
  %v3759 = vunpack.c.l.s4 1934713408
  %v3760 = vunpack.c.0.s8 %v3759
  %v3761 = vlaneseq
  %v3762 = vshrl.u32 %v3761, 7
  %v3763 = vsub.s32 %v3760, %v3762
  %v3764 = vrot.slane %v3750, %v3763
  %v3765 = vcombine.low %v3732, %v3748
  %v3766 = vcombine.high %v3732, %v3748
  %v3768 = vunpack.c.l.s4 1934713408
  %v3769 = vunpack.c.0.s8 %v3768
  %v3770 = vlaneseq
  %v3771 = vshrl.u32 %v3770, 7
  %v3772 = vsub.s32 %v3769, %v3771
  %v3773 = vrot.slane %v3765, %v3772
  %v3775 = vunpack.c.l.s4 1934713408
  %v3776 = vunpack.c.0.s8 %v3775
  %v3777 = vlaneseq
  %v3778 = vshrl.u32 %v3777, 7
  %v3779 = vsub.s32 %v3776, %v3778
  %v3780 = vrot.slane %v3766, %v3779
  %v3781 = vcombine.high %v3757, 0.0
  %v3782 = vcombine.high %v3764, 0.0
  %v3783 = vcombine.high %v3773, 0.0
  %v3784 = vcombine.high %v3780, 0.0
  %v3785 = vcombine.low %v3689, %v3696
  %v3787 = vunpack.c.l.s4 1983009808
  %v3788 = vunpack.c.0.s8 %v3787
  %v3789 = vlaneseq
  %v3790 = vshrl.u32 %v3789, 7
  %v3791 = vsub.s32 %v3788, %v3790
  %v3792 = vrot.slane %v3785, %v3791
  %v3793 = vcombine.low %v3713, %v3714
  %v3795 = vunpack.c.l.s4 1983009808
  %v3796 = vunpack.c.0.s8 %v3795
  %v3797 = vlaneseq
  %v3798 = vshrl.u32 %v3797, 7
  %v3799 = vsub.s32 %v3796, %v3798
  %v3800 = vrot.slane %v3793, %v3799
  %v3801 = vcombine.low %v3705, %v3712
  %v3803 = vunpack.c.l.s4 1983009808
  %v3804 = vunpack.c.0.s8 %v3803
  %v3805 = vlaneseq
  %v3806 = vshrl.u32 %v3805, 7
  %v3807 = vsub.s32 %v3804, %v3806
  %v3808 = vrot.slane %v3801, %v3807
  %v3809 = vcombine.low %v3715, %v3716
  %v3811 = vunpack.c.l.s4 1983009808
  %v3812 = vunpack.c.0.s8 %v3811
  %v3813 = vlaneseq
  %v3814 = vshrl.u32 %v3813, 7
  %v3815 = vsub.s32 %v3812, %v3814
  %v3816 = vrot.slane %v3809, %v3815
  %v3817 = vcombine.low %v3792, %v3800
  %v3818 = vcombine.high %v3792, %v3800
  %v3820 = vunpack.c.l.s4 1934713408
  %v3821 = vunpack.c.0.s8 %v3820
  %v3822 = vlaneseq
  %v3823 = vshrl.u32 %v3822, 7
  %v3824 = vsub.s32 %v3821, %v3823
  %v3825 = vrot.slane %v3817, %v3824
  %v3827 = vunpack.c.l.s4 1934713408
  %v3828 = vunpack.c.0.s8 %v3827
  %v3829 = vlaneseq
  %v3830 = vshrl.u32 %v3829, 7
  %v3831 = vsub.s32 %v3828, %v3830
  %v3832 = vrot.slane %v3818, %v3831
  %v3833 = vcombine.low %v3808, %v3816
  %v3834 = vcombine.high %v3808, %v3816
  %v3836 = vunpack.c.l.s4 1934713408
  %v3837 = vunpack.c.0.s8 %v3836
  %v3838 = vlaneseq
  %v3839 = vshrl.u32 %v3838, 7
  %v3840 = vsub.s32 %v3837, %v3839
  %v3841 = vrot.slane %v3833, %v3840
  %v3843 = vunpack.c.l.s4 1934713408
  %v3844 = vunpack.c.0.s8 %v3843
  %v3845 = vlaneseq
  %v3846 = vshrl.u32 %v3845, 7
  %v3847 = vsub.s32 %v3844, %v3846
  %v3848 = vrot.slane %v3834, %v3847
  %v3849 = vcombine.low %v3825, %v3841
  %v3850 = vcombine.high %v3825, %v3841
  %v3851 = vcombine.low %v3832, %v3848
  %v3852 = vcombine.high %v3832, %v3848
  %v3853 = vcombine.low %v3757, %v3764
  %v3855 = vunpack.c.l.s4 1983009808
  %v3856 = vunpack.c.0.s8 %v3855
  %v3857 = vlaneseq
  %v3858 = vshrl.u32 %v3857, 7
  %v3859 = vsub.s32 %v3856, %v3858
  %v3860 = vrot.slane %v3853, %v3859
  %v3861 = vcombine.low %v3781, %v3782
  %v3863 = vunpack.c.l.s4 1983009808
  %v3864 = vunpack.c.0.s8 %v3863
  %v3865 = vlaneseq
  %v3866 = vshrl.u32 %v3865, 7
  %v3867 = vsub.s32 %v3864, %v3866
  %v3868 = vrot.slane %v3861, %v3867
  %v3869 = vcombine.low %v3773, %v3780
  %v3871 = vunpack.c.l.s4 1983009808
  %v3872 = vunpack.c.0.s8 %v3871
  %v3873 = vlaneseq
  %v3874 = vshrl.u32 %v3873, 7
  %v3875 = vsub.s32 %v3872, %v3874
  %v3876 = vrot.slane %v3869, %v3875
  %v3877 = vcombine.low %v3783, %v3784
  %v3879 = vunpack.c.l.s4 1983009808
  %v3880 = vunpack.c.0.s8 %v3879
  %v3881 = vlaneseq
  %v3882 = vshrl.u32 %v3881, 7
  %v3883 = vsub.s32 %v3880, %v3882
  %v3884 = vrot.slane %v3877, %v3883
  %v3885 = vcombine.low %v3860, %v3868
  %v3886 = vcombine.high %v3860, %v3868
  %v3888 = vunpack.c.l.s4 1934713408
  %v3889 = vunpack.c.0.s8 %v3888
  %v3890 = vlaneseq
  %v3891 = vshrl.u32 %v3890, 7
  %v3892 = vsub.s32 %v3889, %v3891
  %v3893 = vrot.slane %v3885, %v3892
  %v3895 = vunpack.c.l.s4 1934713408
  %v3896 = vunpack.c.0.s8 %v3895
  %v3897 = vlaneseq
  %v3898 = vshrl.u32 %v3897, 7
  %v3899 = vsub.s32 %v3896, %v3898
  %v3900 = vrot.slane %v3886, %v3899
  %v3901 = vcombine.low %v3876, %v3884
  %v3902 = vcombine.high %v3876, %v3884
  %v3904 = vunpack.c.l.s4 1934713408
  %v3905 = vunpack.c.0.s8 %v3904
  %v3906 = vlaneseq
  %v3907 = vshrl.u32 %v3906, 7
  %v3908 = vsub.s32 %v3905, %v3907
  %v3909 = vrot.slane %v3901, %v3908
  %v3911 = vunpack.c.l.s4 1934713408
  %v3912 = vunpack.c.0.s8 %v3911
  %v3913 = vlaneseq
  %v3914 = vshrl.u32 %v3913, 7
  %v3915 = vsub.s32 %v3912, %v3914
  %v3916 = vrot.slane %v3902, %v3915
  %v3917 = vcombine.low %v3893, %v3909
  %v3918 = vcombine.high %v3893, %v3909
  %v3919 = vcombine.low %v3900, %v3916
  %v3920 = vcombine.high %v3900, %v3916
  %3921 = vrot.lane.b32.xlu0 %v3325, 64
  %v3922 = vpop.permute.xlu0 %3921
  %3923 = vrot.lane.b32.xlu0 %v3330, 64
  %v3924 = vpop.permute.xlu0 %3923
  %3925 = vrot.lane.b32.xlu0 %v3336, 64
  %v3926 = vpop.permute.xlu0 %3925
  %3927 = vrot.lane.b32.xlu0 %v3338, 64
  %v3928 = vpop.permute.xlu0 %3927
  %3929 = vrot.lane.b32.xlu0 %v3342, 64
  %v3930 = vpop.permute.xlu0 %3929
  %3931 = vrot.lane.b32.xlu0 %v3344, 64
  %v3932 = vpop.permute.xlu0 %3931
  %3933 = vrot.lane.b32.xlu0 %v3348, 64
  %v3934 = vpop.permute.xlu0 %3933
  %3935 = vrot.lane.b32.xlu0 %v3350, 64
  %v3936 = vpop.permute.xlu0 %3935
  %v3945 = vcombine.low %v3922, %v3930
  %v3946 = vcombine.high %v3922, %v3930
  %v3948 = vunpack.c.l.s4 1983009808
  %v3949 = vunpack.c.0.s8 %v3948
  %v3950 = vlaneseq
  %v3951 = vshrl.u32 %v3950, 7
  %v3952 = vsub.s32 %v3949, %v3951
  %v3953 = vrot.slane %v3945, %v3952
  %v3955 = vunpack.c.l.s4 1983009808
  %v3956 = vunpack.c.0.s8 %v3955
  %v3957 = vlaneseq
  %v3958 = vshrl.u32 %v3957, 7
  %v3959 = vsub.s32 %v3956, %v3958
  %v3960 = vrot.slane %v3946, %v3959
  %v3961 = vcombine.low %v3926, %v3934
  %v3962 = vcombine.high %v3926, %v3934
  %v3964 = vunpack.c.l.s4 1983009808
  %v3965 = vunpack.c.0.s8 %v3964
  %v3966 = vlaneseq
  %v3967 = vshrl.u32 %v3966, 7
  %v3968 = vsub.s32 %v3965, %v3967
  %v3969 = vrot.slane %v3961, %v3968
  %v3971 = vunpack.c.l.s4 1983009808
  %v3972 = vunpack.c.0.s8 %v3971
  %v3973 = vlaneseq
  %v3974 = vshrl.u32 %v3973, 7
  %v3975 = vsub.s32 %v3972, %v3974
  %v3976 = vrot.slane %v3962, %v3975
  %v3977 = vcombine.low %v3953, %v3969
  %v3978 = vcombine.high %v3953, %v3969
  %v3980 = vunpack.c.l.s4 1934713408
  %v3981 = vunpack.c.0.s8 %v3980
  %v3982 = vlaneseq
  %v3983 = vshrl.u32 %v3982, 7
  %v3984 = vsub.s32 %v3981, %v3983
  %v3985 = vrot.slane %v3977, %v3984
  %v3987 = vunpack.c.l.s4 1934713408
  %v3988 = vunpack.c.0.s8 %v3987
  %v3989 = vlaneseq
  %v3990 = vshrl.u32 %v3989, 7
  %v3991 = vsub.s32 %v3988, %v3990
  %v3992 = vrot.slane %v3978, %v3991
  %v3993 = vcombine.low %v3960, %v3976
  %v3994 = vcombine.high %v3960, %v3976
  %v3996 = vunpack.c.l.s4 1934713408
  %v3997 = vunpack.c.0.s8 %v3996
  %v3998 = vlaneseq
  %v3999 = vshrl.u32 %v3998, 7
  %v4000 = vsub.s32 %v3997, %v3999
  %v4001 = vrot.slane %v3993, %v4000
  %v4003 = vunpack.c.l.s4 1934713408
  %v4004 = vunpack.c.0.s8 %v4003
  %v4005 = vlaneseq
  %v4006 = vshrl.u32 %v4005, 7
  %v4007 = vsub.s32 %v4004, %v4006
  %v4008 = vrot.slane %v3994, %v4007
  %v4009 = vcombine.high %v3985, 0.0
  %v4010 = vcombine.high %v3992, 0.0
  %v4011 = vcombine.high %v4001, 0.0
  %v4012 = vcombine.high %v4008, 0.0
  %v4013 = vcombine.low %v3924, %v3932
  %v4014 = vcombine.high %v3924, %v3932
  %v4016 = vunpack.c.l.s4 1983009808
  %v4017 = vunpack.c.0.s8 %v4016
  %v4018 = vlaneseq
  %v4019 = vshrl.u32 %v4018, 7
  %v4020 = vsub.s32 %v4017, %v4019
  %v4021 = vrot.slane %v4013, %v4020
  %v4023 = vunpack.c.l.s4 1983009808
  %v4024 = vunpack.c.0.s8 %v4023
  %v4025 = vlaneseq
  %v4026 = vshrl.u32 %v4025, 7
  %v4027 = vsub.s32 %v4024, %v4026
  %v4028 = vrot.slane %v4014, %v4027
  %v4029 = vcombine.low %v3928, %v3936
  %v4030 = vcombine.high %v3928, %v3936
  %v4032 = vunpack.c.l.s4 1983009808
  %v4033 = vunpack.c.0.s8 %v4032
  %v4034 = vlaneseq
  %v4035 = vshrl.u32 %v4034, 7
  %v4036 = vsub.s32 %v4033, %v4035
  %v4037 = vrot.slane %v4029, %v4036
  %v4039 = vunpack.c.l.s4 1983009808
  %v4040 = vunpack.c.0.s8 %v4039
  %v4041 = vlaneseq
  %v4042 = vshrl.u32 %v4041, 7
  %v4043 = vsub.s32 %v4040, %v4042
  %v4044 = vrot.slane %v4030, %v4043
  %v4045 = vcombine.low %v4021, %v4037
  %v4046 = vcombine.high %v4021, %v4037
  %v4048 = vunpack.c.l.s4 1934713408
  %v4049 = vunpack.c.0.s8 %v4048
  %v4050 = vlaneseq
  %v4051 = vshrl.u32 %v4050, 7
  %v4052 = vsub.s32 %v4049, %v4051
  %v4053 = vrot.slane %v4045, %v4052
  %v4055 = vunpack.c.l.s4 1934713408
  %v4056 = vunpack.c.0.s8 %v4055
  %v4057 = vlaneseq
  %v4058 = vshrl.u32 %v4057, 7
  %v4059 = vsub.s32 %v4056, %v4058
  %v4060 = vrot.slane %v4046, %v4059
  %v4061 = vcombine.low %v4028, %v4044
  %v4062 = vcombine.high %v4028, %v4044
  %v4064 = vunpack.c.l.s4 1934713408
  %v4065 = vunpack.c.0.s8 %v4064
  %v4066 = vlaneseq
  %v4067 = vshrl.u32 %v4066, 7
  %v4068 = vsub.s32 %v4065, %v4067
  %v4069 = vrot.slane %v4061, %v4068
  %v4071 = vunpack.c.l.s4 1934713408
  %v4072 = vunpack.c.0.s8 %v4071
  %v4073 = vlaneseq
  %v4074 = vshrl.u32 %v4073, 7
  %v4075 = vsub.s32 %v4072, %v4074
  %v4076 = vrot.slane %v4062, %v4075
  %v4077 = vcombine.high %v4053, 0.0
  %v4078 = vcombine.high %v4060, 0.0
  %v4079 = vcombine.high %v4069, 0.0
  %v4080 = vcombine.high %v4076, 0.0
  %v4081 = vcombine.low %v3985, %v3992
  %v4083 = vunpack.c.l.s4 1983009808
  %v4084 = vunpack.c.0.s8 %v4083
  %v4085 = vlaneseq
  %v4086 = vshrl.u32 %v4085, 7
  %v4087 = vsub.s32 %v4084, %v4086
  %v4088 = vrot.slane %v4081, %v4087
  %v4089 = vcombine.low %v4009, %v4010
  %v4091 = vunpack.c.l.s4 1983009808
  %v4092 = vunpack.c.0.s8 %v4091
  %v4093 = vlaneseq
  %v4094 = vshrl.u32 %v4093, 7
  %v4095 = vsub.s32 %v4092, %v4094
  %v4096 = vrot.slane %v4089, %v4095
  %v4097 = vcombine.low %v4001, %v4008
  %v4099 = vunpack.c.l.s4 1983009808
  %v4100 = vunpack.c.0.s8 %v4099
  %v4101 = vlaneseq
  %v4102 = vshrl.u32 %v4101, 7
  %v4103 = vsub.s32 %v4100, %v4102
  %v4104 = vrot.slane %v4097, %v4103
  %v4105 = vcombine.low %v4011, %v4012
  %v4107 = vunpack.c.l.s4 1983009808
  %v4108 = vunpack.c.0.s8 %v4107
  %v4109 = vlaneseq
  %v4110 = vshrl.u32 %v4109, 7
  %v4111 = vsub.s32 %v4108, %v4110
  %v4112 = vrot.slane %v4105, %v4111
  %v4113 = vcombine.low %v4088, %v4096
  %v4114 = vcombine.high %v4088, %v4096
  %v4116 = vunpack.c.l.s4 1934713408
  %v4117 = vunpack.c.0.s8 %v4116
  %v4118 = vlaneseq
  %v4119 = vshrl.u32 %v4118, 7
  %v4120 = vsub.s32 %v4117, %v4119
  %v4121 = vrot.slane %v4113, %v4120
  %v4123 = vunpack.c.l.s4 1934713408
  %v4124 = vunpack.c.0.s8 %v4123
  %v4125 = vlaneseq
  %v4126 = vshrl.u32 %v4125, 7
  %v4127 = vsub.s32 %v4124, %v4126
  %v4128 = vrot.slane %v4114, %v4127
  %v4129 = vcombine.low %v4104, %v4112
  %v4130 = vcombine.high %v4104, %v4112
  %v4132 = vunpack.c.l.s4 1934713408
  %v4133 = vunpack.c.0.s8 %v4132
  %v4134 = vlaneseq
  %v4135 = vshrl.u32 %v4134, 7
  %v4136 = vsub.s32 %v4133, %v4135
  %v4137 = vrot.slane %v4129, %v4136
  %v4139 = vunpack.c.l.s4 1934713408
  %v4140 = vunpack.c.0.s8 %v4139
  %v4141 = vlaneseq
  %v4142 = vshrl.u32 %v4141, 7
  %v4143 = vsub.s32 %v4140, %v4142
  %v4144 = vrot.slane %v4130, %v4143
  %v4145 = vcombine.low %v4121, %v4137
  %v4146 = vcombine.high %v4121, %v4137
  %v4147 = vcombine.low %v4128, %v4144
  %v4148 = vcombine.high %v4128, %v4144
  %v4149 = vcombine.low %v4053, %v4060
  %v4151 = vunpack.c.l.s4 1983009808
  %v4152 = vunpack.c.0.s8 %v4151
  %v4153 = vlaneseq
  %v4154 = vshrl.u32 %v4153, 7
  %v4155 = vsub.s32 %v4152, %v4154
  %v4156 = vrot.slane %v4149, %v4155
  %v4157 = vcombine.low %v4077, %v4078
  %v4159 = vunpack.c.l.s4 1983009808
  %v4160 = vunpack.c.0.s8 %v4159
  %v4161 = vlaneseq
  %v4162 = vshrl.u32 %v4161, 7
  %v4163 = vsub.s32 %v4160, %v4162
  %v4164 = vrot.slane %v4157, %v4163
  %v4165 = vcombine.low %v4069, %v4076
  %v4167 = vunpack.c.l.s4 1983009808
  %v4168 = vunpack.c.0.s8 %v4167
  %v4169 = vlaneseq
  %v4170 = vshrl.u32 %v4169, 7
  %v4171 = vsub.s32 %v4168, %v4170
  %v4172 = vrot.slane %v4165, %v4171
  %v4173 = vcombine.low %v4079, %v4080
  %v4175 = vunpack.c.l.s4 1983009808
  %v4176 = vunpack.c.0.s8 %v4175
  %v4177 = vlaneseq
  %v4178 = vshrl.u32 %v4177, 7
  %v4179 = vsub.s32 %v4176, %v4178
  %v4180 = vrot.slane %v4173, %v4179
  %v4181 = vcombine.low %v4156, %v4164
  %v4182 = vcombine.high %v4156, %v4164
  %v4184 = vunpack.c.l.s4 1934713408
  %v4185 = vunpack.c.0.s8 %v4184
  %v4186 = vlaneseq
  %v4187 = vshrl.u32 %v4186, 7
  %v4188 = vsub.s32 %v4185, %v4187
  %v4189 = vrot.slane %v4181, %v4188
  %v4191 = vunpack.c.l.s4 1934713408
  %v4192 = vunpack.c.0.s8 %v4191
  %v4193 = vlaneseq
  %v4194 = vshrl.u32 %v4193, 7
  %v4195 = vsub.s32 %v4192, %v4194
  %v4196 = vrot.slane %v4182, %v4195
  %v4197 = vcombine.low %v4172, %v4180
  %v4198 = vcombine.high %v4172, %v4180
  %v4200 = vunpack.c.l.s4 1934713408
  %v4201 = vunpack.c.0.s8 %v4200
  %v4202 = vlaneseq
  %v4203 = vshrl.u32 %v4202, 7
  %v4204 = vsub.s32 %v4201, %v4203
  %v4205 = vrot.slane %v4197, %v4204
  %v4207 = vunpack.c.l.s4 1934713408
  %v4208 = vunpack.c.0.s8 %v4207
  %v4209 = vlaneseq
  %v4210 = vshrl.u32 %v4209, 7
  %v4211 = vsub.s32 %v4208, %v4210
  %v4212 = vrot.slane %v4198, %v4211
  %v4213 = vcombine.low %v4189, %v4205
  %v4214 = vcombine.high %v4189, %v4205
  %v4215 = vcombine.low %v4196, %v4212
  %v4216 = vcombine.high %v4196, %v4212
  %v4218 = vsel %vm1287, %v3553, 0
  %v4221 = vsel %vm1287, %v3849, 0
  %4223 = vmatprep.subr.mxu0 0.0
  %4224 = vmatpush1.xpose.msra.mxu0 %v4221
  %4225 = vmatprep.subr.mxu0 0.0
  %4226 = vmatpush1.xpose.msra.mxu0 0.0
  %4227 = vmatprep.subr.mxu0 0.0
  %4228 = vmatpush1.xpose.msra.mxu0 0.0
  %4229 = vmatprep.subr.mxu0 0.0
  %4230 = vmatpush1.xpose.msra.mxu0 0.0
  %4231 = vmatprep.subr.mxu0 0.0
  %4232 = vmatpush1.xpose.msra.mxu0 0.0
  %4233 = vmatprep.subr.mxu0 0.0
  %4234 = vmatpush1.xpose.msra.mxu0 0.0
  %4235 = vmatprep.subr.mxu0 0.0
  %4236 = vmatpush1.xpose.msra.mxu0 0.0
  %4237 = vmatprep.subr.mxu0 0.0
  %4238 = vmatpush1.xpose.msra.mxu0 0.0
  %4239 = vmatprep.subr.mxu0 0.0
  %4240 = vmatpush1.xpose.msra.mxu0 0.0
  %4241 = vmatprep.subr.mxu0 0.0
  %4242 = vmatpush1.xpose.msra.mxu0 0.0
  %4243 = vmatprep.subr.mxu0 0.0
  %4244 = vmatpush1.xpose.msra.mxu0 0.0
  %4245 = vmatprep.subr.mxu0 0.0
  %4246 = vmatpush1.xpose.msra.mxu0 0.0
  %4247 = vmatprep.subr.mxu0 0.0
  %4248 = vmatpush1.xpose.msra.mxu0 0.0
  %4249 = vmatprep.subr.mxu0 0.0
  %4250 = vmatpush1.xpose.msra.mxu0 0.0
  %4251 = vmatprep.subr.mxu0 0.0
  %4252 = vmatpush1.xpose.msra.mxu0 0.0
  %4253 = vmatprep.subr.mxu0 0.0
  %4254 = vmatpush1.xpose.msra.mxu0 0.0
  %4255 = vmatprep.subr.mxu0 0.0
  %4256 = vmatpush1.xpose.msra.mxu0 0.0
  %4257 = vmatprep.subr.mxu0 0.0
  %4258 = vmatpush1.xpose.msra.mxu0 0.0
  %4259 = vmatprep.subr.mxu0 0.0
  %4260 = vmatpush1.xpose.msra.mxu0 0.0
  %4261 = vmatprep.subr.mxu0 0.0
  %4262 = vmatpush1.xpose.msra.mxu0 0.0
  %4263 = vmatprep.subr.mxu0 0.0
  %4264 = vmatpush1.xpose.msra.mxu0 0.0
  %4265 = vmatprep.subr.mxu0 0.0
  %4266 = vmatpush1.xpose.msra.mxu0 0.0
  %4267 = vmatprep.subr.mxu0 0.0
  %4268 = vmatpush1.xpose.msra.mxu0 0.0
  %4269 = vmatprep.subr.mxu0 0.0
  %4270 = vmatpush1.xpose.msra.mxu0 0.0
  %4271 = vmatprep.subr.mxu0 0.0
  %4272 = vmatpush1.xpose.msra.mxu0 0.0
  %4273 = vmatprep.subr.mxu0 0.0
  %4274 = vmatpush1.xpose.msra.mxu0 0.0
  %4275 = vmatprep.subr.mxu0 0.0
  %4276 = vmatpush1.xpose.msra.mxu0 0.0
  %4277 = vmatprep.subr.mxu0 0.0
  %4278 = vmatpush1.xpose.msra.mxu0 0.0
  %4279 = vmatprep.subr.mxu0 0.0
  %4280 = vmatpush1.xpose.msra.mxu0 0.0
  %4281 = vmatprep.subr.mxu0 0.0
  %4282 = vmatpush1.xpose.msra.mxu0 0.0
  %4283 = vmatprep.subr.mxu0 0.0
  %4284 = vmatpush1.xpose.msra.mxu0 0.0
  %4285 = vmatprep.subr.mxu0 0.0
  %4286 = vmatpush1.xpose.msra.mxu0 0.0
  %4287 = vmatprep.mubr.f32.mxu0 0.0
  %4288 = vmatmul.mubr.f32.gmra.mrb[0].mxu0 %v4218
  %v4289 = vpop.f32.mrb[0].mxu0
  %v4290 = vadd.f32 %v1250, %v4289
  %v4291 = vpop.f32.mrb[0].mxu0
  %4292 = vdwg.mxu0
  %v4294 = vsel %vm1287, %v3554, 0
  %v4297 = vsel %vm1287, %v3850, 0
  %4299 = vmatprep.subr.mxu0 0.0
  %4300 = vmatpush1.xpose.msra.mxu0 %v4297
  %4301 = vmatprep.subr.mxu0 0.0
  %4302 = vmatpush1.xpose.msra.mxu0 0.0
  %4303 = vmatprep.subr.mxu0 0.0
  %4304 = vmatpush1.xpose.msra.mxu0 0.0
  %4305 = vmatprep.subr.mxu0 0.0
  %4306 = vmatpush1.xpose.msra.mxu0 0.0
  %4307 = vmatprep.subr.mxu0 0.0
  %4308 = vmatpush1.xpose.msra.mxu0 0.0
  %4309 = vmatprep.subr.mxu0 0.0
  %4310 = vmatpush1.xpose.msra.mxu0 0.0
  %4311 = vmatprep.subr.mxu0 0.0
  %4312 = vmatpush1.xpose.msra.mxu0 0.0
  %4313 = vmatprep.subr.mxu0 0.0
  %4314 = vmatpush1.xpose.msra.mxu0 0.0
  %4315 = vmatprep.subr.mxu0 0.0
  %4316 = vmatpush1.xpose.msra.mxu0 0.0
  %4317 = vmatprep.subr.mxu0 0.0
  %4318 = vmatpush1.xpose.msra.mxu0 0.0
  %4319 = vmatprep.subr.mxu0 0.0
  %4320 = vmatpush1.xpose.msra.mxu0 0.0
  %4321 = vmatprep.subr.mxu0 0.0
  %4322 = vmatpush1.xpose.msra.mxu0 0.0
  %4323 = vmatprep.subr.mxu0 0.0
  %4324 = vmatpush1.xpose.msra.mxu0 0.0
  %4325 = vmatprep.subr.mxu0 0.0
  %4326 = vmatpush1.xpose.msra.mxu0 0.0
  %4327 = vmatprep.subr.mxu0 0.0
  %4328 = vmatpush1.xpose.msra.mxu0 0.0
  %4329 = vmatprep.subr.mxu0 0.0
  %4330 = vmatpush1.xpose.msra.mxu0 0.0
  %4331 = vmatprep.subr.mxu0 0.0
  %4332 = vmatpush1.xpose.msra.mxu0 0.0
  %4333 = vmatprep.subr.mxu0 0.0
  %4334 = vmatpush1.xpose.msra.mxu0 0.0
  %4335 = vmatprep.subr.mxu0 0.0
  %4336 = vmatpush1.xpose.msra.mxu0 0.0
  %4337 = vmatprep.subr.mxu0 0.0
  %4338 = vmatpush1.xpose.msra.mxu0 0.0
  %4339 = vmatprep.subr.mxu0 0.0
  %4340 = vmatpush1.xpose.msra.mxu0 0.0
  %4341 = vmatprep.subr.mxu0 0.0
  %4342 = vmatpush1.xpose.msra.mxu0 0.0
  %4343 = vmatprep.subr.mxu0 0.0
  %4344 = vmatpush1.xpose.msra.mxu0 0.0
  %4345 = vmatprep.subr.mxu0 0.0
  %4346 = vmatpush1.xpose.msra.mxu0 0.0
  %4347 = vmatprep.subr.mxu0 0.0
  %4348 = vmatpush1.xpose.msra.mxu0 0.0
  %4349 = vmatprep.subr.mxu0 0.0
  %4350 = vmatpush1.xpose.msra.mxu0 0.0
  %4351 = vmatprep.subr.mxu0 0.0
  %4352 = vmatpush1.xpose.msra.mxu0 0.0
  %4353 = vmatprep.subr.mxu0 0.0
  %4354 = vmatpush1.xpose.msra.mxu0 0.0
  %4355 = vmatprep.subr.mxu0 0.0
  %4356 = vmatpush1.xpose.msra.mxu0 0.0
  %4357 = vmatprep.subr.mxu0 0.0
  %4358 = vmatpush1.xpose.msra.mxu0 0.0
  %4359 = vmatprep.subr.mxu0 0.0
  %4360 = vmatpush1.xpose.msra.mxu0 0.0
  %4361 = vmatprep.subr.mxu0 0.0
  %4362 = vmatpush1.xpose.msra.mxu0 0.0
  %4363 = vmatprep.mubr.f32.mxu0 0.0
  %4364 = vmatmul.mubr.f32.gmra.mrb[0].mxu0 %v4294
  %v4365 = vpop.f32.mrb[0].mxu0
  %v4366 = vadd.f32 %v1254, %v4365
  %v4367 = vpop.f32.mrb[0].mxu0
  %4368 = vdwg.mxu0
  %v4370 = vsel %vm1287, %v3555, 0
  %v4373 = vsel %vm1287, %v3851, 0
  %4375 = vmatprep.subr.mxu0 0.0
  %4376 = vmatpush1.xpose.msra.mxu0 %v4373
  %4377 = vmatprep.subr.mxu0 0.0
  %4378 = vmatpush1.xpose.msra.mxu0 0.0
  %4379 = vmatprep.subr.mxu0 0.0
  %4380 = vmatpush1.xpose.msra.mxu0 0.0
  %4381 = vmatprep.subr.mxu0 0.0
  %4382 = vmatpush1.xpose.msra.mxu0 0.0
  %4383 = vmatprep.subr.mxu0 0.0
  %4384 = vmatpush1.xpose.msra.mxu0 0.0
  %4385 = vmatprep.subr.mxu0 0.0
  %4386 = vmatpush1.xpose.msra.mxu0 0.0
  %4387 = vmatprep.subr.mxu0 0.0
  %4388 = vmatpush1.xpose.msra.mxu0 0.0
  %4389 = vmatprep.subr.mxu0 0.0
  %4390 = vmatpush1.xpose.msra.mxu0 0.0
  %4391 = vmatprep.subr.mxu0 0.0
  %4392 = vmatpush1.xpose.msra.mxu0 0.0
  %4393 = vmatprep.subr.mxu0 0.0
  %4394 = vmatpush1.xpose.msra.mxu0 0.0
  %4395 = vmatprep.subr.mxu0 0.0
  %4396 = vmatpush1.xpose.msra.mxu0 0.0
  %4397 = vmatprep.subr.mxu0 0.0
  %4398 = vmatpush1.xpose.msra.mxu0 0.0
  %4399 = vmatprep.subr.mxu0 0.0
  %4400 = vmatpush1.xpose.msra.mxu0 0.0
  %4401 = vmatprep.subr.mxu0 0.0
  %4402 = vmatpush1.xpose.msra.mxu0 0.0
  %4403 = vmatprep.subr.mxu0 0.0
  %4404 = vmatpush1.xpose.msra.mxu0 0.0
  %4405 = vmatprep.subr.mxu0 0.0
  %4406 = vmatpush1.xpose.msra.mxu0 0.0
  %4407 = vmatprep.subr.mxu0 0.0
  %4408 = vmatpush1.xpose.msra.mxu0 0.0
  %4409 = vmatprep.subr.mxu0 0.0
  %4410 = vmatpush1.xpose.msra.mxu0 0.0
  %4411 = vmatprep.subr.mxu0 0.0
  %4412 = vmatpush1.xpose.msra.mxu0 0.0
  %4413 = vmatprep.subr.mxu0 0.0
  %4414 = vmatpush1.xpose.msra.mxu0 0.0
  %4415 = vmatprep.subr.mxu0 0.0
  %4416 = vmatpush1.xpose.msra.mxu0 0.0
  %4417 = vmatprep.subr.mxu0 0.0
  %4418 = vmatpush1.xpose.msra.mxu0 0.0
  %4419 = vmatprep.subr.mxu0 0.0
  %4420 = vmatpush1.xpose.msra.mxu0 0.0
  %4421 = vmatprep.subr.mxu0 0.0
  %4422 = vmatpush1.xpose.msra.mxu0 0.0
  %4423 = vmatprep.subr.mxu0 0.0
  %4424 = vmatpush1.xpose.msra.mxu0 0.0
  %4425 = vmatprep.subr.mxu0 0.0
  %4426 = vmatpush1.xpose.msra.mxu0 0.0
  %4427 = vmatprep.subr.mxu0 0.0
  %4428 = vmatpush1.xpose.msra.mxu0 0.0
  %4429 = vmatprep.subr.mxu0 0.0
  %4430 = vmatpush1.xpose.msra.mxu0 0.0
  %4431 = vmatprep.subr.mxu0 0.0
  %4432 = vmatpush1.xpose.msra.mxu0 0.0
  %4433 = vmatprep.subr.mxu0 0.0
  %4434 = vmatpush1.xpose.msra.mxu0 0.0
  %4435 = vmatprep.subr.mxu0 0.0
  %4436 = vmatpush1.xpose.msra.mxu0 0.0
  %4437 = vmatprep.subr.mxu0 0.0
  %4438 = vmatpush1.xpose.msra.mxu0 0.0
  %4439 = vmatprep.mubr.f32.mxu0 0.0
  %4440 = vmatmul.mubr.f32.gmra.mrb[0].mxu0 %v4370
  %v4441 = vpop.f32.mrb[0].mxu0
  %v4442 = vadd.f32 %v1258, %v4441
  %v4443 = vpop.f32.mrb[0].mxu0
  %4444 = vdwg.mxu0
  %v4446 = vsel %vm1287, %v3556, 0
  %v4449 = vsel %vm1287, %v3852, 0
  %4451 = vmatprep.subr.mxu0 0.0
  %4452 = vmatpush1.xpose.msra.mxu0 %v4449
  %4453 = vmatprep.subr.mxu0 0.0
  %4454 = vmatpush1.xpose.msra.mxu0 0.0
  %4455 = vmatprep.subr.mxu0 0.0
  %4456 = vmatpush1.xpose.msra.mxu0 0.0
  %4457 = vmatprep.subr.mxu0 0.0
  %4458 = vmatpush1.xpose.msra.mxu0 0.0
  %4459 = vmatprep.subr.mxu0 0.0
  %4460 = vmatpush1.xpose.msra.mxu0 0.0
  %4461 = vmatprep.subr.mxu0 0.0
  %4462 = vmatpush1.xpose.msra.mxu0 0.0
  %4463 = vmatprep.subr.mxu0 0.0
  %4464 = vmatpush1.xpose.msra.mxu0 0.0
  %4465 = vmatprep.subr.mxu0 0.0
  %4466 = vmatpush1.xpose.msra.mxu0 0.0
  %4467 = vmatprep.subr.mxu0 0.0
  %4468 = vmatpush1.xpose.msra.mxu0 0.0
  %4469 = vmatprep.subr.mxu0 0.0
  %4470 = vmatpush1.xpose.msra.mxu0 0.0
  %4471 = vmatprep.subr.mxu0 0.0
  %4472 = vmatpush1.xpose.msra.mxu0 0.0
  %4473 = vmatprep.subr.mxu0 0.0
  %4474 = vmatpush1.xpose.msra.mxu0 0.0
  %4475 = vmatprep.subr.mxu0 0.0
  %4476 = vmatpush1.xpose.msra.mxu0 0.0
  %4477 = vmatprep.subr.mxu0 0.0
  %4478 = vmatpush1.xpose.msra.mxu0 0.0
  %4479 = vmatprep.subr.mxu0 0.0
  %4480 = vmatpush1.xpose.msra.mxu0 0.0
  %4481 = vmatprep.subr.mxu0 0.0
  %4482 = vmatpush1.xpose.msra.mxu0 0.0
  %4483 = vmatprep.subr.mxu0 0.0
  %4484 = vmatpush1.xpose.msra.mxu0 0.0
  %4485 = vmatprep.subr.mxu0 0.0
  %4486 = vmatpush1.xpose.msra.mxu0 0.0
  %4487 = vmatprep.subr.mxu0 0.0
  %4488 = vmatpush1.xpose.msra.mxu0 0.0
  %4489 = vmatprep.subr.mxu0 0.0
  %4490 = vmatpush1.xpose.msra.mxu0 0.0
  %4491 = vmatprep.subr.mxu0 0.0
  %4492 = vmatpush1.xpose.msra.mxu0 0.0
  %4493 = vmatprep.subr.mxu0 0.0
  %4494 = vmatpush1.xpose.msra.mxu0 0.0
  %4495 = vmatprep.subr.mxu0 0.0
  %4496 = vmatpush1.xpose.msra.mxu0 0.0
  %4497 = vmatprep.subr.mxu0 0.0
  %4498 = vmatpush1.xpose.msra.mxu0 0.0
  %4499 = vmatprep.subr.mxu0 0.0
  %4500 = vmatpush1.xpose.msra.mxu0 0.0
  %4501 = vmatprep.subr.mxu0 0.0
  %4502 = vmatpush1.xpose.msra.mxu0 0.0
  %4503 = vmatprep.subr.mxu0 0.0
  %4504 = vmatpush1.xpose.msra.mxu0 0.0
  %4505 = vmatprep.subr.mxu0 0.0
  %4506 = vmatpush1.xpose.msra.mxu0 0.0
  %4507 = vmatprep.subr.mxu0 0.0
  %4508 = vmatpush1.xpose.msra.mxu0 0.0
  %4509 = vmatprep.subr.mxu0 0.0
  %4510 = vmatpush1.xpose.msra.mxu0 0.0
  %4511 = vmatprep.subr.mxu0 0.0
  %4512 = vmatpush1.xpose.msra.mxu0 0.0
  %4513 = vmatprep.subr.mxu0 0.0
  %4514 = vmatpush1.xpose.msra.mxu0 0.0
  %4515 = vmatprep.mubr.f32.mxu0 0.0
  %4516 = vmatmul.mubr.f32.gmra.mrb[0].mxu0 %v4446
  %v4517 = vpop.f32.mrb[0].mxu0
  %v4518 = vadd.f32 %v1262, %v4517
  %v4519 = vpop.f32.mrb[0].mxu0
  %4520 = vdwg.mxu0
  %v4522 = vsel %vm1287, %v3621, 0
  %v4525 = vsel %vm1287, %v3917, 0
  %4527 = vmatprep.subr.mxu0 0.0
  %4528 = vmatpush1.xpose.msra.mxu0 %v4525
  %4529 = vmatprep.subr.mxu0 0.0
  %4530 = vmatpush1.xpose.msra.mxu0 0.0
  %4531 = vmatprep.subr.mxu0 0.0
  %4532 = vmatpush1.xpose.msra.mxu0 0.0
  %4533 = vmatprep.subr.mxu0 0.0
  %4534 = vmatpush1.xpose.msra.mxu0 0.0
  %4535 = vmatprep.subr.mxu0 0.0
  %4536 = vmatpush1.xpose.msra.mxu0 0.0
  %4537 = vmatprep.subr.mxu0 0.0
  %4538 = vmatpush1.xpose.msra.mxu0 0.0
  %4539 = vmatprep.subr.mxu0 0.0
  %4540 = vmatpush1.xpose.msra.mxu0 0.0
  %4541 = vmatprep.subr.mxu0 0.0
  %4542 = vmatpush1.xpose.msra.mxu0 0.0
  %4543 = vmatprep.subr.mxu0 0.0
  %4544 = vmatpush1.xpose.msra.mxu0 0.0
  %4545 = vmatprep.subr.mxu0 0.0
  %4546 = vmatpush1.xpose.msra.mxu0 0.0
  %4547 = vmatprep.subr.mxu0 0.0
  %4548 = vmatpush1.xpose.msra.mxu0 0.0
  %4549 = vmatprep.subr.mxu0 0.0
  %4550 = vmatpush1.xpose.msra.mxu0 0.0
  %4551 = vmatprep.subr.mxu0 0.0
  %4552 = vmatpush1.xpose.msra.mxu0 0.0
  %4553 = vmatprep.subr.mxu0 0.0
  %4554 = vmatpush1.xpose.msra.mxu0 0.0
  %4555 = vmatprep.subr.mxu0 0.0
  %4556 = vmatpush1.xpose.msra.mxu0 0.0
  %4557 = vmatprep.subr.mxu0 0.0
  %4558 = vmatpush1.xpose.msra.mxu0 0.0
  %4559 = vmatprep.subr.mxu0 0.0
  %4560 = vmatpush1.xpose.msra.mxu0 0.0
  %4561 = vmatprep.subr.mxu0 0.0
  %4562 = vmatpush1.xpose.msra.mxu0 0.0
  %4563 = vmatprep.subr.mxu0 0.0
  %4564 = vmatpush1.xpose.msra.mxu0 0.0
  %4565 = vmatprep.subr.mxu0 0.0
  %4566 = vmatpush1.xpose.msra.mxu0 0.0
  %4567 = vmatprep.subr.mxu0 0.0
  %4568 = vmatpush1.xpose.msra.mxu0 0.0
  %4569 = vmatprep.subr.mxu0 0.0
  %4570 = vmatpush1.xpose.msra.mxu0 0.0
  %4571 = vmatprep.subr.mxu0 0.0
  %4572 = vmatpush1.xpose.msra.mxu0 0.0
  %4573 = vmatprep.subr.mxu0 0.0
  %4574 = vmatpush1.xpose.msra.mxu0 0.0
  %4575 = vmatprep.subr.mxu0 0.0
  %4576 = vmatpush1.xpose.msra.mxu0 0.0
  %4577 = vmatprep.subr.mxu0 0.0
  %4578 = vmatpush1.xpose.msra.mxu0 0.0
  %4579 = vmatprep.subr.mxu0 0.0
  %4580 = vmatpush1.xpose.msra.mxu0 0.0
  %4581 = vmatprep.subr.mxu0 0.0
  %4582 = vmatpush1.xpose.msra.mxu0 0.0
  %4583 = vmatprep.subr.mxu0 0.0
  %4584 = vmatpush1.xpose.msra.mxu0 0.0
  %4585 = vmatprep.subr.mxu0 0.0
  %4586 = vmatpush1.xpose.msra.mxu0 0.0
  %4587 = vmatprep.subr.mxu0 0.0
  %4588 = vmatpush1.xpose.msra.mxu0 0.0
  %4589 = vmatprep.subr.mxu0 0.0
  %4590 = vmatpush1.xpose.msra.mxu0 0.0
  %4591 = vmatprep.mubr.f32.mxu0 0.0
  %4592 = vmatmul.mubr.f32.gmra.mrb[0].mxu0 %v4522
  %v4593 = vpop.f32.mrb[0].mxu0
  %v4594 = vadd.f32 %v1266, %v4593
  %v4595 = vpop.f32.mrb[0].mxu0
  %4596 = vdwg.mxu0
  %v4598 = vsel %vm1287, %v3622, 0
  %v4601 = vsel %vm1287, %v3918, 0
  %4603 = vmatprep.subr.mxu0 0.0
  %4604 = vmatpush1.xpose.msra.mxu0 %v4601
  %4605 = vmatprep.subr.mxu0 0.0
  %4606 = vmatpush1.xpose.msra.mxu0 0.0
  %4607 = vmatprep.subr.mxu0 0.0
  %4608 = vmatpush1.xpose.msra.mxu0 0.0
  %4609 = vmatprep.subr.mxu0 0.0
  %4610 = vmatpush1.xpose.msra.mxu0 0.0
  %4611 = vmatprep.subr.mxu0 0.0
  %4612 = vmatpush1.xpose.msra.mxu0 0.0
  %4613 = vmatprep.subr.mxu0 0.0
  %4614 = vmatpush1.xpose.msra.mxu0 0.0
  %4615 = vmatprep.subr.mxu0 0.0
  %4616 = vmatpush1.xpose.msra.mxu0 0.0
  %4617 = vmatprep.subr.mxu0 0.0
  %4618 = vmatpush1.xpose.msra.mxu0 0.0
  %4619 = vmatprep.subr.mxu0 0.0
  %4620 = vmatpush1.xpose.msra.mxu0 0.0
  %4621 = vmatprep.subr.mxu0 0.0
  %4622 = vmatpush1.xpose.msra.mxu0 0.0
  %4623 = vmatprep.subr.mxu0 0.0
  %4624 = vmatpush1.xpose.msra.mxu0 0.0
  %4625 = vmatprep.subr.mxu0 0.0
  %4626 = vmatpush1.xpose.msra.mxu0 0.0
  %4627 = vmatprep.subr.mxu0 0.0
  %4628 = vmatpush1.xpose.msra.mxu0 0.0
  %4629 = vmatprep.subr.mxu0 0.0
  %4630 = vmatpush1.xpose.msra.mxu0 0.0
  %4631 = vmatprep.subr.mxu0 0.0
  %4632 = vmatpush1.xpose.msra.mxu0 0.0
  %4633 = vmatprep.subr.mxu0 0.0
  %4634 = vmatpush1.xpose.msra.mxu0 0.0
  %4635 = vmatprep.subr.mxu0 0.0
  %4636 = vmatpush1.xpose.msra.mxu0 0.0
  %4637 = vmatprep.subr.mxu0 0.0
  %4638 = vmatpush1.xpose.msra.mxu0 0.0
  %4639 = vmatprep.subr.mxu0 0.0
  %4640 = vmatpush1.xpose.msra.mxu0 0.0
  %4641 = vmatprep.subr.mxu0 0.0
  %4642 = vmatpush1.xpose.msra.mxu0 0.0
  %4643 = vmatprep.subr.mxu0 0.0
  %4644 = vmatpush1.xpose.msra.mxu0 0.0
  %4645 = vmatprep.subr.mxu0 0.0
  %4646 = vmatpush1.xpose.msra.mxu0 0.0
  %4647 = vmatprep.subr.mxu0 0.0
  %4648 = vmatpush1.xpose.msra.mxu0 0.0
  %4649 = vmatprep.subr.mxu0 0.0
  %4650 = vmatpush1.xpose.msra.mxu0 0.0
  %4651 = vmatprep.subr.mxu0 0.0
  %4652 = vmatpush1.xpose.msra.mxu0 0.0
  %4653 = vmatprep.subr.mxu0 0.0
  %4654 = vmatpush1.xpose.msra.mxu0 0.0
  %4655 = vmatprep.subr.mxu0 0.0
  %4656 = vmatpush1.xpose.msra.mxu0 0.0
  %4657 = vmatprep.subr.mxu0 0.0
  %4658 = vmatpush1.xpose.msra.mxu0 0.0
  %4659 = vmatprep.subr.mxu0 0.0
  %4660 = vmatpush1.xpose.msra.mxu0 0.0
  %4661 = vmatprep.subr.mxu0 0.0
  %4662 = vmatpush1.xpose.msra.mxu0 0.0
  %4663 = vmatprep.subr.mxu0 0.0
  %4664 = vmatpush1.xpose.msra.mxu0 0.0
  %4665 = vmatprep.subr.mxu0 0.0
  %4666 = vmatpush1.xpose.msra.mxu0 0.0
  %4667 = vmatprep.mubr.f32.mxu0 0.0
  %4668 = vmatmul.mubr.f32.gmra.mrb[0].mxu0 %v4598
  %v4669 = vpop.f32.mrb[0].mxu0
  %v4670 = vadd.f32 %v1270, %v4669
  %v4671 = vpop.f32.mrb[0].mxu0
  %4672 = vdwg.mxu0
  %v4674 = vsel %vm1287, %v3623, 0
  %v4677 = vsel %vm1287, %v3919, 0
  %4679 = vmatprep.subr.mxu0 0.0
  %4680 = vmatpush1.xpose.msra.mxu0 %v4677
  %4681 = vmatprep.subr.mxu0 0.0
  %4682 = vmatpush1.xpose.msra.mxu0 0.0
  %4683 = vmatprep.subr.mxu0 0.0
  %4684 = vmatpush1.xpose.msra.mxu0 0.0
  %4685 = vmatprep.subr.mxu0 0.0
  %4686 = vmatpush1.xpose.msra.mxu0 0.0
  %4687 = vmatprep.subr.mxu0 0.0
  %4688 = vmatpush1.xpose.msra.mxu0 0.0
  %4689 = vmatprep.subr.mxu0 0.0
  %4690 = vmatpush1.xpose.msra.mxu0 0.0
  %4691 = vmatprep.subr.mxu0 0.0
  %4692 = vmatpush1.xpose.msra.mxu0 0.0
  %4693 = vmatprep.subr.mxu0 0.0
  %4694 = vmatpush1.xpose.msra.mxu0 0.0
  %4695 = vmatprep.subr.mxu0 0.0
  %4696 = vmatpush1.xpose.msra.mxu0 0.0
  %4697 = vmatprep.subr.mxu0 0.0
  %4698 = vmatpush1.xpose.msra.mxu0 0.0
  %4699 = vmatprep.subr.mxu0 0.0
  %4700 = vmatpush1.xpose.msra.mxu0 0.0
  %4701 = vmatprep.subr.mxu0 0.0
  %4702 = vmatpush1.xpose.msra.mxu0 0.0
  %4703 = vmatprep.subr.mxu0 0.0
  %4704 = vmatpush1.xpose.msra.mxu0 0.0
  %4705 = vmatprep.subr.mxu0 0.0
  %4706 = vmatpush1.xpose.msra.mxu0 0.0
  %4707 = vmatprep.subr.mxu0 0.0
  %4708 = vmatpush1.xpose.msra.mxu0 0.0
  %4709 = vmatprep.subr.mxu0 0.0
  %4710 = vmatpush1.xpose.msra.mxu0 0.0
  %4711 = vmatprep.subr.mxu0 0.0
  %4712 = vmatpush1.xpose.msra.mxu0 0.0
  %4713 = vmatprep.subr.mxu0 0.0
  %4714 = vmatpush1.xpose.msra.mxu0 0.0
  %4715 = vmatprep.subr.mxu0 0.0
  %4716 = vmatpush1.xpose.msra.mxu0 0.0
  %4717 = vmatprep.subr.mxu0 0.0
  %4718 = vmatpush1.xpose.msra.mxu0 0.0
  %4719 = vmatprep.subr.mxu0 0.0
  %4720 = vmatpush1.xpose.msra.mxu0 0.0
  %4721 = vmatprep.subr.mxu0 0.0
  %4722 = vmatpush1.xpose.msra.mxu0 0.0
  %4723 = vmatprep.subr.mxu0 0.0
  %4724 = vmatpush1.xpose.msra.mxu0 0.0
  %4725 = vmatprep.subr.mxu0 0.0
  %4726 = vmatpush1.xpose.msra.mxu0 0.0
  %4727 = vmatprep.subr.mxu0 0.0
  %4728 = vmatpush1.xpose.msra.mxu0 0.0
  %4729 = vmatprep.subr.mxu0 0.0
  %4730 = vmatpush1.xpose.msra.mxu0 0.0
  %4731 = vmatprep.subr.mxu0 0.0
  %4732 = vmatpush1.xpose.msra.mxu0 0.0
  %4733 = vmatprep.subr.mxu0 0.0
  %4734 = vmatpush1.xpose.msra.mxu0 0.0
  %4735 = vmatprep.subr.mxu0 0.0
  %4736 = vmatpush1.xpose.msra.mxu0 0.0
  %4737 = vmatprep.subr.mxu0 0.0
  %4738 = vmatpush1.xpose.msra.mxu0 0.0
  %4739 = vmatprep.subr.mxu0 0.0
  %4740 = vmatpush1.xpose.msra.mxu0 0.0
  %4741 = vmatprep.subr.mxu0 0.0
  %4742 = vmatpush1.xpose.msra.mxu0 0.0
  %4743 = vmatprep.mubr.f32.mxu0 0.0
  %4744 = vmatmul.mubr.f32.gmra.mrb[0].mxu0 %v4674
  %v4745 = vpop.f32.mrb[0].mxu0
  %v4746 = vadd.f32 %v1274, %v4745
  %v4747 = vpop.f32.mrb[0].mxu0
  %4748 = vdwg.mxu0
  %v4750 = vsel %vm1287, %v3624, 0
  %v4753 = vsel %vm1287, %v3920, 0
  %4755 = vmatprep.subr.mxu0 0.0
  %4756 = vmatpush1.xpose.msra.mxu0 %v4753
  %4757 = vmatprep.subr.mxu0 0.0
  %4758 = vmatpush1.xpose.msra.mxu0 0.0
  %4759 = vmatprep.subr.mxu0 0.0
  %4760 = vmatpush1.xpose.msra.mxu0 0.0
  %4761 = vmatprep.subr.mxu0 0.0
  %4762 = vmatpush1.xpose.msra.mxu0 0.0
  %4763 = vmatprep.subr.mxu0 0.0
  %4764 = vmatpush1.xpose.msra.mxu0 0.0
  %4765 = vmatprep.subr.mxu0 0.0
  %4766 = vmatpush1.xpose.msra.mxu0 0.0
  %4767 = vmatprep.subr.mxu0 0.0
  %4768 = vmatpush1.xpose.msra.mxu0 0.0
  %4769 = vmatprep.subr.mxu0 0.0
  %4770 = vmatpush1.xpose.msra.mxu0 0.0
  %4771 = vmatprep.subr.mxu0 0.0
  %4772 = vmatpush1.xpose.msra.mxu0 0.0
  %4773 = vmatprep.subr.mxu0 0.0
  %4774 = vmatpush1.xpose.msra.mxu0 0.0
  %4775 = vmatprep.subr.mxu0 0.0
  %4776 = vmatpush1.xpose.msra.mxu0 0.0
  %4777 = vmatprep.subr.mxu0 0.0
  %4778 = vmatpush1.xpose.msra.mxu0 0.0
  %4779 = vmatprep.subr.mxu0 0.0
  %4780 = vmatpush1.xpose.msra.mxu0 0.0
  %4781 = vmatprep.subr.mxu0 0.0
  %4782 = vmatpush1.xpose.msra.mxu0 0.0
  %4783 = vmatprep.subr.mxu0 0.0
  %4784 = vmatpush1.xpose.msra.mxu0 0.0
  %4785 = vmatprep.subr.mxu0 0.0
  %4786 = vmatpush1.xpose.msra.mxu0 0.0
  %4787 = vmatprep.subr.mxu0 0.0
  %4788 = vmatpush1.xpose.msra.mxu0 0.0
  %4789 = vmatprep.subr.mxu0 0.0
  %4790 = vmatpush1.xpose.msra.mxu0 0.0
  %4791 = vmatprep.subr.mxu0 0.0
  %4792 = vmatpush1.xpose.msra.mxu0 0.0
  %4793 = vmatprep.subr.mxu0 0.0
  %4794 = vmatpush1.xpose.msra.mxu0 0.0
  %4795 = vmatprep.subr.mxu0 0.0
  %4796 = vmatpush1.xpose.msra.mxu0 0.0
  %4797 = vmatprep.subr.mxu0 0.0
  %4798 = vmatpush1.xpose.msra.mxu0 0.0
  %4799 = vmatprep.subr.mxu0 0.0
  %4800 = vmatpush1.xpose.msra.mxu0 0.0
  %4801 = vmatprep.subr.mxu0 0.0
  %4802 = vmatpush1.xpose.msra.mxu0 0.0
  %4803 = vmatprep.subr.mxu0 0.0
  %4804 = vmatpush1.xpose.msra.mxu0 0.0
  %4805 = vmatprep.subr.mxu0 0.0
  %4806 = vmatpush1.xpose.msra.mxu0 0.0
  %4807 = vmatprep.subr.mxu0 0.0
  %4808 = vmatpush1.xpose.msra.mxu0 0.0
  %4809 = vmatprep.subr.mxu0 0.0
  %4810 = vmatpush1.xpose.msra.mxu0 0.0
  %4811 = vmatprep.subr.mxu0 0.0
  %4812 = vmatpush1.xpose.msra.mxu0 0.0
  %4813 = vmatprep.subr.mxu0 0.0
  %4814 = vmatpush1.xpose.msra.mxu0 0.0
  %4815 = vmatprep.subr.mxu0 0.0
  %4816 = vmatpush1.xpose.msra.mxu0 0.0
  %4817 = vmatprep.subr.mxu0 0.0
  %4818 = vmatpush1.xpose.msra.mxu0 0.0
  %4819 = vmatprep.mubr.f32.mxu0 0.0
  %4820 = vmatmul.mubr.f32.gmra.mrb[0].mxu0 %v4750
  %v4821 = vpop.f32.mrb[0].mxu0
  %v4822 = vadd.f32 %v1278, %v4821
  %v4823 = vpop.f32.mrb[0].mxu0
  %4824 = vdwg.mxu0
  %v4825 = vsel %vm1287, %v4290, -inf
  %4826 = vmax.xlane.f32.xlu0 %v4825
  %v4827 = vpop.xlane.xlu0 %4826
  %v4828 = vsel %vm1287, %v4366, -inf
  %4829 = vmax.xlane.f32.xlu0 %v4828
  %v4830 = vpop.xlane.xlu0 %4829
  %v4831 = vsel %vm1287, %v4442, -inf
  %4832 = vmax.xlane.f32.xlu0 %v4831
  %v4833 = vpop.xlane.xlu0 %4832
  %v4834 = vsel %vm1287, %v4518, -inf
  %4835 = vmax.xlane.f32.xlu0 %v4834
  %v4836 = vpop.xlane.xlu0 %4835
  %v4837 = vsel %vm1287, %v4594, -inf
  %4838 = vmax.xlane.f32.xlu0 %v4837
  %v4839 = vpop.xlane.xlu0 %4838
  %v4840 = vsel %vm1287, %v4670, -inf
  %4841 = vmax.xlane.f32.xlu0 %v4840
  %v4842 = vpop.xlane.xlu0 %4841
  %v4843 = vsel %vm1287, %v4746, -inf
  %4844 = vmax.xlane.f32.xlu0 %v4843
  %v4845 = vpop.xlane.xlu0 %4844
  %v4846 = vsel %vm1287, %v4822, -inf
  %4847 = vmax.xlane.f32.xlu0 %v4846
  %v4848 = vpop.xlane.xlu0 %4847
  %v4849 = vsub.f32 %v4290, %v4827
  %v4850 = vsub.f32 %v4366, %v4830
  %v4851 = vsub.f32 %v4442, %v4833
  %v4852 = vsub.f32 %v4518, %v4836
  %v4853 = vsub.f32 %v4594, %v4839
  %v4854 = vsub.f32 %v4670, %v4842
  %v4855 = vsub.f32 %v4746, %v4845
  %v4856 = vsub.f32 %v4822, %v4848
  %v4857 = vmul.f32 %v4849, 1.442695
  %v4858 = vpow.pop %v4857
  %v4859 = vmul.f32 %v4850, 1.442695
  %v4860 = vpow.pop %v4859
  %v4861 = vmul.f32 %v4851, 1.442695
  %v4862 = vpow.pop %v4861
  %v4863 = vmul.f32 %v4852, 1.442695
  %v4864 = vpow.pop %v4863
  %v4865 = vmul.f32 %v4853, 1.442695
  %v4866 = vpow.pop %v4865
  %v4867 = vmul.f32 %v4854, 1.442695
  %v4868 = vpow.pop %v4867
  %v4869 = vmul.f32 %v4855, 1.442695
  %v4870 = vpow.pop %v4869
  %v4871 = vmul.f32 %v4856, 1.442695
  %v4872 = vpow.pop %v4871
  %v4873 = vsel %vm1287, %v4858, 0.0
  %4874 = vadd.xlane.f32.xlu0 %v4873
  %v4875 = vpop.xlane.xlu0 %4874
  %v4876 = vsel %vm1287, %v4860, 0.0
  %4877 = vadd.xlane.f32.xlu0 %v4876
  %v4878 = vpop.xlane.xlu0 %4877
  %v4879 = vsel %vm1287, %v4862, 0.0
  %4880 = vadd.xlane.f32.xlu0 %v4879
  %v4881 = vpop.xlane.xlu0 %4880
  %v4882 = vsel %vm1287, %v4864, 0.0
  %4883 = vadd.xlane.f32.xlu0 %v4882
  %v4884 = vpop.xlane.xlu0 %4883
  %v4885 = vsel %vm1287, %v4866, 0.0
  %4886 = vadd.xlane.f32.xlu0 %v4885
  %v4887 = vpop.xlane.xlu0 %4886
  %v4888 = vsel %vm1287, %v4868, 0.0
  %4889 = vadd.xlane.f32.xlu0 %v4888
  %v4890 = vpop.xlane.xlu0 %4889
  %v4891 = vsel %vm1287, %v4870, 0.0
  %4892 = vadd.xlane.f32.xlu0 %v4891
  %v4893 = vpop.xlane.xlu0 %4892
  %v4894 = vsel %vm1287, %v4872, 0.0
  %4895 = vadd.xlane.f32.xlu0 %v4894
  %v4896 = vpop.xlane.xlu0 %4895
  %v4897 = vrcp.pop %v4875
  %v4898 = vrcp.pop %v4878
  %v4899 = vrcp.pop %v4881
  %v4900 = vrcp.pop %v4884
  %v4901 = vrcp.pop %v4887
  %v4902 = vrcp.pop %v4890
  %v4903 = vrcp.pop %v4893
  %v4904 = vrcp.pop %v4896
  %v4905 = vmul.f32 %v4858, %v4897
  %v4906 = vmul.f32 %v4860, %v4898
  %v4907 = vmul.f32 %v4862, %v4899
  %v4908 = vmul.f32 %v4864, %v4900
  %v4909 = vmul.f32 %v4866, %v4901
  %v4910 = vmul.f32 %v4868, %v4902
  %v4911 = vmul.f32 %v4870, %v4903
  %v4912 = vmul.f32 %v4872, %v4904
  %v4914 = vsel %vm1287, %v4905, 0
  %4916 = vmatprep.subr.mxu0 0.0
  %4917 = vmatpush1.msra.mxu0 %v4145
  %4918 = vmatprep.subr.mxu0 0.0
  %4919 = vmatpush1.msra.mxu0 0.0
  %4920 = vmatprep.subr.mxu0 0.0
  %4921 = vmatpush1.msra.mxu0 0.0
  %4922 = vmatprep.subr.mxu0 0.0
  %4923 = vmatpush1.msra.mxu0 0.0
  %4924 = vmatprep.subr.mxu0 0.0
  %4925 = vmatpush1.msra.mxu0 0.0
  %4926 = vmatprep.subr.mxu0 0.0
  %4927 = vmatpush1.msra.mxu0 0.0
  %4928 = vmatprep.subr.mxu0 0.0
  %4929 = vmatpush1.msra.mxu0 0.0
  %4930 = vmatprep.subr.mxu0 0.0
  %4931 = vmatpush1.msra.mxu0 0.0
  %4932 = vmatprep.subr.mxu0 0.0
  %4933 = vmatpush1.msra.mxu0 0.0
  %4934 = vmatprep.subr.mxu0 0.0
  %4935 = vmatpush1.msra.mxu0 0.0
  %4936 = vmatprep.subr.mxu0 0.0
  %4937 = vmatpush1.msra.mxu0 0.0
  %4938 = vmatprep.subr.mxu0 0.0
  %4939 = vmatpush1.msra.mxu0 0.0
  %4940 = vmatprep.subr.mxu0 0.0
  %4941 = vmatpush1.msra.mxu0 0.0
  %4942 = vmatprep.subr.mxu0 0.0
  %4943 = vmatpush1.msra.mxu0 0.0
  %4944 = vmatprep.subr.mxu0 0.0
  %4945 = vmatpush1.msra.mxu0 0.0
  %4946 = vmatprep.subr.mxu0 0.0
  %4947 = vmatpush1.msra.mxu0 0.0
  %4948 = vmatprep.subr.mxu0 0.0
  %4949 = vmatpush1.msra.mxu0 0.0
  %4950 = vmatprep.subr.mxu0 0.0
  %4951 = vmatpush1.msra.mxu0 0.0
  %4952 = vmatprep.subr.mxu0 0.0
  %4953 = vmatpush1.msra.mxu0 0.0
  %4954 = vmatprep.subr.mxu0 0.0
  %4955 = vmatpush1.msra.mxu0 0.0
  %4956 = vmatprep.subr.mxu0 0.0
  %4957 = vmatpush1.msra.mxu0 0.0
  %4958 = vmatprep.subr.mxu0 0.0
  %4959 = vmatpush1.msra.mxu0 0.0
  %4960 = vmatprep.subr.mxu0 0.0
  %4961 = vmatpush1.msra.mxu0 0.0
  %4962 = vmatprep.subr.mxu0 0.0
  %4963 = vmatpush1.msra.mxu0 0.0
  %4964 = vmatprep.subr.mxu0 0.0
  %4965 = vmatpush1.msra.mxu0 0.0
  %4966 = vmatprep.subr.mxu0 0.0
  %4967 = vmatpush1.msra.mxu0 0.0
  %4968 = vmatprep.subr.mxu0 0.0
  %4969 = vmatpush1.msra.mxu0 0.0
  %4970 = vmatprep.subr.mxu0 0.0
  %4971 = vmatpush1.msra.mxu0 0.0
  %4972 = vmatprep.subr.mxu0 0.0
  %4973 = vmatpush1.msra.mxu0 0.0
  %4974 = vmatprep.subr.mxu0 0.0
  %4975 = vmatpush1.msra.mxu0 0.0
  %4976 = vmatprep.subr.mxu0 0.0
  %4977 = vmatpush1.msra.mxu0 0.0
  %4978 = vmatprep.subr.mxu0 0.0
  %4979 = vmatpush1.msra.mxu0 0.0
  %4980 = vmatprep.mubr.f32.mxu0 0.0
  %4981 = vmatmul.mubr.f32.gmra.mrb[0].mxu0 %v4914
  %v4982 = vpop.f32.mrb[0].mxu0
  %v4983 = vadd.f32 0.0, %v4982
  %v4984 = vpop.f32.mrb[0].mxu0
  %4985 = vdwg.mxu0
  %v4987 = vsel %vm1287, %v4906, 0
  %4989 = vmatprep.subr.mxu0 0.0
  %4990 = vmatpush1.msra.mxu0 %v4146
  %4991 = vmatprep.subr.mxu0 0.0
  %4992 = vmatpush1.msra.mxu0 0.0
  %4993 = vmatprep.subr.mxu0 0.0
  %4994 = vmatpush1.msra.mxu0 0.0
  %4995 = vmatprep.subr.mxu0 0.0
  %4996 = vmatpush1.msra.mxu0 0.0
  %4997 = vmatprep.subr.mxu0 0.0
  %4998 = vmatpush1.msra.mxu0 0.0
  %4999 = vmatprep.subr.mxu0 0.0
  %5000 = vmatpush1.msra.mxu0 0.0
  %5001 = vmatprep.subr.mxu0 0.0
  %5002 = vmatpush1.msra.mxu0 0.0
  %5003 = vmatprep.subr.mxu0 0.0
  %5004 = vmatpush1.msra.mxu0 0.0
  %5005 = vmatprep.subr.mxu0 0.0
  %5006 = vmatpush1.msra.mxu0 0.0
  %5007 = vmatprep.subr.mxu0 0.0
  %5008 = vmatpush1.msra.mxu0 0.0
  %5009 = vmatprep.subr.mxu0 0.0
  %5010 = vmatpush1.msra.mxu0 0.0
  %5011 = vmatprep.subr.mxu0 0.0
  %5012 = vmatpush1.msra.mxu0 0.0
  %5013 = vmatprep.subr.mxu0 0.0
  %5014 = vmatpush1.msra.mxu0 0.0
  %5015 = vmatprep.subr.mxu0 0.0
  %5016 = vmatpush1.msra.mxu0 0.0
  %5017 = vmatprep.subr.mxu0 0.0
  %5018 = vmatpush1.msra.mxu0 0.0
  %5019 = vmatprep.subr.mxu0 0.0
  %5020 = vmatpush1.msra.mxu0 0.0
  %5021 = vmatprep.subr.mxu0 0.0
  %5022 = vmatpush1.msra.mxu0 0.0
  %5023 = vmatprep.subr.mxu0 0.0
  %5024 = vmatpush1.msra.mxu0 0.0
  %5025 = vmatprep.subr.mxu0 0.0
  %5026 = vmatpush1.msra.mxu0 0.0
  %5027 = vmatprep.subr.mxu0 0.0
  %5028 = vmatpush1.msra.mxu0 0.0
  %5029 = vmatprep.subr.mxu0 0.0
  %5030 = vmatpush1.msra.mxu0 0.0
  %5031 = vmatprep.subr.mxu0 0.0
  %5032 = vmatpush1.msra.mxu0 0.0
  %5033 = vmatprep.subr.mxu0 0.0
  %5034 = vmatpush1.msra.mxu0 0.0
  %5035 = vmatprep.subr.mxu0 0.0
  %5036 = vmatpush1.msra.mxu0 0.0
  %5037 = vmatprep.subr.mxu0 0.0
  %5038 = vmatpush1.msra.mxu0 0.0
  %5039 = vmatprep.subr.mxu0 0.0
  %5040 = vmatpush1.msra.mxu0 0.0
  %5041 = vmatprep.subr.mxu0 0.0
  %5042 = vmatpush1.msra.mxu0 0.0
  %5043 = vmatprep.subr.mxu0 0.0
  %5044 = vmatpush1.msra.mxu0 0.0
  %5045 = vmatprep.subr.mxu0 0.0
  %5046 = vmatpush1.msra.mxu0 0.0
  %5047 = vmatprep.subr.mxu0 0.0
  %5048 = vmatpush1.msra.mxu0 0.0
  %5049 = vmatprep.subr.mxu0 0.0
  %5050 = vmatpush1.msra.mxu0 0.0
  %5051 = vmatprep.subr.mxu0 0.0
  %5052 = vmatpush1.msra.mxu0 0.0
  %5053 = vmatprep.mubr.f32.mxu0 0.0
  %5054 = vmatmul.mubr.f32.gmra.mrb[0].mxu0 %v4987
  %v5055 = vpop.f32.mrb[0].mxu0
  %v5056 = vadd.f32 0.0, %v5055
  %v5057 = vpop.f32.mrb[0].mxu0
  %5058 = vdwg.mxu0
  %v5060 = vsel %vm1287, %v4907, 0
  %5062 = vmatprep.subr.mxu0 0.0
  %5063 = vmatpush1.msra.mxu0 %v4147
  %5064 = vmatprep.subr.mxu0 0.0
  %5065 = vmatpush1.msra.mxu0 0.0
  %5066 = vmatprep.subr.mxu0 0.0
  %5067 = vmatpush1.msra.mxu0 0.0
  %5068 = vmatprep.subr.mxu0 0.0
  %5069 = vmatpush1.msra.mxu0 0.0
  %5070 = vmatprep.subr.mxu0 0.0
  %5071 = vmatpush1.msra.mxu0 0.0
  %5072 = vmatprep.subr.mxu0 0.0
  %5073 = vmatpush1.msra.mxu0 0.0
  %5074 = vmatprep.subr.mxu0 0.0
  %5075 = vmatpush1.msra.mxu0 0.0
  %5076 = vmatprep.subr.mxu0 0.0
  %5077 = vmatpush1.msra.mxu0 0.0
  %5078 = vmatprep.subr.mxu0 0.0
  %5079 = vmatpush1.msra.mxu0 0.0
  %5080 = vmatprep.subr.mxu0 0.0
  %5081 = vmatpush1.msra.mxu0 0.0
  %5082 = vmatprep.subr.mxu0 0.0
  %5083 = vmatpush1.msra.mxu0 0.0
  %5084 = vmatprep.subr.mxu0 0.0
  %5085 = vmatpush1.msra.mxu0 0.0
  %5086 = vmatprep.subr.mxu0 0.0
  %5087 = vmatpush1.msra.mxu0 0.0
  %5088 = vmatprep.subr.mxu0 0.0
  %5089 = vmatpush1.msra.mxu0 0.0
  %5090 = vmatprep.subr.mxu0 0.0
  %5091 = vmatpush1.msra.mxu0 0.0
  %5092 = vmatprep.subr.mxu0 0.0
  %5093 = vmatpush1.msra.mxu0 0.0
  %5094 = vmatprep.subr.mxu0 0.0
  %5095 = vmatpush1.msra.mxu0 0.0
  %5096 = vmatprep.subr.mxu0 0.0
  %5097 = vmatpush1.msra.mxu0 0.0
  %5098 = vmatprep.subr.mxu0 0.0
  %5099 = vmatpush1.msra.mxu0 0.0
  %5100 = vmatprep.subr.mxu0 0.0
  %5101 = vmatpush1.msra.mxu0 0.0
  %5102 = vmatprep.subr.mxu0 0.0
  %5103 = vmatpush1.msra.mxu0 0.0
  %5104 = vmatprep.subr.mxu0 0.0
  %5105 = vmatpush1.msra.mxu0 0.0
  %5106 = vmatprep.subr.mxu0 0.0
  %5107 = vmatpush1.msra.mxu0 0.0
  %5108 = vmatprep.subr.mxu0 0.0
  %5109 = vmatpush1.msra.mxu0 0.0
  %5110 = vmatprep.subr.mxu0 0.0
  %5111 = vmatpush1.msra.mxu0 0.0
  %5112 = vmatprep.subr.mxu0 0.0
  %5113 = vmatpush1.msra.mxu0 0.0
  %5114 = vmatprep.subr.mxu0 0.0
  %5115 = vmatpush1.msra.mxu0 0.0
  %5116 = vmatprep.subr.mxu0 0.0
  %5117 = vmatpush1.msra.mxu0 0.0
  %5118 = vmatprep.subr.mxu0 0.0
  %5119 = vmatpush1.msra.mxu0 0.0
  %5120 = vmatprep.subr.mxu0 0.0
  %5121 = vmatpush1.msra.mxu0 0.0
  %5122 = vmatprep.subr.mxu0 0.0
  %5123 = vmatpush1.msra.mxu0 0.0
  %5124 = vmatprep.subr.mxu0 0.0
  %5125 = vmatpush1.msra.mxu0 0.0
  %5126 = vmatprep.mubr.f32.mxu0 0.0
  %5127 = vmatmul.mubr.f32.gmra.mrb[0].mxu0 %v5060
  %v5128 = vpop.f32.mrb[0].mxu0
  %v5129 = vadd.f32 0.0, %v5128
  %v5130 = vpop.f32.mrb[0].mxu0
  %5131 = vdwg.mxu0
  %v5133 = vsel %vm1287, %v4908, 0
  %5135 = vmatprep.subr.mxu0 0.0
  %5136 = vmatpush1.msra.mxu0 %v4148
  %5137 = vmatprep.subr.mxu0 0.0
  %5138 = vmatpush1.msra.mxu0 0.0
  %5139 = vmatprep.subr.mxu0 0.0
  %5140 = vmatpush1.msra.mxu0 0.0
  %5141 = vmatprep.subr.mxu0 0.0
  %5142 = vmatpush1.msra.mxu0 0.0
  %5143 = vmatprep.subr.mxu0 0.0
  %5144 = vmatpush1.msra.mxu0 0.0
  %5145 = vmatprep.subr.mxu0 0.0
  %5146 = vmatpush1.msra.mxu0 0.0
  %5147 = vmatprep.subr.mxu0 0.0
  %5148 = vmatpush1.msra.mxu0 0.0
  %5149 = vmatprep.subr.mxu0 0.0
  %5150 = vmatpush1.msra.mxu0 0.0
  %5151 = vmatprep.subr.mxu0 0.0
  %5152 = vmatpush1.msra.mxu0 0.0
  %5153 = vmatprep.subr.mxu0 0.0
  %5154 = vmatpush1.msra.mxu0 0.0
  %5155 = vmatprep.subr.mxu0 0.0
  %5156 = vmatpush1.msra.mxu0 0.0
  %5157 = vmatprep.subr.mxu0 0.0
  %5158 = vmatpush1.msra.mxu0 0.0
  %5159 = vmatprep.subr.mxu0 0.0
  %5160 = vmatpush1.msra.mxu0 0.0
  %5161 = vmatprep.subr.mxu0 0.0
  %5162 = vmatpush1.msra.mxu0 0.0
  %5163 = vmatprep.subr.mxu0 0.0
  %5164 = vmatpush1.msra.mxu0 0.0
  %5165 = vmatprep.subr.mxu0 0.0
  %5166 = vmatpush1.msra.mxu0 0.0
  %5167 = vmatprep.subr.mxu0 0.0
  %5168 = vmatpush1.msra.mxu0 0.0
  %5169 = vmatprep.subr.mxu0 0.0
  %5170 = vmatpush1.msra.mxu0 0.0
  %5171 = vmatprep.subr.mxu0 0.0
  %5172 = vmatpush1.msra.mxu0 0.0
  %5173 = vmatprep.subr.mxu0 0.0
  %5174 = vmatpush1.msra.mxu0 0.0
  %5175 = vmatprep.subr.mxu0 0.0
  %5176 = vmatpush1.msra.mxu0 0.0
  %5177 = vmatprep.subr.mxu0 0.0
  %5178 = vmatpush1.msra.mxu0 0.0
  %5179 = vmatprep.subr.mxu0 0.0
  %5180 = vmatpush1.msra.mxu0 0.0
  %5181 = vmatprep.subr.mxu0 0.0
  %5182 = vmatpush1.msra.mxu0 0.0
  %5183 = vmatprep.subr.mxu0 0.0
  %5184 = vmatpush1.msra.mxu0 0.0
  %5185 = vmatprep.subr.mxu0 0.0
  %5186 = vmatpush1.msra.mxu0 0.0
  %5187 = vmatprep.subr.mxu0 0.0
  %5188 = vmatpush1.msra.mxu0 0.0
  %5189 = vmatprep.subr.mxu0 0.0
  %5190 = vmatpush1.msra.mxu0 0.0
  %5191 = vmatprep.subr.mxu0 0.0
  %5192 = vmatpush1.msra.mxu0 0.0
  %5193 = vmatprep.subr.mxu0 0.0
  %5194 = vmatpush1.msra.mxu0 0.0
  %5195 = vmatprep.subr.mxu0 0.0
  %5196 = vmatpush1.msra.mxu0 0.0
  %5197 = vmatprep.subr.mxu0 0.0
  %5198 = vmatpush1.msra.mxu0 0.0
  %5199 = vmatprep.mubr.f32.mxu0 0.0
  %5200 = vmatmul.mubr.f32.gmra.mrb[0].mxu0 %v5133
  %v5201 = vpop.f32.mrb[0].mxu0
  %v5202 = vadd.f32 0.0, %v5201
  %v5203 = vpop.f32.mrb[0].mxu0
  %5204 = vdwg.mxu0
  %v5206 = vsel %vm1287, %v4909, 0
  %5208 = vmatprep.subr.mxu0 0.0
  %5209 = vmatpush1.msra.mxu0 %v4213
  %5210 = vmatprep.subr.mxu0 0.0
  %5211 = vmatpush1.msra.mxu0 0.0
  %5212 = vmatprep.subr.mxu0 0.0
  %5213 = vmatpush1.msra.mxu0 0.0
  %5214 = vmatprep.subr.mxu0 0.0
  %5215 = vmatpush1.msra.mxu0 0.0
  %5216 = vmatprep.subr.mxu0 0.0
  %5217 = vmatpush1.msra.mxu0 0.0
  %5218 = vmatprep.subr.mxu0 0.0
  %5219 = vmatpush1.msra.mxu0 0.0
  %5220 = vmatprep.subr.mxu0 0.0
  %5221 = vmatpush1.msra.mxu0 0.0
  %5222 = vmatprep.subr.mxu0 0.0
  %5223 = vmatpush1.msra.mxu0 0.0
  %5224 = vmatprep.subr.mxu0 0.0
  %5225 = vmatpush1.msra.mxu0 0.0
  %5226 = vmatprep.subr.mxu0 0.0
  %5227 = vmatpush1.msra.mxu0 0.0
  %5228 = vmatprep.subr.mxu0 0.0
  %5229 = vmatpush1.msra.mxu0 0.0
  %5230 = vmatprep.subr.mxu0 0.0
  %5231 = vmatpush1.msra.mxu0 0.0
  %5232 = vmatprep.subr.mxu0 0.0
  %5233 = vmatpush1.msra.mxu0 0.0
  %5234 = vmatprep.subr.mxu0 0.0
  %5235 = vmatpush1.msra.mxu0 0.0
  %5236 = vmatprep.subr.mxu0 0.0
  %5237 = vmatpush1.msra.mxu0 0.0
  %5238 = vmatprep.subr.mxu0 0.0
  %5239 = vmatpush1.msra.mxu0 0.0
  %5240 = vmatprep.subr.mxu0 0.0
  %5241 = vmatpush1.msra.mxu0 0.0
  %5242 = vmatprep.subr.mxu0 0.0
  %5243 = vmatpush1.msra.mxu0 0.0
  %5244 = vmatprep.subr.mxu0 0.0
  %5245 = vmatpush1.msra.mxu0 0.0
  %5246 = vmatprep.subr.mxu0 0.0
  %5247 = vmatpush1.msra.mxu0 0.0
  %5248 = vmatprep.subr.mxu0 0.0
  %5249 = vmatpush1.msra.mxu0 0.0
  %5250 = vmatprep.subr.mxu0 0.0
  %5251 = vmatpush1.msra.mxu0 0.0
  %5252 = vmatprep.subr.mxu0 0.0
  %5253 = vmatpush1.msra.mxu0 0.0
  %5254 = vmatprep.subr.mxu0 0.0
  %5255 = vmatpush1.msra.mxu0 0.0
  %5256 = vmatprep.subr.mxu0 0.0
  %5257 = vmatpush1.msra.mxu0 0.0
  %5258 = vmatprep.subr.mxu0 0.0
  %5259 = vmatpush1.msra.mxu0 0.0
  %5260 = vmatprep.subr.mxu0 0.0
  %5261 = vmatpush1.msra.mxu0 0.0
  %5262 = vmatprep.subr.mxu0 0.0
  %5263 = vmatpush1.msra.mxu0 0.0
  %5264 = vmatprep.subr.mxu0 0.0
  %5265 = vmatpush1.msra.mxu0 0.0
  %5266 = vmatprep.subr.mxu0 0.0
  %5267 = vmatpush1.msra.mxu0 0.0
  %5268 = vmatprep.subr.mxu0 0.0
  %5269 = vmatpush1.msra.mxu0 0.0
  %5270 = vmatprep.subr.mxu0 0.0
  %5271 = vmatpush1.msra.mxu0 0.0
  %5272 = vmatprep.mubr.f32.mxu0 0.0
  %5273 = vmatmul.mubr.f32.gmra.mrb[0].mxu0 %v5206
  %v5274 = vpop.f32.mrb[0].mxu0
  %v5275 = vadd.f32 0.0, %v5274
  %v5276 = vpop.f32.mrb[0].mxu0
  %5277 = vdwg.mxu0
  %v5279 = vsel %vm1287, %v4910, 0
  %5281 = vmatprep.subr.mxu0 0.0
  %5282 = vmatpush1.msra.mxu0 %v4214
  %5283 = vmatprep.subr.mxu0 0.0
  %5284 = vmatpush1.msra.mxu0 0.0
  %5285 = vmatprep.subr.mxu0 0.0
  %5286 = vmatpush1.msra.mxu0 0.0
  %5287 = vmatprep.subr.mxu0 0.0
  %5288 = vmatpush1.msra.mxu0 0.0
  %5289 = vmatprep.subr.mxu0 0.0
  %5290 = vmatpush1.msra.mxu0 0.0
  %5291 = vmatprep.subr.mxu0 0.0
  %5292 = vmatpush1.msra.mxu0 0.0
  %5293 = vmatprep.subr.mxu0 0.0
  %5294 = vmatpush1.msra.mxu0 0.0
  %5295 = vmatprep.subr.mxu0 0.0
  %5296 = vmatpush1.msra.mxu0 0.0
  %5297 = vmatprep.subr.mxu0 0.0
  %5298 = vmatpush1.msra.mxu0 0.0
  %5299 = vmatprep.subr.mxu0 0.0
  %5300 = vmatpush1.msra.mxu0 0.0
  %5301 = vmatprep.subr.mxu0 0.0
  %5302 = vmatpush1.msra.mxu0 0.0
  %5303 = vmatprep.subr.mxu0 0.0
  %5304 = vmatpush1.msra.mxu0 0.0
  %5305 = vmatprep.subr.mxu0 0.0
  %5306 = vmatpush1.msra.mxu0 0.0
  %5307 = vmatprep.subr.mxu0 0.0
  %5308 = vmatpush1.msra.mxu0 0.0
  %5309 = vmatprep.subr.mxu0 0.0
  %5310 = vmatpush1.msra.mxu0 0.0
  %5311 = vmatprep.subr.mxu0 0.0
  %5312 = vmatpush1.msra.mxu0 0.0
  %5313 = vmatprep.subr.mxu0 0.0
  %5314 = vmatpush1.msra.mxu0 0.0
  %5315 = vmatprep.subr.mxu0 0.0
  %5316 = vmatpush1.msra.mxu0 0.0
  %5317 = vmatprep.subr.mxu0 0.0
  %5318 = vmatpush1.msra.mxu0 0.0
  %5319 = vmatprep.subr.mxu0 0.0
  %5320 = vmatpush1.msra.mxu0 0.0
  %5321 = vmatprep.subr.mxu0 0.0
  %5322 = vmatpush1.msra.mxu0 0.0
  %5323 = vmatprep.subr.mxu0 0.0
  %5324 = vmatpush1.msra.mxu0 0.0
  %5325 = vmatprep.subr.mxu0 0.0
  %5326 = vmatpush1.msra.mxu0 0.0
  %5327 = vmatprep.subr.mxu0 0.0
  %5328 = vmatpush1.msra.mxu0 0.0
  %5329 = vmatprep.subr.mxu0 0.0
  %5330 = vmatpush1.msra.mxu0 0.0
  %5331 = vmatprep.subr.mxu0 0.0
  %5332 = vmatpush1.msra.mxu0 0.0
  %5333 = vmatprep.subr.mxu0 0.0
  %5334 = vmatpush1.msra.mxu0 0.0
  %5335 = vmatprep.subr.mxu0 0.0
  %5336 = vmatpush1.msra.mxu0 0.0
  %5337 = vmatprep.subr.mxu0 0.0
  %5338 = vmatpush1.msra.mxu0 0.0
  %5339 = vmatprep.subr.mxu0 0.0
  %5340 = vmatpush1.msra.mxu0 0.0
  %5341 = vmatprep.subr.mxu0 0.0
  %5342 = vmatpush1.msra.mxu0 0.0
  %5343 = vmatprep.subr.mxu0 0.0
  %5344 = vmatpush1.msra.mxu0 0.0
  %5345 = vmatprep.mubr.f32.mxu0 0.0
  %5346 = vmatmul.mubr.f32.gmra.mrb[0].mxu0 %v5279
  %v5347 = vpop.f32.mrb[0].mxu0
  %v5348 = vadd.f32 0.0, %v5347
  %v5349 = vpop.f32.mrb[0].mxu0
  %5350 = vdwg.mxu0
  %v5352 = vsel %vm1287, %v4911, 0
  %5354 = vmatprep.subr.mxu0 0.0
  %5355 = vmatpush1.msra.mxu0 %v4215
  %5356 = vmatprep.subr.mxu0 0.0
  %5357 = vmatpush1.msra.mxu0 0.0
  %5358 = vmatprep.subr.mxu0 0.0
  %5359 = vmatpush1.msra.mxu0 0.0
  %5360 = vmatprep.subr.mxu0 0.0
  %5361 = vmatpush1.msra.mxu0 0.0
  %5362 = vmatprep.subr.mxu0 0.0
  %5363 = vmatpush1.msra.mxu0 0.0
  %5364 = vmatprep.subr.mxu0 0.0
  %5365 = vmatpush1.msra.mxu0 0.0
  %5366 = vmatprep.subr.mxu0 0.0
  %5367 = vmatpush1.msra.mxu0 0.0
  %5368 = vmatprep.subr.mxu0 0.0
  %5369 = vmatpush1.msra.mxu0 0.0
  %5370 = vmatprep.subr.mxu0 0.0
  %5371 = vmatpush1.msra.mxu0 0.0
  %5372 = vmatprep.subr.mxu0 0.0
  %5373 = vmatpush1.msra.mxu0 0.0
  %5374 = vmatprep.subr.mxu0 0.0
  %5375 = vmatpush1.msra.mxu0 0.0
  %5376 = vmatprep.subr.mxu0 0.0
  %5377 = vmatpush1.msra.mxu0 0.0
  %5378 = vmatprep.subr.mxu0 0.0
  %5379 = vmatpush1.msra.mxu0 0.0
  %5380 = vmatprep.subr.mxu0 0.0
  %5381 = vmatpush1.msra.mxu0 0.0
  %5382 = vmatprep.subr.mxu0 0.0
  %5383 = vmatpush1.msra.mxu0 0.0
  %5384 = vmatprep.subr.mxu0 0.0
  %5385 = vmatpush1.msra.mxu0 0.0
  %5386 = vmatprep.subr.mxu0 0.0
  %5387 = vmatpush1.msra.mxu0 0.0
  %5388 = vmatprep.subr.mxu0 0.0
  %5389 = vmatpush1.msra.mxu0 0.0
  %5390 = vmatprep.subr.mxu0 0.0
  %5391 = vmatpush1.msra.mxu0 0.0
  %5392 = vmatprep.subr.mxu0 0.0
  %5393 = vmatpush1.msra.mxu0 0.0
  %5394 = vmatprep.subr.mxu0 0.0
  %5395 = vmatpush1.msra.mxu0 0.0
  %5396 = vmatprep.subr.mxu0 0.0
  %5397 = vmatpush1.msra.mxu0 0.0
  %5398 = vmatprep.subr.mxu0 0.0
  %5399 = vmatpush1.msra.mxu0 0.0
  %5400 = vmatprep.subr.mxu0 0.0
  %5401 = vmatpush1.msra.mxu0 0.0
  %5402 = vmatprep.subr.mxu0 0.0
  %5403 = vmatpush1.msra.mxu0 0.0
  %5404 = vmatprep.subr.mxu0 0.0
  %5405 = vmatpush1.msra.mxu0 0.0
  %5406 = vmatprep.subr.mxu0 0.0
  %5407 = vmatpush1.msra.mxu0 0.0
  %5408 = vmatprep.subr.mxu0 0.0
  %5409 = vmatpush1.msra.mxu0 0.0
  %5410 = vmatprep.subr.mxu0 0.0
  %5411 = vmatpush1.msra.mxu0 0.0
  %5412 = vmatprep.subr.mxu0 0.0
  %5413 = vmatpush1.msra.mxu0 0.0
  %5414 = vmatprep.subr.mxu0 0.0
  %5415 = vmatpush1.msra.mxu0 0.0
  %5416 = vmatprep.subr.mxu0 0.0
  %5417 = vmatpush1.msra.mxu0 0.0
  %5418 = vmatprep.mubr.f32.mxu0 0.0
  %5419 = vmatmul.mubr.f32.gmra.mrb[0].mxu0 %v5352
  %v5420 = vpop.f32.mrb[0].mxu0
  %v5421 = vadd.f32 0.0, %v5420
  %v5422 = vpop.f32.mrb[0].mxu0
  %5423 = vdwg.mxu0
  %v5425 = vsel %vm1287, %v4912, 0
  %5427 = vmatprep.subr.mxu0 0.0
  %5428 = vmatpush1.msra.mxu0 %v4216
  %5429 = vmatprep.subr.mxu0 0.0
  %5430 = vmatpush1.msra.mxu0 0.0
  %5431 = vmatprep.subr.mxu0 0.0
  %5432 = vmatpush1.msra.mxu0 0.0
  %5433 = vmatprep.subr.mxu0 0.0
  %5434 = vmatpush1.msra.mxu0 0.0
  %5435 = vmatprep.subr.mxu0 0.0
  %5436 = vmatpush1.msra.mxu0 0.0
  %5437 = vmatprep.subr.mxu0 0.0
  %5438 = vmatpush1.msra.mxu0 0.0
  %5439 = vmatprep.subr.mxu0 0.0
  %5440 = vmatpush1.msra.mxu0 0.0
  %5441 = vmatprep.subr.mxu0 0.0
  %5442 = vmatpush1.msra.mxu0 0.0
  %5443 = vmatprep.subr.mxu0 0.0
  %5444 = vmatpush1.msra.mxu0 0.0
  %5445 = vmatprep.subr.mxu0 0.0
  %5446 = vmatpush1.msra.mxu0 0.0
  %5447 = vmatprep.subr.mxu0 0.0
  %5448 = vmatpush1.msra.mxu0 0.0
  %5449 = vmatprep.subr.mxu0 0.0
  %5450 = vmatpush1.msra.mxu0 0.0
  %5451 = vmatprep.subr.mxu0 0.0
  %5452 = vmatpush1.msra.mxu0 0.0
  %5453 = vmatprep.subr.mxu0 0.0
  %5454 = vmatpush1.msra.mxu0 0.0
  %5455 = vmatprep.subr.mxu0 0.0
  %5456 = vmatpush1.msra.mxu0 0.0
  %5457 = vmatprep.subr.mxu0 0.0
  %5458 = vmatpush1.msra.mxu0 0.0
  %5459 = vmatprep.subr.mxu0 0.0
  %5460 = vmatpush1.msra.mxu0 0.0
  %5461 = vmatprep.subr.mxu0 0.0
  %5462 = vmatpush1.msra.mxu0 0.0
  %5463 = vmatprep.subr.mxu0 0.0
  %5464 = vmatpush1.msra.mxu0 0.0
  %5465 = vmatprep.subr.mxu0 0.0
  %5466 = vmatpush1.msra.mxu0 0.0
  %5467 = vmatprep.subr.mxu0 0.0
  %5468 = vmatpush1.msra.mxu0 0.0
  %5469 = vmatprep.subr.mxu0 0.0
  %5470 = vmatpush1.msra.mxu0 0.0
  %5471 = vmatprep.subr.mxu0 0.0
  %5472 = vmatpush1.msra.mxu0 0.0
  %5473 = vmatprep.subr.mxu0 0.0
  %5474 = vmatpush1.msra.mxu0 0.0
  %5475 = vmatprep.subr.mxu0 0.0
  %5476 = vmatpush1.msra.mxu0 0.0
  %5477 = vmatprep.subr.mxu0 0.0
  %5478 = vmatpush1.msra.mxu0 0.0
  %5479 = vmatprep.subr.mxu0 0.0
  %5480 = vmatpush1.msra.mxu0 0.0
  %5481 = vmatprep.subr.mxu0 0.0
  %5482 = vmatpush1.msra.mxu0 0.0
  %5483 = vmatprep.subr.mxu0 0.0
  %5484 = vmatpush1.msra.mxu0 0.0
  %5485 = vmatprep.subr.mxu0 0.0
  %5486 = vmatpush1.msra.mxu0 0.0
  %5487 = vmatprep.subr.mxu0 0.0
  %5488 = vmatpush1.msra.mxu0 0.0
  %5489 = vmatprep.subr.mxu0 0.0
  %5490 = vmatpush1.msra.mxu0 0.0
  %5491 = vmatprep.mubr.f32.mxu0 0.0
  %5492 = vmatmul.mubr.f32.gmra.mrb[0].mxu0 %v5425
  %v5493 = vpop.f32.mrb[0].mxu0
  %v5494 = vadd.f32 0.0, %v5493
  %v5495 = vpop.f32.mrb[0].mxu0
  %5496 = vdwg.mxu0
  %v5497 = vcombine.low %v4983, %v5129
  %v5498 = vcombine.high %v4983, %v5129
  %v5500 = vunpack.c.l.s4 1983009808
  %v5501 = vunpack.c.0.s8 %v5500
  %v5502 = vlaneseq
  %v5503 = vshrl.u32 %v5502, 7
  %v5504 = vsub.s32 %v5501, %v5503
  %v5505 = vrot.slane %v5497, %v5504
  %v5507 = vunpack.c.l.s4 1983009808
  %v5508 = vunpack.c.0.s8 %v5507
  %v5509 = vlaneseq
  %v5510 = vshrl.u32 %v5509, 7
  %v5511 = vsub.s32 %v5508, %v5510
  %v5512 = vrot.slane %v5498, %v5511
  %v5513 = vcombine.low %v5056, %v5202
  %v5514 = vcombine.high %v5056, %v5202
  %v5516 = vunpack.c.l.s4 1983009808
  %v5517 = vunpack.c.0.s8 %v5516
  %v5518 = vlaneseq
  %v5519 = vshrl.u32 %v5518, 7
  %v5520 = vsub.s32 %v5517, %v5519
  %v5521 = vrot.slane %v5513, %v5520
  %v5523 = vunpack.c.l.s4 1983009808
  %v5524 = vunpack.c.0.s8 %v5523
  %v5525 = vlaneseq
  %v5526 = vshrl.u32 %v5525, 7
  %v5527 = vsub.s32 %v5524, %v5526
  %v5528 = vrot.slane %v5514, %v5527
  %v5529 = vcombine.low %v5505, %v5521
  %v5530 = vcombine.high %v5505, %v5521
  %v5532 = vunpack.c.l.s4 1934713408
  %v5533 = vunpack.c.0.s8 %v5532
  %v5534 = vlaneseq
  %v5535 = vshrl.u32 %v5534, 7
  %v5536 = vsub.s32 %v5533, %v5535
  %v5537 = vrot.slane %v5529, %v5536
  %v5539 = vunpack.c.l.s4 1934713408
  %v5540 = vunpack.c.0.s8 %v5539
  %v5541 = vlaneseq
  %v5542 = vshrl.u32 %v5541, 7
  %v5543 = vsub.s32 %v5540, %v5542
  %v5544 = vrot.slane %v5530, %v5543
  %v5545 = vcombine.low %v5512, %v5528
  %v5546 = vcombine.high %v5512, %v5528
  %v5548 = vunpack.c.l.s4 1934713408
  %v5549 = vunpack.c.0.s8 %v5548
  %v5550 = vlaneseq
  %v5551 = vshrl.u32 %v5550, 7
  %v5552 = vsub.s32 %v5549, %v5551
  %v5553 = vrot.slane %v5545, %v5552
  %v5555 = vunpack.c.l.s4 1934713408
  %v5556 = vunpack.c.0.s8 %v5555
  %v5557 = vlaneseq
  %v5558 = vshrl.u32 %v5557, 7
  %v5559 = vsub.s32 %v5556, %v5558
  %v5560 = vrot.slane %v5546, %v5559
  %v5561 = vcombine.high %v5537, 0.0
  %v5562 = vcombine.high %v5544, 0.0
  %v5563 = vcombine.high %v5553, 0.0
  %v5564 = vcombine.high %v5560, 0.0
  %v5565 = vcombine.low %v5275, %v5421
  %v5566 = vcombine.high %v5275, %v5421
  %v5568 = vunpack.c.l.s4 1983009808
  %v5569 = vunpack.c.0.s8 %v5568
  %v5570 = vlaneseq
  %v5571 = vshrl.u32 %v5570, 7
  %v5572 = vsub.s32 %v5569, %v5571
  %v5573 = vrot.slane %v5565, %v5572
  %v5575 = vunpack.c.l.s4 1983009808
  %v5576 = vunpack.c.0.s8 %v5575
  %v5577 = vlaneseq
  %v5578 = vshrl.u32 %v5577, 7
  %v5579 = vsub.s32 %v5576, %v5578
  %v5580 = vrot.slane %v5566, %v5579
  %v5581 = vcombine.low %v5348, %v5494
  %v5582 = vcombine.high %v5348, %v5494
  %v5584 = vunpack.c.l.s4 1983009808
  %v5585 = vunpack.c.0.s8 %v5584
  %v5586 = vlaneseq
  %v5587 = vshrl.u32 %v5586, 7
  %v5588 = vsub.s32 %v5585, %v5587
  %v5589 = vrot.slane %v5581, %v5588
  %v5591 = vunpack.c.l.s4 1983009808
  %v5592 = vunpack.c.0.s8 %v5591
  %v5593 = vlaneseq
  %v5594 = vshrl.u32 %v5593, 7
  %v5595 = vsub.s32 %v5592, %v5594
  %v5596 = vrot.slane %v5582, %v5595
  %v5597 = vcombine.low %v5573, %v5589
  %v5598 = vcombine.high %v5573, %v5589
  %v5600 = vunpack.c.l.s4 1934713408
  %v5601 = vunpack.c.0.s8 %v5600
  %v5602 = vlaneseq
  %v5603 = vshrl.u32 %v5602, 7
  %v5604 = vsub.s32 %v5601, %v5603
  %v5605 = vrot.slane %v5597, %v5604
  %v5607 = vunpack.c.l.s4 1934713408
  %v5608 = vunpack.c.0.s8 %v5607
  %v5609 = vlaneseq
  %v5610 = vshrl.u32 %v5609, 7
  %v5611 = vsub.s32 %v5608, %v5610
  %v5612 = vrot.slane %v5598, %v5611
  %v5613 = vcombine.low %v5580, %v5596
  %v5614 = vcombine.high %v5580, %v5596
  %v5616 = vunpack.c.l.s4 1934713408
  %v5617 = vunpack.c.0.s8 %v5616
  %v5618 = vlaneseq
  %v5619 = vshrl.u32 %v5618, 7
  %v5620 = vsub.s32 %v5617, %v5619
  %v5621 = vrot.slane %v5613, %v5620
  %v5623 = vunpack.c.l.s4 1934713408
  %v5624 = vunpack.c.0.s8 %v5623
  %v5625 = vlaneseq
  %v5626 = vshrl.u32 %v5625, 7
  %v5627 = vsub.s32 %v5624, %v5626
  %v5628 = vrot.slane %v5614, %v5627
  %v5629 = vcombine.high %v5605, 0.0
  %v5630 = vcombine.high %v5612, 0.0
  %v5631 = vcombine.high %v5621, 0.0
  %v5632 = vcombine.high %v5628, 0.0
  %v5633 = vcombine.low %v5537, %v5544
  %v5635 = vunpack.c.l.s4 1983009808
  %v5636 = vunpack.c.0.s8 %v5635
  %v5637 = vlaneseq
  %v5638 = vshrl.u32 %v5637, 7
  %v5639 = vsub.s32 %v5636, %v5638
  %v5640 = vrot.slane %v5633, %v5639
  %v5641 = vcombine.low %v5561, %v5562
  %v5643 = vunpack.c.l.s4 1983009808
  %v5644 = vunpack.c.0.s8 %v5643
  %v5645 = vlaneseq
  %v5646 = vshrl.u32 %v5645, 7
  %v5647 = vsub.s32 %v5644, %v5646
  %v5648 = vrot.slane %v5641, %v5647
  %v5649 = vcombine.low %v5553, %v5560
  %v5651 = vunpack.c.l.s4 1983009808
  %v5652 = vunpack.c.0.s8 %v5651
  %v5653 = vlaneseq
  %v5654 = vshrl.u32 %v5653, 7
  %v5655 = vsub.s32 %v5652, %v5654
  %v5656 = vrot.slane %v5649, %v5655
  %v5657 = vcombine.low %v5563, %v5564
  %v5659 = vunpack.c.l.s4 1983009808
  %v5660 = vunpack.c.0.s8 %v5659
  %v5661 = vlaneseq
  %v5662 = vshrl.u32 %v5661, 7
  %v5663 = vsub.s32 %v5660, %v5662
  %v5664 = vrot.slane %v5657, %v5663
  %v5665 = vcombine.low %v5640, %v5648
  %v5666 = vcombine.high %v5640, %v5648
  %v5668 = vunpack.c.l.s4 1934713408
  %v5669 = vunpack.c.0.s8 %v5668
  %v5670 = vlaneseq
  %v5671 = vshrl.u32 %v5670, 7
  %v5672 = vsub.s32 %v5669, %v5671
  %v5673 = vrot.slane %v5665, %v5672
  %v5675 = vunpack.c.l.s4 1934713408
  %v5676 = vunpack.c.0.s8 %v5675
  %v5677 = vlaneseq
  %v5678 = vshrl.u32 %v5677, 7
  %v5679 = vsub.s32 %v5676, %v5678
  %v5680 = vrot.slane %v5666, %v5679
  %v5681 = vcombine.low %v5656, %v5664
  %v5682 = vcombine.high %v5656, %v5664
  %v5684 = vunpack.c.l.s4 1934713408
  %v5685 = vunpack.c.0.s8 %v5684
  %v5686 = vlaneseq
  %v5687 = vshrl.u32 %v5686, 7
  %v5688 = vsub.s32 %v5685, %v5687
  %v5689 = vrot.slane %v5681, %v5688
  %v5691 = vunpack.c.l.s4 1934713408
  %v5692 = vunpack.c.0.s8 %v5691
  %v5693 = vlaneseq
  %v5694 = vshrl.u32 %v5693, 7
  %v5695 = vsub.s32 %v5692, %v5694
  %v5696 = vrot.slane %v5682, %v5695
  %v5697 = vcombine.low %v5673, %v5689
  %v5698 = vcombine.high %v5673, %v5689
  %v5699 = vcombine.low %v5680, %v5696
  %v5700 = vcombine.high %v5680, %v5696
  %v5701 = vcombine.low %v5605, %v5612
  %v5703 = vunpack.c.l.s4 1983009808
  %v5704 = vunpack.c.0.s8 %v5703
  %v5705 = vlaneseq
  %v5706 = vshrl.u32 %v5705, 7
  %v5707 = vsub.s32 %v5704, %v5706
  %v5708 = vrot.slane %v5701, %v5707
  %v5709 = vcombine.low %v5629, %v5630
  %v5711 = vunpack.c.l.s4 1983009808
  %v5712 = vunpack.c.0.s8 %v5711
  %v5713 = vlaneseq
  %v5714 = vshrl.u32 %v5713, 7
  %v5715 = vsub.s32 %v5712, %v5714
  %v5716 = vrot.slane %v5709, %v5715
  %v5717 = vcombine.low %v5621, %v5628
  %v5719 = vunpack.c.l.s4 1983009808
  %v5720 = vunpack.c.0.s8 %v5719
  %v5721 = vlaneseq
  %v5722 = vshrl.u32 %v5721, 7
  %v5723 = vsub.s32 %v5720, %v5722
  %v5724 = vrot.slane %v5717, %v5723
  %v5725 = vcombine.low %v5631, %v5632
  %v5727 = vunpack.c.l.s4 1983009808
  %v5728 = vunpack.c.0.s8 %v5727
  %v5729 = vlaneseq
  %v5730 = vshrl.u32 %v5729, 7
  %v5731 = vsub.s32 %v5728, %v5730
  %v5732 = vrot.slane %v5725, %v5731
  %v5733 = vcombine.low %v5708, %v5716
  %v5734 = vcombine.high %v5708, %v5716
  %v5736 = vunpack.c.l.s4 1934713408
  %v5737 = vunpack.c.0.s8 %v5736
  %v5738 = vlaneseq
  %v5739 = vshrl.u32 %v5738, 7
  %v5740 = vsub.s32 %v5737, %v5739
  %v5741 = vrot.slane %v5733, %v5740
  %v5743 = vunpack.c.l.s4 1934713408
  %v5744 = vunpack.c.0.s8 %v5743
  %v5745 = vlaneseq
  %v5746 = vshrl.u32 %v5745, 7
  %v5747 = vsub.s32 %v5744, %v5746
  %v5748 = vrot.slane %v5734, %v5747
  %v5749 = vcombine.low %v5724, %v5732
  %v5750 = vcombine.high %v5724, %v5732
  %v5752 = vunpack.c.l.s4 1934713408
  %v5753 = vunpack.c.0.s8 %v5752
  %v5754 = vlaneseq
  %v5755 = vshrl.u32 %v5754, 7
  %v5756 = vsub.s32 %v5753, %v5755
  %v5757 = vrot.slane %v5749, %v5756
  %v5759 = vunpack.c.l.s4 1934713408
  %v5760 = vunpack.c.0.s8 %v5759
  %v5761 = vlaneseq
  %v5762 = vshrl.u32 %v5761, 7
  %v5763 = vsub.s32 %v5760, %v5762
  %v5764 = vrot.slane %v5750, %v5763
  %v5765 = vcombine.low %v5741, %v5757
  %v5766 = vcombine.high %v5741, %v5757
  %v5767 = vcombine.low %v5748, %v5764
  %v5768 = vcombine.high %v5748, %v5764
  %5771 = vrot.lane.b32.xlu0 %v5698, 8
  %v5772 = vpop.permute.xlu0 %5771
  %5773 = vrot.lane.b32.xlu0 %v5766, 8
  %v5774 = vpop.permute.xlu0 %5773
  %5779 = vrot.lane.b32.xlu0 %v5699, 16
  %v5780 = vpop.permute.xlu0 %5779
  %5781 = vrot.lane.b32.xlu0 %v5767, 16
  %v5782 = vpop.permute.xlu0 %5781
  %5787 = vrot.lane.b32.xlu0 %v5700, 24
  %v5788 = vpop.permute.xlu0 %5787
  %5789 = vrot.lane.b32.xlu0 %v5768, 24
  %v5790 = vpop.permute.xlu0 %5789
  %v5793 = vsel %vm1287, %v5697, %v5772
  %v5794 = vsel %vm1287, %v5765, %v5774
  %v5795 = vsel %vm2866, %v5793, %v5780
  %v5796 = vsel %vm2866, %v5794, %v5782
  %v5797 = vsel %vm2869, %v5795, %v5788
  %v5798 = vsel %vm2869, %v5796, %v5790
  %s5799 = scalar_lea.vmem %s6, 32
  %v5800 = vld [vmem:[%s5799] sm:$0xff]
  %v5801 = vld [vmem:[%s5799 + $0x8] sm:$0xff]
  %v5802 = vld [vmem:[%s5799 + $0x10] sm:$0xff]
  %v5803 = vld [vmem:[%s5799 + $0x18] sm:$0xff]
  %v5804 = vlaneseq
  %v5805 = vshrl.u32 %v5804, 7
  %v5806 = vsub.s32 1, %v5805
  %v5807 = vrot.slane %v3242, %v5806
  %v5809 = vsel %vm150, %v5797, 0
  %v5812 = vsel %vm150, %v5798, 0
  %5814 = vmatprep.subr.mxu0 0.0
  %5815 = vmatpush1.msra.mxu0 %v5800
  %5816 = vmatprep.subr.mxu0 0.0
  %5817 = vmatpush1.msra.mxu0 %v5801
  %5818 = vmatprep.subr.mxu0 0.0
  %5819 = vmatpush1.msra.mxu0 %v5802
  %5820 = vmatprep.subr.mxu0 0.0
  %5821 = vmatpush1.msra.mxu0 %v5803
  %5822 = vmatprep.subr.mxu0 0.0
  %5823 = vmatpush1.msra.mxu0 0.0
  %5824 = vmatprep.subr.mxu0 0.0
  %5825 = vmatpush1.msra.mxu0 0.0
  %5826 = vmatprep.subr.mxu0 0.0
  %5827 = vmatpush1.msra.mxu0 0.0
  %5828 = vmatprep.subr.mxu0 0.0
  %5829 = vmatpush1.msra.mxu0 0.0
  %5830 = vmatprep.subr.mxu0 0.0
  %5831 = vmatpush1.msra.mxu0 0.0
  %5832 = vmatprep.subr.mxu0 0.0
  %5833 = vmatpush1.msra.mxu0 0.0
  %5834 = vmatprep.subr.mxu0 0.0
  %5835 = vmatpush1.msra.mxu0 0.0
  %5836 = vmatprep.subr.mxu0 0.0
  %5837 = vmatpush1.msra.mxu0 0.0
  %5838 = vmatprep.subr.mxu0 0.0
  %5839 = vmatpush1.msra.mxu0 0.0
  %5840 = vmatprep.subr.mxu0 0.0
  %5841 = vmatpush1.msra.mxu0 0.0
  %5842 = vmatprep.subr.mxu0 0.0
  %5843 = vmatpush1.msra.mxu0 0.0
  %5844 = vmatprep.subr.mxu0 0.0
  %5845 = vmatpush1.msra.mxu0 0.0
  %5846 = vmatprep.subr.mxu0 0.0
  %5847 = vmatpush1.msra.mxu0 0.0
  %5848 = vmatprep.subr.mxu0 0.0
  %5849 = vmatpush1.msra.mxu0 0.0
  %5850 = vmatprep.subr.mxu0 0.0
  %5851 = vmatpush1.msra.mxu0 0.0
  %5852 = vmatprep.subr.mxu0 0.0
  %5853 = vmatpush1.msra.mxu0 0.0
  %5854 = vmatprep.subr.mxu0 0.0
  %5855 = vmatpush1.msra.mxu0 0.0
  %5856 = vmatprep.subr.mxu0 0.0
  %5857 = vmatpush1.msra.mxu0 0.0
  %5858 = vmatprep.subr.mxu0 0.0
  %5859 = vmatpush1.msra.mxu0 0.0
  %5860 = vmatprep.subr.mxu0 0.0
  %5861 = vmatpush1.msra.mxu0 0.0
  %5862 = vmatprep.subr.mxu0 0.0
  %5863 = vmatpush1.msra.mxu0 0.0
  %5864 = vmatprep.subr.mxu0 0.0
  %5865 = vmatpush1.msra.mxu0 0.0
  %5866 = vmatprep.subr.mxu0 0.0
  %5867 = vmatpush1.msra.mxu0 0.0
  %5868 = vmatprep.subr.mxu0 0.0
  %5869 = vmatpush1.msra.mxu0 0.0
  %5870 = vmatprep.subr.mxu0 0.0
  %5871 = vmatpush1.msra.mxu0 0.0
  %5872 = vmatprep.subr.mxu0 0.0
  %5873 = vmatpush1.msra.mxu0 0.0
  %5874 = vmatprep.subr.mxu0 0.0
  %5875 = vmatpush1.msra.mxu0 0.0
  %5876 = vmatprep.subr.mxu0 0.0
  %5877 = vmatpush1.msra.mxu0 0.0
  %5878 = vmatprep.mubr.f32.mxu0 0.0
  %5879 = vmatmul.mubr.f32.gmra.mrb[0].mxu0 %v5809
  %v5880 = vpop.f32.mrb[0].mxu0
  %v5881 = vadd.f32 %v5807, %v5880
  %v5882 = vpop.f32.mrb[0].mxu0
  %5883 = vmatprep.mubr.f32.mxu0 0.0
  %5884 = vmatmul.mubr.f32.gmra.mrb[0].mxu0 %v5812
  %v5885 = vpop.f32.mrb[0].mxu0
  %v5886 = vadd.f32 %v5807, %v5885
  %v5887 = vpop.f32.mrb[0].mxu0
  %5888 = vdwg.mxu0
  %v5889 = vadd.f32 %v3239, %v5881
  %v5890 = vadd.f32 %v3240, %v5886
  %v5891 = vsel %vm150, %v5889, 0.0
  %5892 = vadd.xlane.f32.xlu0 %v5891
  %v5893 = vpop.xlane.xlu0 %5892
  %v5894 = vsel %vm150, %v5890, 0.0
  %5895 = vadd.xlane.f32.xlu0 %v5894
  %v5896 = vpop.xlane.xlu0 %5895
  %v5897 = vmul.f32 %v5893, %v157
  %v5898 = vmul.f32 %v5896, %v157
  %v5899 = vsub.f32 %v5889, %v5897
  %v5900 = vsub.f32 %v5890, %v5898
  %v5901 = vmul.f32 %v5899, %v5899
  %v5902 = vmul.f32 %v5900, %v5900
  %v5903 = vsel %vm150, %v5901, 0.0
  %5904 = vadd.xlane.f32.xlu0 %v5903
  %v5905 = vpop.xlane.xlu0 %5904
  %v5906 = vsel %vm150, %v5902, 0.0
  %5907 = vadd.xlane.f32.xlu0 %v5906
  %v5908 = vpop.xlane.xlu0 %5907
  %v5909 = vmul.f32 %v5905, %v157
  %v5910 = vmul.f32 %v5908, %v157
  %v5911 = vadd.f32 %v5909, 1e-05
  %v5912 = vadd.f32 %v5910, 1e-05
  %v5913 = vrsqrt.pop %v5911
  %v5914 = vrsqrt.pop %v5912
  %v5915 = vmul.f32 %v5899, %v5913
  %v5916 = vmul.f32 %v5900, %v5914
  %v5917 = vlaneseq
  %v5918 = vshrl.u32 %v5917, 7
  %v5919 = vsub.s32 2, %v5918
  %v5920 = vrot.slane %v3242, %v5919
  %v5921 = vmul.f32 %v5915, %v5920
  %v5922 = vmul.f32 %v5916, %v5920
  %v5923 = vlaneseq
  %v5924 = vshrl.u32 %v5923, 7
  %v5925 = vsub.s32 3, %v5924
  %v5926 = vrot.slane %v3242, %v5925
  %v5927 = vadd.f32 %v5921, %v5926
  %v5928 = vadd.f32 %v5922, %v5926
  %s5929 = scalar_lea.vmem %s7, 32
  %v5930 = vld [vmem:[%s5929] sm:$0xff]
  %v5931 = vld [vmem:[%s5929 + $0x8] sm:$0xff]
  %v5932 = vld [vmem:[%s5929 + $0x10] sm:$0xff]
  %v5933 = vld [vmem:[%s5929 + $0x18] sm:$0xff]
  %v5934 = vlaneseq
  %v5935 = vshrl.u32 %v5934, 7
  %v5936 = vsub.s32 4, %v5935
  %v5937 = vrot.slane %v3242, %v5936
  %v5939 = vsel %vm150, %v5927, 0
  %v5942 = vsel %vm150, %v5928, 0
  %5944 = vmatprep.subr.mxu0 0.0
  %5945 = vmatpush1.msra.mxu0 %v5930
  %5946 = vmatprep.subr.mxu0 0.0
  %5947 = vmatpush1.msra.mxu0 %v5931
  %5948 = vmatprep.subr.mxu0 0.0
  %5949 = vmatpush1.msra.mxu0 %v5932
  %5950 = vmatprep.subr.mxu0 0.0
  %5951 = vmatpush1.msra.mxu0 %v5933
  %5952 = vmatprep.subr.mxu0 0.0
  %5953 = vmatpush1.msra.mxu0 0.0
  %5954 = vmatprep.subr.mxu0 0.0
  %5955 = vmatpush1.msra.mxu0 0.0
  %5956 = vmatprep.subr.mxu0 0.0
  %5957 = vmatpush1.msra.mxu0 0.0
  %5958 = vmatprep.subr.mxu0 0.0
  %5959 = vmatpush1.msra.mxu0 0.0
  %5960 = vmatprep.subr.mxu0 0.0
  %5961 = vmatpush1.msra.mxu0 0.0
  %5962 = vmatprep.subr.mxu0 0.0
  %5963 = vmatpush1.msra.mxu0 0.0
  %5964 = vmatprep.subr.mxu0 0.0
  %5965 = vmatpush1.msra.mxu0 0.0
  %5966 = vmatprep.subr.mxu0 0.0
  %5967 = vmatpush1.msra.mxu0 0.0
  %5968 = vmatprep.subr.mxu0 0.0
  %5969 = vmatpush1.msra.mxu0 0.0
  %5970 = vmatprep.subr.mxu0 0.0
  %5971 = vmatpush1.msra.mxu0 0.0
  %5972 = vmatprep.subr.mxu0 0.0
  %5973 = vmatpush1.msra.mxu0 0.0
  %5974 = vmatprep.subr.mxu0 0.0
  %5975 = vmatpush1.msra.mxu0 0.0
  %5976 = vmatprep.subr.mxu0 0.0
  %5977 = vmatpush1.msra.mxu0 0.0
  %5978 = vmatprep.subr.mxu0 0.0
  %5979 = vmatpush1.msra.mxu0 0.0
  %5980 = vmatprep.subr.mxu0 0.0
  %5981 = vmatpush1.msra.mxu0 0.0
  %5982 = vmatprep.subr.mxu0 0.0
  %5983 = vmatpush1.msra.mxu0 0.0
  %5984 = vmatprep.subr.mxu0 0.0
  %5985 = vmatpush1.msra.mxu0 0.0
  %5986 = vmatprep.subr.mxu0 0.0
  %5987 = vmatpush1.msra.mxu0 0.0
  %5988 = vmatprep.subr.mxu0 0.0
  %5989 = vmatpush1.msra.mxu0 0.0
  %5990 = vmatprep.subr.mxu0 0.0
  %5991 = vmatpush1.msra.mxu0 0.0
  %5992 = vmatprep.subr.mxu0 0.0
  %5993 = vmatpush1.msra.mxu0 0.0
  %5994 = vmatprep.subr.mxu0 0.0
  %5995 = vmatpush1.msra.mxu0 0.0
  %5996 = vmatprep.subr.mxu0 0.0
  %5997 = vmatpush1.msra.mxu0 0.0
  %5998 = vmatprep.subr.mxu0 0.0
  %5999 = vmatpush1.msra.mxu0 0.0
  %6000 = vmatprep.subr.mxu0 0.0
  %6001 = vmatpush1.msra.mxu0 0.0
  %6002 = vmatprep.subr.mxu0 0.0
  %6003 = vmatpush1.msra.mxu0 0.0
  %6004 = vmatprep.subr.mxu0 0.0
  %6005 = vmatpush1.msra.mxu0 0.0
  %6006 = vmatprep.subr.mxu0 0.0
  %6007 = vmatpush1.msra.mxu0 0.0
  %6008 = vmatprep.mubr.f32.mxu0 0.0
  %6009 = vmatmul.mubr.f32.gmra.mrb[0].mxu0 %v5939
  %v6010 = vpop.f32.mrb[0].mxu0
  %v6011 = vadd.f32 %v5937, %v6010
  %v6012 = vpop.f32.mrb[0].mxu0
  %6013 = vmatprep.mubr.f32.mxu0 0.0
  %6014 = vmatmul.mubr.f32.gmra.mrb[0].mxu0 %v5942
  %v6015 = vpop.f32.mrb[0].mxu0
  %v6016 = vadd.f32 %v5937, %v6015
  %v6017 = vpop.f32.mrb[0].mxu0
  %6018 = vdwg.mxu0
  %v6019 = vmul.f32 %v6011, %v6011
  %v6020 = vmul.f32 %v6016, %v6016
  %v6021 = vmul.f32 %v6011, %v6019
  %v6022 = vmul.f32 %v6016, %v6020
  %v6023 = vmul.f32 %v6021, 0.044715
  %v6024 = vmul.f32 %v6022, 0.044715
  %v6025 = vadd.f32 %v6011, %v6023
  %v6026 = vadd.f32 %v6016, %v6024
  %v6027 = vmul.f32 %v6025, 0.7978846
  %v6028 = vmul.f32 %v6026, 0.7978846
  %v6029 = vtanh.pop %v6027
  %v6030 = vtanh.pop %v6028
  %v6031 = vadd.f32 %v6029, 1.0
  %v6032 = vadd.f32 %v6030, 1.0
  %v6033 = vmul.f32 %v6031, 0.5
  %v6034 = vmul.f32 %v6032, 0.5
  %v6035 = vmul.f32 %v6011, %v6033
  %v6036 = vmul.f32 %v6016, %v6034
  %s6037 = scalar_lea.vmem %s8, 64
  %v6038 = vld [vmem:[%s6037] sm:$0xff]
  %v6039 = vld [vmem:[%s6037 + $0x8] sm:$0xff]
  %v6040 = vld [vmem:[%s6037 + $0x10] sm:$0xff]
  %v6041 = vld [vmem:[%s6037 + $0x18] sm:$0xff]
  %v6042 = vld [vmem:[%s6037 + $0x20] sm:$0xff]
  %v6043 = vld [vmem:[%s6037 + $0x28] sm:$0xff]
  %v6044 = vld [vmem:[%s6037 + $0x30] sm:$0xff]
  %v6045 = vld [vmem:[%s6037 + $0x38] sm:$0xff]
  %v6046 = vlaneseq
  %v6047 = vshrl.u32 %v6046, 7
  %v6048 = vsub.s32 5, %v6047
  %v6049 = vrot.slane %v3242, %v6048
  %v6051 = vsel %vm68, %v6035, 0
  %v6054 = vsel %vm68, %v6036, 0
  %6056 = vmatprep.subr.mxu0 0.0
  %6057 = vmatpush1.msra.mxu0 %v6038
  %6058 = vmatprep.subr.mxu0 0.0
  %6059 = vmatpush1.msra.mxu0 %v6039
  %6060 = vmatprep.subr.mxu0 0.0
  %6061 = vmatpush1.msra.mxu0 %v6040
  %6062 = vmatprep.subr.mxu0 0.0
  %6063 = vmatpush1.msra.mxu0 %v6041
  %6064 = vmatprep.subr.mxu0 0.0
  %6065 = vmatpush1.msra.mxu0 %v6042
  %6066 = vmatprep.subr.mxu0 0.0
  %6067 = vmatpush1.msra.mxu0 %v6043
  %6068 = vmatprep.subr.mxu0 0.0
  %6069 = vmatpush1.msra.mxu0 %v6044
  %6070 = vmatprep.subr.mxu0 0.0
  %6071 = vmatpush1.msra.mxu0 %v6045
  %6072 = vmatprep.subr.mxu0 0.0
  %6073 = vmatpush1.msra.mxu0 0.0
  %6074 = vmatprep.subr.mxu0 0.0
  %6075 = vmatpush1.msra.mxu0 0.0
  %6076 = vmatprep.subr.mxu0 0.0
  %6077 = vmatpush1.msra.mxu0 0.0
  %6078 = vmatprep.subr.mxu0 0.0
  %6079 = vmatpush1.msra.mxu0 0.0
  %6080 = vmatprep.subr.mxu0 0.0
  %6081 = vmatpush1.msra.mxu0 0.0
  %6082 = vmatprep.subr.mxu0 0.0
  %6083 = vmatpush1.msra.mxu0 0.0
  %6084 = vmatprep.subr.mxu0 0.0
  %6085 = vmatpush1.msra.mxu0 0.0
  %6086 = vmatprep.subr.mxu0 0.0
  %6087 = vmatpush1.msra.mxu0 0.0
  %6088 = vmatprep.subr.mxu0 0.0
  %6089 = vmatpush1.msra.mxu0 0.0
  %6090 = vmatprep.subr.mxu0 0.0
  %6091 = vmatpush1.msra.mxu0 0.0
  %6092 = vmatprep.subr.mxu0 0.0
  %6093 = vmatpush1.msra.mxu0 0.0
  %6094 = vmatprep.subr.mxu0 0.0
  %6095 = vmatpush1.msra.mxu0 0.0
  %6096 = vmatprep.subr.mxu0 0.0
  %6097 = vmatpush1.msra.mxu0 0.0
  %6098 = vmatprep.subr.mxu0 0.0
  %6099 = vmatpush1.msra.mxu0 0.0
  %6100 = vmatprep.subr.mxu0 0.0
  %6101 = vmatpush1.msra.mxu0 0.0
  %6102 = vmatprep.subr.mxu0 0.0
  %6103 = vmatpush1.msra.mxu0 0.0
  %6104 = vmatprep.subr.mxu0 0.0
  %6105 = vmatpush1.msra.mxu0 0.0
  %6106 = vmatprep.subr.mxu0 0.0
  %6107 = vmatpush1.msra.mxu0 0.0
  %6108 = vmatprep.subr.mxu0 0.0
  %6109 = vmatpush1.msra.mxu0 0.0
  %6110 = vmatprep.subr.mxu0 0.0
  %6111 = vmatpush1.msra.mxu0 0.0
  %6112 = vmatprep.subr.mxu0 0.0
  %6113 = vmatpush1.msra.mxu0 0.0
  %6114 = vmatprep.subr.mxu0 0.0
  %6115 = vmatpush1.msra.mxu0 0.0
  %6116 = vmatprep.subr.mxu0 0.0
  %6117 = vmatpush1.msra.mxu0 0.0
  %6118 = vmatprep.subr.mxu0 0.0
  %6119 = vmatpush1.msra.mxu0 0.0
  %6120 = vmatprep.mubr.f32.mxu0 0.0
  %6121 = vmatmul.mubr.f32.gmra.mrb[0].mxu0 %v6051
  %v6122 = vpop.f32.mrb[0].mxu0
  %v6123 = vadd.f32 %v6049, %v6122
  %v6124 = vpop.f32.mrb[0].mxu0
  %6125 = vmatprep.mubr.f32.mxu0 0.0
  %6126 = vmatmul.mubr.f32.gmra.mrb[0].mxu0 %v6054
  %v6127 = vpop.f32.mrb[0].mxu0
  %v6128 = vadd.f32 %v6049, %v6127
  %v6129 = vpop.f32.mrb[0].mxu0
  %6130 = vdwg.mxu0
  %v6131 = vadd.f32 %v5927, %v6123
  %v6132 = vadd.f32 %v5928, %v6128
  %v6133 = vsel %vm150, %v6131, 0.0
  %6134 = vadd.xlane.f32.xlu0 %v6133
  %v6135 = vpop.xlane.xlu0 %6134
  %v6136 = vsel %vm150, %v6132, 0.0
  %6137 = vadd.xlane.f32.xlu0 %v6136
  %v6138 = vpop.xlane.xlu0 %6137
  %v6139 = vmul.f32 %v6135, %v157
  %v6140 = vmul.f32 %v6138, %v157
  %v6141 = vsub.f32 %v6131, %v6139
  %v6142 = vsub.f32 %v6132, %v6140
  %v6143 = vmul.f32 %v6141, %v6141
  %v6144 = vmul.f32 %v6142, %v6142
  %v6145 = vsel %vm150, %v6143, 0.0
  %6146 = vadd.xlane.f32.xlu0 %v6145
  %v6147 = vpop.xlane.xlu0 %6146
  %v6148 = vsel %vm150, %v6144, 0.0
  %6149 = vadd.xlane.f32.xlu0 %v6148
  %v6150 = vpop.xlane.xlu0 %6149
  %v6151 = vmul.f32 %v6147, %v157
  %v6152 = vmul.f32 %v6150, %v157
  %v6153 = vadd.f32 %v6151, 1e-05
  %v6154 = vadd.f32 %v6152, 1e-05
  %v6155 = vrsqrt.pop %v6153
  %v6156 = vrsqrt.pop %v6154
  %v6157 = vmul.f32 %v6141, %v6155
  %v6158 = vmul.f32 %v6142, %v6156
  %v6159 = vlaneseq
  %v6160 = vshrl.u32 %v6159, 7
  %v6161 = vsub.s32 6, %v6160
  %v6162 = vrot.slane %v3242, %v6161
  %v6163 = vmul.f32 %v6157, %v6162
  %v6164 = vmul.f32 %v6158, %v6162
  %v6165 = vlaneseq
  %v6166 = vshrl.u32 %v6165, 7
  %v6167 = vsub.s32 7, %v6166
  %v6168 = vrot.slane %v3242, %v6167
  %v6169 = vadd.f32 %v6163, %v6168
  %v6170 = vadd.f32 %v6164, %v6168
  %v6171 = vld [vmem:[%s10] sm:$0xff]
  %v6172 = vld [vmem:[%s10 + $0x8] sm:$0xff]
  %v6173 = vld [vmem:[%s10 + $0x10] sm:$0xff]
  %v6174 = vld [vmem:[%s10 + $0x18] sm:$0xff]
  %v6175 = vlaneseq
  %v6176 = vshrl.u32 %v6175, 7
  %v6177 = vsub.s32 2, %v6176
  %v6178 = vrot.slane %v41, %v6177
  %v6181 = vrot.slane %v6170, 7
  %vm6182 = vcmask 1041409
  %v6183 = vsel %vm6182, %v6181, %v6169
  %v6184 = vsel %vm150, %v6183, 0
  %6186 = vmatprep.subr.mxu0 0.0
  %6187 = vmatpush1.msra.mxu0 %v6171
  %6188 = vmatprep.subr.mxu0 0.0
  %6189 = vmatpush1.msra.mxu0 %v6172
  %6190 = vmatprep.subr.mxu0 0.0
  %6191 = vmatpush1.msra.mxu0 %v6173
  %6192 = vmatprep.subr.mxu0 0.0
  %6193 = vmatpush1.msra.mxu0 %v6174
  %6194 = vmatprep.subr.mxu0 0.0
  %6195 = vmatpush1.msra.mxu0 0.0
  %6196 = vmatprep.subr.mxu0 0.0
  %6197 = vmatpush1.msra.mxu0 0.0
  %6198 = vmatprep.subr.mxu0 0.0
  %6199 = vmatpush1.msra.mxu0 0.0
  %6200 = vmatprep.subr.mxu0 0.0
  %6201 = vmatpush1.msra.mxu0 0.0
  %6202 = vmatprep.subr.mxu0 0.0
  %6203 = vmatpush1.msra.mxu0 0.0
  %6204 = vmatprep.subr.mxu0 0.0
  %6205 = vmatpush1.msra.mxu0 0.0
  %6206 = vmatprep.subr.mxu0 0.0
  %6207 = vmatpush1.msra.mxu0 0.0
  %6208 = vmatprep.subr.mxu0 0.0
  %6209 = vmatpush1.msra.mxu0 0.0
  %6210 = vmatprep.subr.mxu0 0.0
  %6211 = vmatpush1.msra.mxu0 0.0
  %6212 = vmatprep.subr.mxu0 0.0
  %6213 = vmatpush1.msra.mxu0 0.0
  %6214 = vmatprep.subr.mxu0 0.0
  %6215 = vmatpush1.msra.mxu0 0.0
  %6216 = vmatprep.subr.mxu0 0.0
  %6217 = vmatpush1.msra.mxu0 0.0
  %6218 = vmatprep.subr.mxu0 0.0
  %6219 = vmatpush1.msra.mxu0 0.0
  %6220 = vmatprep.subr.mxu0 0.0
  %6221 = vmatpush1.msra.mxu0 0.0
  %6222 = vmatprep.subr.mxu0 0.0
  %6223 = vmatpush1.msra.mxu0 0.0
  %6224 = vmatprep.subr.mxu0 0.0
  %6225 = vmatpush1.msra.mxu0 0.0
  %6226 = vmatprep.subr.mxu0 0.0
  %6227 = vmatpush1.msra.mxu0 0.0
  %6228 = vmatprep.subr.mxu0 0.0
  %6229 = vmatpush1.msra.mxu0 0.0
  %6230 = vmatprep.subr.mxu0 0.0
  %6231 = vmatpush1.msra.mxu0 0.0
  %6232 = vmatprep.subr.mxu0 0.0
  %6233 = vmatpush1.msra.mxu0 0.0
  %6234 = vmatprep.subr.mxu0 0.0
  %6235 = vmatpush1.msra.mxu0 0.0
  %6236 = vmatprep.subr.mxu0 0.0
  %6237 = vmatpush1.msra.mxu0 0.0
  %6238 = vmatprep.subr.mxu0 0.0
  %6239 = vmatpush1.msra.mxu0 0.0
  %6240 = vmatprep.subr.mxu0 0.0
  %6241 = vmatpush1.msra.mxu0 0.0
  %6242 = vmatprep.subr.mxu0 0.0
  %6243 = vmatpush1.msra.mxu0 0.0
  %6244 = vmatprep.subr.mxu0 0.0
  %6245 = vmatpush1.msra.mxu0 0.0
  %6246 = vmatprep.subr.mxu0 0.0
  %6247 = vmatpush1.msra.mxu0 0.0
  %6248 = vmatprep.subr.mxu0 0.0
  %6249 = vmatpush1.msra.mxu0 0.0
  %6250 = vmatprep.mubr.f32.mxu0 0.0
  %6251 = vmatmul.mubr.f32.gmra.mrb[0].mxu0 %v6184
  %v6252 = vpop.f32.mrb[0].mxu0
  %v6253 = vadd.f32 %v6178, %v6252
  %v6254 = vpop.f32.mrb[0].mxu0
  %6255 = vdwg.mxu0
  %v6256 = vtanh.pop %v6253
  %v6257 = vlaneseq
  %v6258 = vshrl.u32 %v6257, 7
  %v6259 = vsub.s32 3, %v6258
  %v6260 = vrot.slane %v41, %v6259
  %v6261 = vmul.f32 %v6256, %v6260
  %vm6262 = vcmask 254976
  %v6263 = vsel %vm6262, %v6261, 0.0
  %6264 = vadd.xlane.f32.xlu0 %v6263
  %v6265 = vpop.xlane.xlu0 %6264
  %v6266 = vld [vmem:[%s2] sm:$0x3]
  %v6267 = vlaneseq
  %v6268 = vshrl.u32 %v6267, 7
  %v6269 = vsub.s32 4, %v6268
  %v6270 = vrot.slane %v41, %v6269
  %v6271 = vmul.f32 %v6266, %v6270
  %vm6272 = vcmask 17408
  %v6273 = vsel %vm6272, %v6271, 0.0
  %6274 = vadd.xlane.f32.xlu0 %v6273
  %v6275 = vpop.xlane.xlu0 %6274
  %v6276 = vadd.f32 %v6265, %v6275
  %v6277 = vlaneseq
  %v6278 = vshrl.u32 %v6277, 7
  %v6279 = vsub.s32 5, %v6278
  %v6280 = vrot.slane %v41, %v6279
  %v6281 = vadd.f32 %v6276, %v6280
  %vm6282 = vcmask 1024
  %6283 = vst.msk [vmem:[%s12] sm:$0x3] %vm6282, %v6281
  // Predicated region
  $region50: #{comment_classifier_forward.1} parent=0 // pred_check
    _
  $region51: #{comment_classifier_forward.1} parent=0 // pred_check_branch
    %6285 = sbr.rel (0) target = $region53
  $region52: #{comment_classifier_forward.1} parent=0 // pred_region
    _
  $region53: #{comment_classifier_forward.1} parent=0 // pred_fallthru
    _
  // Predicated region
  $region54: #{comment_classifier_forward.1} parent=0 // pred_check
    _
  $region55: #{comment_classifier_forward.1} parent=0 // pred_check_branch
    %6287 = sbr.rel (0) target = $region57
  $region56: #{comment_classifier_forward.1} parent=0 // pred_region
    _
  $region57: #{comment_classifier_forward.1} parent=0 // pred_fallthru
    _

</llo_original>
